<compile_context>
chip_gen: v7x
topology: tpu7x:2x2x1
jax: 0.10.0
libtpu: 0.0.40
codegen_flags: <defaults>
</compile_context>

<pallas_src>
import jax
import jax.numpy as jnp
from jax import lax
from jax.experimental import pallas as pl
from jax.experimental.pallas import tpu as pltpu

LANE = 128                 # lane-dense padding width for every feature segment
MXU_DTYPE = jnp.bfloat16   # matmul-input dtype (set jnp.float32 for exact f32 semantics)


# ----------------------------- in-kernel helpers -----------------------------

def _basic_aggr(h, inv_n):
    """sum / mean / std / min / max over the node axis -> each [1, C] (f32).
    std follows PyG StdAggregation: sqrt(clamp(E[x^2]-E[x]^2, 1e-5)), zeroed at eps."""
    s = jnp.sum(h, axis=0, keepdims=True)
    m = s * inv_n
    m2 = jnp.sum(h * h, axis=0, keepdims=True) * inv_n
    var = m2 - m * m
    std = jnp.sqrt(jnp.maximum(var, 1e-5))
    std = jnp.where(std <= jnp.sqrt(jnp.float32(1e-5)), 0.0, std)
    mn = jnp.min(h, axis=0, keepdims=True)
    mx = jnp.max(h, axis=0, keepdims=True)
    return s, m, std, mn, mx


def _median_lower(h, chunk=8):
    """Per-feature median, 'lower' interpolation (PyG MedianAggregation):
    k-th order statistic with k=(N-1)//2 via comparison counting.  The j axis is
    chunked so the [N, chunk, C] broadcast intermediate stays a few vreg tiles."""
    n, c = h.shape
    k = (n - 1) // 2
    xi = h[:, None, :]                                   # [N, 1, C]
    lt = jnp.zeros((n, c), jnp.float32)
    le = jnp.zeros((n, c), jnp.float32)
    for j0 in range(0, n, chunk):                        # static slices, bounded intermediates
        xj = h[j0:min(j0 + chunk, n)][None, :, :]        # [1, chunk, C]
        lt = lt + jnp.sum((xj < xi).astype(jnp.float32), axis=1)
        le = le + jnp.sum((xj <= xi).astype(jnp.float32), axis=1)
    is_kth = jnp.logical_and(lt <= k, le >= k + 1)       # all True entries share the k-th value
    return jnp.max(jnp.where(is_kth, h, -jnp.inf), axis=0, keepdims=True)


# --------------------------------- the kernel --------------------------------

def sage_forward_kernel(
    x_ref, a_ref,
    wl1_ref, bl1_ref, wr1_ref,     # SAGEConv 1: lin_l (W, b) and lin_r (W)  (W in MXU dtype)
    wl2_ref, bl2_ref, wr2_ref,     # SAGEConv 2
    t_ref,                         # SoftmaxAggregation learnable temperature (SMEM scalar)
    fc1w_ref, fc1b_ref,            # dnn fc1 (K dim segment-padded to lane width)
    fchw_ref, fchb_ref,            # dnn fcs[0]
    fc2w_ref, fc2b_ref,            # dnn fc2 (out padded to lane width)
    out_ref,
):
    x = x_ref[0]                   # [N, CinP] f32, zero-padded past Cin
    n = x.shape[0]
    inv_n = 1.0 / n                # static constant -> no runtime divide

    # ---- DenseNetwork.global_features: MultiAggr(sum, mean, std, min, max) + nan_to_num(1.0)
    gs, gm, gstd, gmn, gmx = _basic_aggr(x, inv_n)
    glob = jnp.concatenate([gs, gm, gstd, gmn, gmx], axis=-1)        # [1, 5*CinP]
    bad = jnp.logical_or(jnp.isnan(glob), jnp.abs(glob) == jnp.inf)
    glob = jnp.where(bad, 1.0, glob)

    # ---- gnn(): SAGEConv -> ReLU (Dropout == identity at inference) ----
    a = a_ref[0]                   # [N, N] row-normalized adjacency, MXU dtype

    def sage(h, wl, bl, wr):
        h_lo = h.astype(wl.dtype)                                    # bf16 MXU inputs
        agg = jnp.dot(a, h_lo, preferred_element_type=jnp.float32)   # mean over in-neighbors
        out = (jnp.dot(agg.astype(wl.dtype), wl, preferred_element_type=jnp.float32)
               + bl
               + jnp.dot(h_lo, wr, preferred_element_type=jnp.float32))
        return jnp.maximum(out, 0.0)

    h = sage(x, wl1_ref[...], bl1_ref[...], wr1_ref[...])            # [N, G0P]
    h = sage(h, wl2_ref[...], bl2_ref[...], wr2_ref[...])            # [N, G1P] (f32)

    # ---- graph_aggr: MultiAggr(sum, mean, median, std, min, max, softmax(t)) ----
    hs, hmean, hstd, hmn, hmx = _basic_aggr(h, inv_n)
    hmed = _median_lower(h)
    t = t_ref[0]                                                     # SMEM scalar read
    logits = h * t
    logits = logits - jnp.max(logits, axis=0, keepdims=True)
    e = jnp.exp(logits)
    alpha = e * pl.reciprocal(jnp.sum(e, axis=0, keepdims=True), approx=True)
    hsoft = jnp.sum(alpha * h, axis=0, keepdims=True)

    # ---- torch.cat([graph_feats, glob_feats], -1): every segment is a full 128-lane
    # slot, so the concat is tile-aligned and fc1's padded K dim matches it exactly.
    feat = jnp.concatenate([hs, hmean, hmed, hstd, hmn, hmx, hsoft, glob], axis=-1)

    y = jnp.maximum(
        jnp.dot(feat, fc1w_ref[...], preferred_element_type=jnp.float32) + fc1b_ref[...], 0.0)
    y = jnp.maximum(
        jnp.dot(y, fchw_ref[...], preferred_element_type=jnp.float32) + fchb_ref[...], 0.0)
    y = jnp.dot(y, fc2w_ref[...], preferred_element_type=jnp.float32) + fc2b_ref[...]

    # full-tile (8 x 128) unmasked store; row 0 carries the result
    out_ref[...] = jnp.broadcast_to(y[:, None, :], out_ref.shape)


# --------------------------------- wrapper ------------------------------------

def _ceil_lane(v):
    return max(LANE, ((v + LANE - 1) // LANE) * LANE)


def _pad2d(w, rows, cols, dtype=jnp.float32):
    out = jnp.zeros((rows, cols), dtype)
    return out.at[: w.shape[0], : w.shape[1]].set(w.astype(dtype))


def _pad_fc1(fc1_w, seg_sizes, seg_pads, d_out_pad):
    """Scatter fc1's K rows into lane-aligned segments matching the kernel feat layout."""
    out = jnp.zeros((sum(seg_pads), d_out_pad), jnp.float32)
    off_in, off_out = 0, 0
    for s, p in zip(seg_sizes, seg_pads):
        out = out.at[off_out: off_out + s, : fc1_w.shape[1]].set(fc1_w[off_in: off_in + s])
        off_in += s
        off_out += p
    return out


def _build_mean_adjacency(edge_index, n):
    # glue: densify edge_index into the in-degree-normalized adjacency (mean aggregation).
    # TODO(synk): for large sparse graphs, replace the dense A@h with a CSR scalar-prefetch
    # + DMA-gather formulation instead of materializing O(N^2) in HBM/VMEM.
    src, dst = edge_index[0], edge_index[1]
    adj = jnp.zeros((n, n), jnp.float32).at[dst, src].add(1.0)
    deg = jnp.sum(adj, axis=1, keepdims=True)
    return jnp.where(deg > 0, adj / jnp.maximum(deg, 1.0), 0.0)


def sage_network_forward(x, edge_index, params):
    """x: [B, N, Cin] float32, edge_index: [B, 2, E] int32 (one independent graph per slot)."""
    b, n, cin = x.shape
    g0 = params["wl1"].shape[1]
    g1 = params["wl2"].shape[1]
    d0 = params["fc1_w"].shape[1]
    d1 = params["fch_w"].shape[1]
    out_channels = params["fc2_w"].shape[1]
    cinp, g0p, g1p = _ceil_lane(cin), _ceil_lane(g0), _ceil_lane(g1)
    d0p, d1p, outp = _ceil_lane(d0), _ceil_lane(d1), _ceil_lane(out_channels)

    # lane-dense (128-wide) zero padding of features / weights
    xp = jnp.zeros((b, n, cinp), jnp.float32).at[:, :, :cin].set(x.astype(jnp.float32))
    a = jax.vmap(lambda ei: _build_mean_adjacency(ei, n))(edge_index).astype(MXU_DTYPE)

    seg_sizes = [g1] * 7 + [cin] * 5          # feat layout: 7 graph aggrs then 5 global aggrs
    seg_pads = [g1p] * 7 + [cinp] * 5
    inputs = (
        xp, a,
        _pad2d(params["wl1"], cinp, g0p, MXU_DTYPE), _pad2d(params["bl1"], 1, g0p),
        _pad2d(params["wr1"], cinp, g0p, MXU_DTYPE),
        _pad2d(params["wl2"], g0p, g1p, MXU_DTYPE), _pad2d(params["bl2"], 1, g1p),
        _pad2d(params["wr2"], g0p, g1p, MXU_DTYPE),
        params["t"].reshape((1,)).astype(jnp.float32),
        _pad_fc1(params["fc1_w"], seg_sizes, seg_pads, d0p), _pad2d(params["fc1_b"], 1, d0p),
        _pad2d(params["fch_w"], d0p, d1p), _pad2d(params["fch_b"], 1, d1p),
        _pad2d(params["fc2_w"], d1p, outp), _pad2d(params["fc2_b"], 1, outp),
    )

    def rep2(arr):   # weights: same full block every grid step (stay resident in VMEM)
        return pl.BlockSpec(arr.shape, lambda i: (0, 0))

    in_specs = [
        pl.BlockSpec((1, n, cinp), lambda i: (i, 0, 0)),        # x: per-graph block
        pl.BlockSpec((1, n, n), lambda i: (i, 0, 0)),           # A: per-graph block
        rep2(inputs[2]), rep2(inputs[3]), rep2(inputs[4]),
        rep2(inputs[5]), rep2(inputs[6]), rep2(inputs[7]),
        pl.BlockSpec(memory_space=pltpu.MemorySpace.SMEM),      # temperature scalar
        rep2(inputs[9]), rep2(inputs[10]), rep2(inputs[11]),
        rep2(inputs[12]), rep2(inputs[13]), rep2(inputs[14]),
    ]

    out = pl.pallas_call(
        sage_forward_kernel,
        grid=(b,),
        in_specs=in_specs,
        out_specs=pl.BlockSpec((1, 8, outp), lambda i: (i, 0, 0)),
        out_shape=jax.ShapeDtypeStruct((b, 8, outp), jnp.float32),
        compiler_params=pltpu.CompilerParams(dimension_semantics=("parallel",)),
    )(*inputs)
    return out[:, 0, :out_channels]


# ----------------------------- parameters / reference -------------------------

def init_params(key, in_channels, gcn_channels, dense_channels, out_channels):
    def linear(k, fan_in, fan_out, bias=True):
        kw, kb = jax.random.split(k)
        bound = 1.0 / (fan_in ** 0.5)
        w = jax.random.uniform(kw, (fan_in, fan_out), jnp.float32, -bound, bound)  # pre-transposed
        b = jax.random.uniform(kb, (1, fan_out), jnp.float32, -bound, bound) if bias else None
        return w, b

    keys = jax.random.split(key, 7)
    g0, g1 = gcn_channels
    d0, d1 = dense_channels
    wl1, bl1 = linear(keys[0], in_channels, g0)
    wr1, _ = linear(keys[1], in_channels, g0, bias=False)   # SAGEConv lin_r has no bias
    wl2, bl2 = linear(keys[2], g0, g1)
    wr2, _ = linear(keys[3], g0, g1, bias=False)
    din = g1 * 7 + in_channels * 5
    fc1_w, fc1_b = linear(keys[4], din, d0)
    fch_w, fch_b = linear(keys[5], d0, d1)
    fc2_w, fc2_b = linear(keys[6], d1, out_channels)
    return dict(
        wl1=wl1, bl1=bl1, wr1=wr1, wl2=wl2, bl2=bl2, wr2=wr2,
        t=jnp.ones((1,), jnp.float32),
        fc1_w=fc1_w, fc1_b=fc1_b, fch_w=fch_w, fch_b=fch_b, fc2_w=fc2_w, fc2_b=fc2_b,
    )


def reference_forward(x, edge_index, params):
    """Pure-JAX single-graph reference of the same math.  Mirrors the kernel's
    bf16-input / f32-accumulate matmul policy (MXU_DTYPE) so the check stays tight;
    set MXU_DTYPE = jnp.float32 for exact f32 semantics of the PyTorch module."""
    hp = lax.Precision.HIGHEST
    n = x.shape[0]
    a_norm = _build_mean_adjacency(edge_index, n).astype(MXU_DTYPE)

    def basic(h):
        s = h.sum(0); m = h.mean(0)
        var = (h * h).mean(0) - m * m
        std = jnp.sqrt(jnp.maximum(var, 1e-5))
        std = jnp.where(std <= jnp.sqrt(jnp.float32(1e-5)), 0.0, std)
        return s, m, std, h.min(0), h.max(0)

    gs, gm, gstd, gmn, gmx = basic(x)
    glob = jnp.concatenate([gs, gm, gstd, gmn, gmx])
    glob = jnp.where(jnp.isfinite(glob), glob, 1.0)

    def sage(h, wl, bl, wr):
        h_lo = h.astype(MXU_DTYPE)
        agg = jnp.dot(a_norm, h_lo, preferred_element_type=jnp.float32)
        out = (jnp.dot(agg.astype(MXU_DTYPE), wl.astype(MXU_DTYPE),
                       preferred_element_type=jnp.float32)
               + bl[0]
               + jnp.dot(h_lo, wr.astype(MXU_DTYPE), preferred_element_type=jnp.float32))
        return jax.nn.relu(out)

    h = sage(x, params["wl1"], params["bl1"], params["wr1"])
    h = sage(h, params["wl2"], params["bl2"], params["wr2"])

    hs, hmean, hstd, hmn, hmx = basic(h)
    hmed = jnp.sort(h, axis=0)[(n - 1) // 2]
    alpha = jax.nn.softmax(h * params["t"][0], axis=0)
    hsoft = jnp.sum(alpha * h, axis=0)
    graph = jnp.concatenate([hs, hmean, hmed, hstd, hmn, hmx, hsoft])

    feat = jnp.concatenate([graph, glob])
    y = jax.nn.relu(jnp.dot(feat, params["fc1_w"], precision=hp) + params["fc1_b"][0])
    y = jax.nn.relu(jnp.dot(y, params["fch_w"], precision=hp) + params["fch_b"][0])
    return jnp.dot(y, params["fc2_w"], precision=hp) + params["fc2_b"][0]


# ----------------------------------- main --------------------------------------

if __name__ == "__main__":
    B, N, E = 4, 16, 40
    in_channels = 8
    gcn_channels = (16, 32)
    dense_channels = (64, 32)
    out_channels = 4

    key = jax.random.PRNGKey(0)
    kx, ks, kd, kp = jax.random.split(key, 4)
    x = jax.random.normal(kx, (B, N, in_channels), jnp.float32)
    edge_index = jnp.stack([
        jax.random.randint(ks, (B, E), 0, N),
        jax.random.randint(kd, (B, E), 0, N),
    ], axis=1).astype(jnp.int32)                                   # [B, 2, E]
    params = init_params(kp, in_channels, gcn_channels, dense_channels, out_channels)

    out = jax.block_until_ready(sage_network_forward(x, edge_index, params))
    ref = jnp.stack([reference_forward(x[i], edge_index[i], params) for i in range(B)])

    assert out.shape == (B, out_channels), out.shape
    assert bool(jnp.all(jnp.isfinite(out)))
    # tolerance covers the approx softmax reciprocal + accumulation-order differences
    assert bool(jnp.allclose(out, ref, rtol=2e-3, atol=2e-3)), (out, ref)
    print("KERNEL_OK")
</pallas_src>

<mosaic_0001>
module attributes {stable_mosaic.version = 11 : i64} {
  func.func @sage_forward_kernel(%arg0: i32, %arg1: memref<1x16x128xf32, #tpu.memory_space<vmem>>, %arg2: memref<1x16x16xbf16, #tpu.memory_space<vmem>>, %arg3: memref<128x128xbf16, #tpu.memory_space<vmem>>, %arg4: memref<1x128xf32, #tpu.memory_space<vmem>>, %arg5: memref<128x128xbf16, #tpu.memory_space<vmem>>, %arg6: memref<128x128xbf16, #tpu.memory_space<vmem>>, %arg7: memref<1x128xf32, #tpu.memory_space<vmem>>, %arg8: memref<128x128xbf16, #tpu.memory_space<vmem>>, %arg9: memref<1xf32, #tpu.memory_space<smem>>, %arg10: memref<1536x128xf32, #tpu.memory_space<vmem>>, %arg11: memref<1x128xf32, #tpu.memory_space<vmem>>, %arg12: memref<128x128xf32, #tpu.memory_space<vmem>>, %arg13: memref<1x128xf32, #tpu.memory_space<vmem>>, %arg14: memref<128x128xf32, #tpu.memory_space<vmem>>, %arg15: memref<1x128xf32, #tpu.memory_space<vmem>>, %arg16: memref<1x8x128xf32, #tpu.memory_space<vmem>>) attributes {dimension_semantics = [#tpu.dimension_semantics<parallel>], iteration_bounds = array<i64: 4>, scalar_prefetch = 0 : i64, scratch_operands = 0 : i64, tpu.core_type = #tpu.core_type<tc>, window_params = [{transform_indices = @transform_0, window_bounds = array<i64: 1, 16, 128>}, {transform_indices = @transform_1, window_bounds = array<i64: 1, 16, 16>}, {pipeline_mode = #tpu.pipeline_mode<synchronous>, transform_indices = @transform_2, window_bounds = array<i64: 128, 128>}, {pipeline_mode = #tpu.pipeline_mode<synchronous>, transform_indices = @transform_3, window_bounds = array<i64: 1, 128>}, {pipeline_mode = #tpu.pipeline_mode<synchronous>, transform_indices = @transform_4, window_bounds = array<i64: 128, 128>}, {pipeline_mode = #tpu.pipeline_mode<synchronous>, transform_indices = @transform_5, window_bounds = array<i64: 128, 128>}, {pipeline_mode = #tpu.pipeline_mode<synchronous>, transform_indices = @transform_6, window_bounds = array<i64: 1, 128>}, {pipeline_mode = #tpu.pipeline_mode<synchronous>, transform_indices = @transform_7, window_bounds = array<i64: 128, 128>}, {transform_indices = @transform_8, window_bounds = array<i64: 1>}, {pipeline_mode = #tpu.pipeline_mode<synchronous>, transform_indices = @transform_9, window_bounds = array<i64: 1536, 128>}, {pipeline_mode = #tpu.pipeline_mode<synchronous>, transform_indices = @transform_10, window_bounds = array<i64: 1, 128>}, {pipeline_mode = #tpu.pipeline_mode<synchronous>, transform_indices = @transform_11, window_bounds = array<i64: 128, 128>}, {pipeline_mode = #tpu.pipeline_mode<synchronous>, transform_indices = @transform_12, window_bounds = array<i64: 1, 128>}, {pipeline_mode = #tpu.pipeline_mode<synchronous>, transform_indices = @transform_13, window_bounds = array<i64: 128, 128>}, {pipeline_mode = #tpu.pipeline_mode<synchronous>, transform_indices = @transform_14, window_bounds = array<i64: 1, 128>}, {transform_indices = @transform_15, window_bounds = array<i64: 1, 8, 128>}]} {
    %c0 = arith.constant 0 : index
    %c0_0 = arith.constant 0 : index
    %c0_1 = arith.constant 0 : index
    %0 = vector.load %arg1[%c0, %c0_0, %c0_1] : memref<1x16x128xf32, #tpu.memory_space<vmem>>, vector<1x16x128xf32>
    %1 = vector.shape_cast %0 : vector<1x16x128xf32> to vector<16x128xf32>
    %cst = arith.constant dense<0.000000e+00> : vector<128xf32>
    %2 = vector.multi_reduction <add>, %1, %cst [0] : vector<16x128xf32> to vector<128xf32>
    %3 = vector.shape_cast %2 : vector<128xf32> to vector<1x128xf32>
    %cst_2 = arith.constant 6.250000e-02 : f32
    %4 = vector.broadcast %cst_2 : f32 to vector<1x128xf32>
    %5 = arith.mulf %3, %4 : vector<1x128xf32>
    %6 = arith.mulf %1, %1 : vector<16x128xf32>
    %cst_3 = arith.constant dense<0.000000e+00> : vector<128xf32>
    %7 = vector.multi_reduction <add>, %6, %cst_3 [0] : vector<16x128xf32> to vector<128xf32>
    %8 = vector.shape_cast %7 : vector<128xf32> to vector<1x128xf32>
    %cst_4 = arith.constant 6.250000e-02 : f32
    %9 = vector.broadcast %cst_4 : f32 to vector<1x128xf32>
    %10 = arith.mulf %8, %9 : vector<1x128xf32>
    %11 = arith.mulf %5, %5 : vector<1x128xf32>
    %12 = arith.subf %10, %11 : vector<1x128xf32>
    %cst_5 = arith.constant 9.99999974E-6 : f32
    %13 = vector.broadcast %cst_5 : f32 to vector<1x128xf32>
    %14 = arith.maximumf %12, %13 : vector<1x128xf32>
    %15 = math.sqrt %14 : vector<1x128xf32>
    %cst_6 = arith.constant 9.99999974E-6 : f32
    %16 = math.sqrt %cst_6 : f32
    %17 = vector.broadcast %16 : f32 to vector<1x128xf32>
    %18 = arith.cmpf ole, %15, %17 : vector<1x128xf32>
    %cst_7 = arith.constant 0.000000e+00 : f32
    %19 = vector.broadcast %cst_7 : f32 to vector<1x128xf32>
    %20 = arith.select %18, %19, %15 : vector<1x128xi1>, vector<1x128xf32>
    %cst_8 = arith.constant dense<0x7F800000> : vector<128xf32>
    %21 = vector.multi_reduction <minimumf>, %1, %cst_8 [0] : vector<16x128xf32> to vector<128xf32>
    %22 = vector.shape_cast %21 : vector<128xf32> to vector<1x128xf32>
    %cst_9 = arith.constant dense<0xFF800000> : vector<128xf32>
    %23 = vector.multi_reduction <maximumf>, %1, %cst_9 [0] : vector<16x128xf32> to vector<128xf32>
    %24 = vector.shape_cast %23 : vector<128xf32> to vector<1x128xf32>
    %25 = tpu.concatenate %3, %5, %20, %22, %24 in 1 : vector<1x128xf32>, vector<1x128xf32>, vector<1x128xf32>, vector<1x128xf32>, vector<1x128xf32> -> vector<1x640xf32>
    %26 = arith.cmpf one, %25, %25 : vector<1x640xf32>
    %27 = math.absf %25 : vector<1x640xf32>
    %cst_10 = arith.constant 0x7F800000 : f32
    %28 = vector.broadcast %cst_10 : f32 to vector<1x640xf32>
    %29 = arith.cmpf oeq, %27, %28 : vector<1x640xf32>
    %30 = arith.ori %26, %29 : vector<1x640xi1>
    %cst_11 = arith.constant 1.000000e+00 : f32
    %31 = vector.broadcast %cst_11 : f32 to vector<1x640xf32>
    %32 = arith.select %30, %31, %25 : vector<1x640xi1>, vector<1x640xf32>
    %c0_12 = arith.constant 0 : index
    %c0_13 = arith.constant 0 : index
    %c0_14 = arith.constant 0 : index
    %33 = vector.load %arg2[%c0_12, %c0_13, %c0_14] : memref<1x16x16xbf16, #tpu.memory_space<vmem>>, vector<1x16x16xbf16>
    %34 = vector.shape_cast %33 : vector<1x16x16xbf16> to vector<16x16xbf16>
    %c0_15 = arith.constant 0 : index
    %c0_16 = arith.constant 0 : index
    %35 = vector.load %arg3[%c0_15, %c0_16] : memref<128x128xbf16, #tpu.memory_space<vmem>>, vector<128x128xbf16>
    %c0_17 = arith.constant 0 : index
    %c0_18 = arith.constant 0 : index
    %36 = vector.load %arg4[%c0_17, %c0_18] : memref<1x128xf32, #tpu.memory_space<vmem>>, vector<1x128xf32>
    %c0_19 = arith.constant 0 : index
    %c0_20 = arith.constant 0 : index
    %37 = vector.load %arg5[%c0_19, %c0_20] : memref<128x128xbf16, #tpu.memory_space<vmem>>, vector<128x128xbf16>
    %38 = arith.truncf %1 : vector<16x128xf32> to vector<16x128xbf16>
    %cst_21 = arith.constant dense<0.000000e+00> : vector<16x128xf32>
    %39 = tpu.matmul %34, %38, %cst_21 {dimension_numbers = #tpu.dot_dimension_numbers<[1], [0], [0], [1], [0, 0, 1, 1], [], []>} : vector<16x16xbf16>, vector<16x128xbf16>, vector<16x128xf32> -> vector<16x128xf32>
    %40 = arith.truncf %39 : vector<16x128xf32> to vector<16x128xbf16>
    %cst_22 = arith.constant dense<0.000000e+00> : vector<16x128xf32>
    %41 = tpu.matmul %40, %35, %cst_22 {dimension_numbers = #tpu.dot_dimension_numbers<[1], [0], [0], [1], [0, 0, 1, 1], [], []>} : vector<16x128xbf16>, vector<128x128xbf16>, vector<16x128xf32> -> vector<16x128xf32>
    %42 = vector.broadcast %36 : vector<1x128xf32> to vector<16x128xf32>
    %43 = arith.addf %41, %42 : vector<16x128xf32>
    %cst_23 = arith.constant dense<0.000000e+00> : vector<16x128xf32>
    %44 = tpu.matmul %38, %37, %cst_23 {dimension_numbers = #tpu.dot_dimension_numbers<[1], [0], [0], [1], [0, 0, 1, 1], [], []>} : vector<16x128xbf16>, vector<128x128xbf16>, vector<16x128xf32> -> vector<16x128xf32>
    %45 = arith.addf %43, %44 : vector<16x128xf32>
    %cst_24 = arith.constant 0.000000e+00 : f32
    %46 = vector.broadcast %cst_24 : f32 to vector<16x128xf32>
    %47 = arith.maximumf %45, %46 : vector<16x128xf32>
    %c0_25 = arith.constant 0 : index
    %c0_26 = arith.constant 0 : index
    %48 = vector.load %arg6[%c0_25, %c0_26] : memref<128x128xbf16, #tpu.memory_space<vmem>>, vector<128x128xbf16>
    %c0_27 = arith.constant 0 : index
    %c0_28 = arith.constant 0 : index
    %49 = vector.load %arg7[%c0_27, %c0_28] : memref<1x128xf32, #tpu.memory_space<vmem>>, vector<1x128xf32>
    %c0_29 = arith.constant 0 : index
    %c0_30 = arith.constant 0 : index
    %50 = vector.load %arg8[%c0_29, %c0_30] : memref<128x128xbf16, #tpu.memory_space<vmem>>, vector<128x128xbf16>
    %51 = arith.truncf %47 : vector<16x128xf32> to vector<16x128xbf16>
    %cst_31 = arith.constant dense<0.000000e+00> : vector<16x128xf32>
    %52 = tpu.matmul %34, %51, %cst_31 {dimension_numbers = #tpu.dot_dimension_numbers<[1], [0], [0], [1], [0, 0, 1, 1], [], []>} : vector<16x16xbf16>, vector<16x128xbf16>, vector<16x128xf32> -> vector<16x128xf32>
    %53 = arith.truncf %52 : vector<16x128xf32> to vector<16x128xbf16>
    %cst_32 = arith.constant dense<0.000000e+00> : vector<16x128xf32>
    %54 = tpu.matmul %53, %48, %cst_32 {dimension_numbers = #tpu.dot_dimension_numbers<[1], [0], [0], [1], [0, 0, 1, 1], [], []>} : vector<16x128xbf16>, vector<128x128xbf16>, vector<16x128xf32> -> vector<16x128xf32>
    %55 = vector.broadcast %49 : vector<1x128xf32> to vector<16x128xf32>
    %56 = arith.addf %54, %55 : vector<16x128xf32>
    %cst_33 = arith.constant dense<0.000000e+00> : vector<16x128xf32>
    %57 = tpu.matmul %51, %50, %cst_33 {dimension_numbers = #tpu.dot_dimension_numbers<[1], [0], [0], [1], [0, 0, 1, 1], [], []>} : vector<16x128xbf16>, vector<128x128xbf16>, vector<16x128xf32> -> vector<16x128xf32>
    %58 = arith.addf %56, %57 : vector<16x128xf32>
    %cst_34 = arith.constant 0.000000e+00 : f32
    %59 = vector.broadcast %cst_34 : f32 to vector<16x128xf32>
    %60 = arith.maximumf %58, %59 : vector<16x128xf32>
    %cst_35 = arith.constant dense<0.000000e+00> : vector<128xf32>
    %61 = vector.multi_reduction <add>, %60, %cst_35 [0] : vector<16x128xf32> to vector<128xf32>
    %62 = vector.shape_cast %61 : vector<128xf32> to vector<1x128xf32>
    %cst_36 = arith.constant 6.250000e-02 : f32
    %63 = vector.broadcast %cst_36 : f32 to vector<1x128xf32>
    %64 = arith.mulf %62, %63 : vector<1x128xf32>
    %65 = arith.mulf %60, %60 : vector<16x128xf32>
    %cst_37 = arith.constant dense<0.000000e+00> : vector<128xf32>
    %66 = vector.multi_reduction <add>, %65, %cst_37 [0] : vector<16x128xf32> to vector<128xf32>
    %67 = vector.shape_cast %66 : vector<128xf32> to vector<1x128xf32>
    %cst_38 = arith.constant 6.250000e-02 : f32
    %68 = vector.broadcast %cst_38 : f32 to vector<1x128xf32>
    %69 = arith.mulf %67, %68 : vector<1x128xf32>
    %70 = arith.mulf %64, %64 : vector<1x128xf32>
    %71 = arith.subf %69, %70 : vector<1x128xf32>
    %cst_39 = arith.constant 9.99999974E-6 : f32
    %72 = vector.broadcast %cst_39 : f32 to vector<1x128xf32>
    %73 = arith.maximumf %71, %72 : vector<1x128xf32>
    %74 = math.sqrt %73 : vector<1x128xf32>
    %cst_40 = arith.constant 9.99999974E-6 : f32
    %75 = math.sqrt %cst_40 : f32
    %76 = vector.broadcast %75 : f32 to vector<1x128xf32>
    %77 = arith.cmpf ole, %74, %76 : vector<1x128xf32>
    %cst_41 = arith.constant 0.000000e+00 : f32
    %78 = vector.broadcast %cst_41 : f32 to vector<1x128xf32>
    %79 = arith.select %77, %78, %74 : vector<1x128xi1>, vector<1x128xf32>
    %cst_42 = arith.constant dense<0x7F800000> : vector<128xf32>
    %80 = vector.multi_reduction <minimumf>, %60, %cst_42 [0] : vector<16x128xf32> to vector<128xf32>
    %81 = vector.shape_cast %80 : vector<128xf32> to vector<1x128xf32>
    %cst_43 = arith.constant dense<0xFF800000> : vector<128xf32>
    %82 = vector.multi_reduction <maximumf>, %60, %cst_43 [0] : vector<16x128xf32> to vector<128xf32>
    %83 = vector.shape_cast %82 : vector<128xf32> to vector<1x128xf32>
    %84 = vector.shape_cast %60 : vector<16x128xf32> to vector<16x1x128xf32>
    %cst_44 = arith.constant 0.000000e+00 : f32
    %85 = vector.broadcast %cst_44 : f32 to vector<16x128xf32>
    %cst_45 = arith.constant 0.000000e+00 : f32
    %86 = vector.broadcast %cst_45 : f32 to vector<16x128xf32>
    %87 = vector.extract_strided_slice %60 {offsets = [0, 0], sizes = [8, 128], strides = [1, 1]} : vector<16x128xf32> to vector<8x128xf32>
    %88 = vector.shape_cast %87 : vector<8x128xf32> to vector<1x8x128xf32>
    %89 = vector.broadcast %88 : vector<1x8x128xf32> to vector<16x8x128xf32>
    %90 = vector.broadcast %84 : vector<16x1x128xf32> to vector<16x8x128xf32>
    %91 = arith.cmpf olt, %89, %90 : vector<16x8x128xf32>
    %92 = arith.extui %91 : vector<16x8x128xi1> to vector<16x8x128xi32>
    %93 = arith.sitofp %92 : vector<16x8x128xi32> to vector<16x8x128xf32>
    %cst_46 = arith.constant dense<0.000000e+00> : vector<16x128xf32>
    %94 = vector.multi_reduction <add>, %93, %cst_46 [1] : vector<16x8x128xf32> to vector<16x128xf32>
    %95 = arith.addf %85, %94 : vector<16x128xf32>
    %96 = vector.broadcast %88 : vector<1x8x128xf32> to vector<16x8x128xf32>
    %97 = vector.broadcast %84 : vector<16x1x128xf32> to vector<16x8x128xf32>
    %98 = arith.cmpf ole, %96, %97 : vector<16x8x128xf32>
    %99 = arith.extui %98 : vector<16x8x128xi1> to vector<16x8x128xi32>
    %100 = arith.sitofp %99 : vector<16x8x128xi32> to vector<16x8x128xf32>
    %cst_47 = arith.constant dense<0.000000e+00> : vector<16x128xf32>
    %101 = vector.multi_reduction <add>, %100, %cst_47 [1] : vector<16x8x128xf32> to vector<16x128xf32>
    %102 = arith.addf %86, %101 : vector<16x128xf32>
    %103 = vector.extract_strided_slice %60 {offsets = [8, 0], sizes = [8, 128], strides = [1, 1]} : vector<16x128xf32> to vector<8x128xf32>
    %104 = vector.shape_cast %103 : vector<8x128xf32> to vector<1x8x128xf32>
    %105 = vector.broadcast %104 : vector<1x8x128xf32> to vector<16x8x128xf32>
    %106 = vector.broadcast %84 : vector<16x1x128xf32> to vector<16x8x128xf32>
    %107 = arith.cmpf olt, %105, %106 : vector<16x8x128xf32>
    %108 = arith.extui %107 : vector<16x8x128xi1> to vector<16x8x128xi32>
    %109 = arith.sitofp %108 : vector<16x8x128xi32> to vector<16x8x128xf32>
    %cst_48 = arith.constant dense<0.000000e+00> : vector<16x128xf32>
    %110 = vector.multi_reduction <add>, %109, %cst_48 [1] : vector<16x8x128xf32> to vector<16x128xf32>
    %111 = arith.addf %95, %110 : vector<16x128xf32>
    %112 = vector.broadcast %104 : vector<1x8x128xf32> to vector<16x8x128xf32>
    %113 = vector.broadcast %84 : vector<16x1x128xf32> to vector<16x8x128xf32>
    %114 = arith.cmpf ole, %112, %113 : vector<16x8x128xf32>
    %115 = arith.extui %114 : vector<16x8x128xi1> to vector<16x8x128xi32>
    %116 = arith.sitofp %115 : vector<16x8x128xi32> to vector<16x8x128xf32>
    %cst_49 = arith.constant dense<0.000000e+00> : vector<16x128xf32>
    %117 = vector.multi_reduction <add>, %116, %cst_49 [1] : vector<16x8x128xf32> to vector<16x128xf32>
    %118 = arith.addf %102, %117 : vector<16x128xf32>
    %cst_50 = arith.constant 7.000000e+00 : f32
    %119 = vector.broadcast %cst_50 : f32 to vector<16x128xf32>
    %120 = arith.cmpf ole, %111, %119 : vector<16x128xf32>
    %cst_51 = arith.constant 8.000000e+00 : f32
    %121 = vector.broadcast %cst_51 : f32 to vector<16x128xf32>
    %122 = arith.cmpf oge, %118, %121 : vector<16x128xf32>
    %123 = arith.andi %120, %122 : vector<16x128xi1>
    %cst_52 = arith.constant 0xFF800000 : f32
    %124 = vector.broadcast %cst_52 : f32 to vector<16x128xf32>
    %125 = arith.select %123, %60, %124 : vector<16x128xi1>, vector<16x128xf32>
    %cst_53 = arith.constant dense<0xFF800000> : vector<128xf32>
    %126 = vector.multi_reduction <maximumf>, %125, %cst_53 [0] : vector<16x128xf32> to vector<128xf32>
    %127 = vector.shape_cast %126 : vector<128xf32> to vector<1x128xf32>
    %c0_54 = arith.constant 0 : index
    %128 = memref.load %arg9[%c0_54] : memref<1xf32, #tpu.memory_space<smem>>
    %129 = vector.broadcast %128 : f32 to vector<16x128xf32>
    %130 = arith.mulf %60, %129 : vector<16x128xf32>
    %cst_55 = arith.constant dense<0xFF800000> : vector<128xf32>
    %131 = vector.multi_reduction <maximumf>, %130, %cst_55 [0] : vector<16x128xf32> to vector<128xf32>
    %132 = vector.shape_cast %131 : vector<128xf32> to vector<1x128xf32>
    %133 = vector.broadcast %132 : vector<1x128xf32> to vector<16x128xf32>
    %134 = arith.subf %130, %133 : vector<16x128xf32>
    %135 = math.exp %134 : vector<16x128xf32>
    %cst_56 = arith.constant dense<0.000000e+00> : vector<128xf32>
    %136 = vector.multi_reduction <add>, %135, %cst_56 [0] : vector<16x128xf32> to vector<128xf32>
    %137 = vector.shape_cast %136 : vector<128xf32> to vector<1x128xf32>
    %138 = tpu.reciprocal %137 {approx = true} : vector<1x128xf32> -> vector<1x128xf32>
    %139 = vector.broadcast %138 : vector<1x128xf32> to vector<16x128xf32>
    %140 = arith.mulf %135, %139 : vector<16x128xf32>
    %141 = arith.mulf %140, %60 : vector<16x128xf32>
    %cst_57 = arith.constant dense<0.000000e+00> : vector<128xf32>
    %142 = vector.multi_reduction <add>, %141, %cst_57 [0] : vector<16x128xf32> to vector<128xf32>
    %143 = vector.shape_cast %142 : vector<128xf32> to vector<1x128xf32>
    %144 = tpu.concatenate %62, %64, %127, %79, %81, %83, %143, %32 in 1 : vector<1x128xf32>, vector<1x128xf32>, vector<1x128xf32>, vector<1x128xf32>, vector<1x128xf32>, vector<1x128xf32>, vector<1x128xf32>, vector<1x640xf32> -> vector<1x1536xf32>
    %c0_58 = arith.constant 0 : index
    %c0_59 = arith.constant 0 : index
    %145 = vector.load %arg10[%c0_58, %c0_59] : memref<1536x128xf32, #tpu.memory_space<vmem>>, vector<1536x128xf32>
    %cst_60 = arith.constant dense<0.000000e+00> : vector<1x128xf32>
    %146 = tpu.matmul %144, %145, %cst_60 {dimension_numbers = #tpu.dot_dimension_numbers<[1], [0], [0], [1], [0, 0, 1, 1], [], []>} : vector<1x1536xf32>, vector<1536x128xf32>, vector<1x128xf32> -> vector<1x128xf32>
    %c0_61 = arith.constant 0 : index
    %c0_62 = arith.constant 0 : index
    %147 = vector.load %arg11[%c0_61, %c0_62] : memref<1x128xf32, #tpu.memory_space<vmem>>, vector<1x128xf32>
    %148 = arith.addf %146, %147 : vector<1x128xf32>
    %cst_63 = arith.constant 0.000000e+00 : f32
    %149 = vector.broadcast %cst_63 : f32 to vector<1x128xf32>
    %150 = arith.maximumf %148, %149 : vector<1x128xf32>
    %c0_64 = arith.constant 0 : index
    %c0_65 = arith.constant 0 : index
    %151 = vector.load %arg12[%c0_64, %c0_65] : memref<128x128xf32, #tpu.memory_space<vmem>>, vector<128x128xf32>
    %cst_66 = arith.constant dense<0.000000e+00> : vector<1x128xf32>
    %152 = tpu.matmul %150, %151, %cst_66 {dimension_numbers = #tpu.dot_dimension_numbers<[1], [0], [0], [1], [0, 0, 1, 1], [], []>} : vector<1x128xf32>, vector<128x128xf32>, vector<1x128xf32> -> vector<1x128xf32>
    %c0_67 = arith.constant 0 : index
    %c0_68 = arith.constant 0 : index
    %153 = vector.load %arg13[%c0_67, %c0_68] : memref<1x128xf32, #tpu.memory_space<vmem>>, vector<1x128xf32>
    %154 = arith.addf %152, %153 : vector<1x128xf32>
    %cst_69 = arith.constant 0.000000e+00 : f32
    %155 = vector.broadcast %cst_69 : f32 to vector<1x128xf32>
    %156 = arith.maximumf %154, %155 : vector<1x128xf32>
    %c0_70 = arith.constant 0 : index
    %c0_71 = arith.constant 0 : index
    %157 = vector.load %arg14[%c0_70, %c0_71] : memref<128x128xf32, #tpu.memory_space<vmem>>, vector<128x128xf32>
    %cst_72 = arith.constant dense<0.000000e+00> : vector<1x128xf32>
    %158 = tpu.matmul %156, %157, %cst_72 {dimension_numbers = #tpu.dot_dimension_numbers<[1], [0], [0], [1], [0, 0, 1, 1], [], []>} : vector<1x128xf32>, vector<128x128xf32>, vector<1x128xf32> -> vector<1x128xf32>
    %c0_73 = arith.constant 0 : index
    %c0_74 = arith.constant 0 : index
    %159 = vector.load %arg15[%c0_73, %c0_74] : memref<1x128xf32, #tpu.memory_space<vmem>>, vector<1x128xf32>
    %160 = arith.addf %158, %159 : vector<1x128xf32>
    %161 = vector.shape_cast %160 : vector<1x128xf32> to vector<1x1x128xf32>
    %162 = vector.shape_cast %161 : vector<1x1x128xf32> to vector<1x1x128xf32>
    %163 = vector.broadcast %162 : vector<1x1x128xf32> to vector<1x8x128xf32>
    %c0_75 = arith.constant 0 : index
    %c0_76 = arith.constant 0 : index
    %c0_77 = arith.constant 0 : index
    %164 = vector.load %arg16[%c0_75, %c0_76, %c0_77] : memref<1x8x128xf32, #tpu.memory_space<vmem>>, vector<1x8x128xf32>
    tpu.vector_store %arg16[%c0_75, %c0_76, %c0_77], %163 {strides = array<i32>} : memref<1x8x128xf32, #tpu.memory_space<vmem>>, vector<1x8x128xf32>,
    return
  }
  func.func @transform_0(%arg0: i32) -> (i32, i32, i32) {
    %c0_i32 = arith.constant 0 : i32
    %c0_i32_0 = arith.constant 0 : i32
    %c0_i32_1 = arith.constant 0 : i32
    return %arg0, %c0_i32, %c0_i32_0 : i32, i32, i32
  }
  func.func @transform_1(%arg0: i32) -> (i32, i32, i32) {
    %c0_i32 = arith.constant 0 : i32
    %c0_i32_0 = arith.constant 0 : i32
    %c0_i32_1 = arith.constant 0 : i32
    return %arg0, %c0_i32, %c0_i32_0 : i32, i32, i32
  }
  func.func @transform_2(%arg0: i32) -> (i32, i32) {
    %c0_i32 = arith.constant 0 : i32
    %c0_i32_0 = arith.constant 0 : i32
    %c0_i32_1 = arith.constant 0 : i32
    return %c0_i32, %c0_i32_0 : i32, i32
  }
  func.func @transform_3(%arg0: i32) -> (i32, i32) {
    %c0_i32 = arith.constant 0 : i32
    %c0_i32_0 = arith.constant 0 : i32
    %c0_i32_1 = arith.constant 0 : i32
    return %c0_i32, %c0_i32_0 : i32, i32
  }
  func.func @transform_4(%arg0: i32) -> (i32, i32) {
    %c0_i32 = arith.constant 0 : i32
    %c0_i32_0 = arith.constant 0 : i32
    %c0_i32_1 = arith.constant 0 : i32
    return %c0_i32, %c0_i32_0 : i32, i32
  }
  func.func @transform_5(%arg0: i32) -> (i32, i32) {
    %c0_i32 = arith.constant 0 : i32
    %c0_i32_0 = arith.constant 0 : i32
    %c0_i32_1 = arith.constant 0 : i32
    return %c0_i32, %c0_i32_0 : i32, i32
  }
  func.func @transform_6(%arg0: i32) -> (i32, i32) {
    %c0_i32 = arith.constant 0 : i32
    %c0_i32_0 = arith.constant 0 : i32
    %c0_i32_1 = arith.constant 0 : i32
    return %c0_i32, %c0_i32_0 : i32, i32
  }
  func.func @transform_7(%arg0: i32) -> (i32, i32) {
    %c0_i32 = arith.constant 0 : i32
    %c0_i32_0 = arith.constant 0 : i32
    %c0_i32_1 = arith.constant 0 : i32
    return %c0_i32, %c0_i32_0 : i32, i32
  }
  func.func @transform_8(%arg0: i32) -> i32 {
    %c0_i32 = arith.constant 0 : i32
    %c0_i32_0 = arith.constant 0 : i32
    return %c0_i32 : i32
  }
  func.func @transform_9(%arg0: i32) -> (i32, i32) {
    %c0_i32 = arith.constant 0 : i32
    %c0_i32_0 = arith.constant 0 : i32
    %c0_i32_1 = arith.constant 0 : i32
    return %c0_i32, %c0_i32_0 : i32, i32
  }
  func.func @transform_10(%arg0: i32) -> (i32, i32) {
    %c0_i32 = arith.constant 0 : i32
    %c0_i32_0 = arith.constant 0 : i32
    %c0_i32_1 = arith.constant 0 : i32
    return %c0_i32, %c0_i32_0 : i32, i32
  }
  func.func @transform_11(%arg0: i32) -> (i32, i32) {
    %c0_i32 = arith.constant 0 : i32
    %c0_i32_0 = arith.constant 0 : i32
    %c0_i32_1 = arith.constant 0 : i32
    return %c0_i32, %c0_i32_0 : i32, i32
  }
  func.func @transform_12(%arg0: i32) -> (i32, i32) {
    %c0_i32 = arith.constant 0 : i32
    %c0_i32_0 = arith.constant 0 : i32
    %c0_i32_1 = arith.constant 0 : i32
    return %c0_i32, %c0_i32_0 : i32, i32
  }
  func.func @transform_13(%arg0: i32) -> (i32, i32) {
    %c0_i32 = arith.constant 0 : i32
    %c0_i32_0 = arith.constant 0 : i32
    %c0_i32_1 = arith.constant 0 : i32
    return %c0_i32, %c0_i32_0 : i32, i32
  }
  func.func @transform_14(%arg0: i32) -> (i32, i32) {
    %c0_i32 = arith.constant 0 : i32
    %c0_i32_0 = arith.constant 0 : i32
    %c0_i32_1 = arith.constant 0 : i32
    return %c0_i32, %c0_i32_0 : i32, i32
  }
  func.func @transform_15(%arg0: i32) -> (i32, i32, i32) {
    %c0_i32 = arith.constant 0 : i32
    %c0_i32_0 = arith.constant 0 : i32
    %c0_i32_1 = arith.constant 0 : i32
    return %arg0, %c0_i32, %c0_i32_0 : i32, i32, i32
  }
}

</mosaic_0001>

<llo_original>
// kernel: tpu_custom_call.1
$region0: #{tpu_custom_call.1}
  #allocation0 [shape = 'u32[]', space=smem, size = 0x4, offset = 0x4, fixed_abs, tag = 'smem constant byte address 0x4 - core index']
  #allocation1 [shape = 'u32[144,128]{1,0:T(1,128)}', space=vmem, size = 0x12000, scoped, tag = 'internal scratch']
  #allocation2 [shape = 'f32[1]{0:T(128)S(6)}', space=smem, size = 0x200, scoped, tag = 'scoped memory for tpu_custom_call.1']
  %s0 = inlined_call_operand.hbm [shape: f32[4,16,128], index: 0, kind: input, shape index: {}]
  %s1 = inlined_call_operand.hbm [shape: bf16[4,16,16], index: 1, kind: input, shape index: {}]
  %s2 = inlined_call_operand.hbm [shape: bf16[128,128], index: 2, kind: input, shape index: {}]
  %s3 = inlined_call_operand.vmem [shape: f32[1,128], index: 3, kind: input, shape index: {}]
  %s4 = inlined_call_operand.hbm [shape: bf16[128,128], index: 4, kind: input, shape index: {}]
  %s5 = inlined_call_operand.hbm [shape: bf16[128,128], index: 5, kind: input, shape index: {}]
  %s6 = inlined_call_operand.vmem [shape: f32[1,128], index: 6, kind: input, shape index: {}]
  %s7 = inlined_call_operand.hbm [shape: bf16[128,128], index: 7, kind: input, shape index: {}]
  %s8 = inlined_call_operand.<no memory space> [shape: f32[1], index: 8, kind: input, shape index: {}]
  %s9 = inlined_call_operand.hbm [shape: f32[1536,128], index: 9, kind: input, shape index: {}]
  %s10 = inlined_call_operand.vmem [shape: f32[1,128], index: 10, kind: input, shape index: {}]
  %s11 = inlined_call_operand.hbm [shape: f32[128,128], index: 11, kind: input, shape index: {}]
  %s12 = inlined_call_operand.vmem [shape: f32[1,128], index: 12, kind: input, shape index: {}]
  %s13 = inlined_call_operand.hbm [shape: f32[128,128], index: 13, kind: input, shape index: {}]
  %s14 = inlined_call_operand.vmem [shape: f32[1,128], index: 14, kind: input, shape index: {}]
  %s15 = inlined_call_operand.hbm [shape: f32[4,8,128], index: 15, kind: output, shape index: {}]
  %s16 = sld [smem:[#allocation0]]
  $region129: #{tpu_custom_call.1} parent=0
    _
  %s18 = ssub.s32 1, %s16
  %s19 = scalar_select 0, %s18, %s16
  %20 = sst [smem:[#allocation2]] %s8
  $region1: #{tpu_custom_call.1} parent=0
    #allocation3 [shape = 'u8[16384]{0}', space=vmem, size = 0x4000, scoped, tag = 'input window, operand 0']
    #allocation4 [shape = 's32[2]{0}', space=sflag, size = 0x8, scoped, tag = 'scoped memory for tpu_custom_call.1']
    #allocation5 [shape = 's32[2]{0}', space=sflag, size = 0x8, scoped, tag = 'scoped memory for tpu_custom_call.1']
    #allocation6 [shape = 'u8[8192]{0}', space=vmem, size = 0x2000, scoped, tag = 'input window, operand 1']
    #allocation7 [shape = 's32[2]{0}', space=sflag, size = 0x8, scoped, tag = 'scoped memory for tpu_custom_call.1']
    #allocation8 [shape = 'u8[32768]{0}', space=vmem, size = 0x8000, scoped, tag = 'input window, operand 2, single buffered']
    #allocation9 [shape = 'u8[32768]{0}', space=vmem, size = 0x8000, scoped, tag = 'input window, operand 4, single buffered']
    #allocation10 [shape = 's32[1]{0}', space=sflag, size = 0x4, scoped, tag = 'scoped memory for tpu_custom_call.1']
    #allocation11 [shape = 'u8[32768]{0}', space=vmem, size = 0x8000, scoped, tag = 'input window, operand 5, single buffered']
    #allocation12 [shape = 'u8[32768]{0}', space=vmem, size = 0x8000, scoped, tag = 'input window, operand 7, single buffered']
    #allocation13 [shape = 's32[1]{0}', space=sflag, size = 0x4, scoped, tag = 'scoped memory for tpu_custom_call.1']
    #allocation14 [shape = 'u8[786432]{0}', space=vmem, size = 0xc0000, scoped, tag = 'input window, operand 9, single buffered']
    #allocation15 [shape = 'u8[65536]{0}', space=vmem, size = 0x10000, scoped, tag = 'input window, operand 11, single buffered']
    #allocation16 [shape = 's32[1]{0}', space=sflag, size = 0x4, scoped, tag = 'scoped memory for tpu_custom_call.1']
    #allocation17 [shape = 'u8[65536]{0}', space=vmem, size = 0x10000, scoped, tag = 'input window, operand 13, single buffered']
    #allocation18 [shape = 'u8[8192]{0}', space=vmem, size = 0x2000, scoped, tag = 'output window, operand 0']
    %21 = vsyncpa [#allocation4], 0
    %s22 = scalar_lea.sflag [#allocation4], 1
    %23 = vsyncpa %s22, 0
    %24 = vsyncpa [#allocation7], 0
    %s25 = scalar_lea.sflag [#allocation7], 1
    %26 = vsyncpa %s25, 0
    %27 = vsyncpa [#allocation10], 0
    %28 = vsyncpa [#allocation13], 0
    %29 = vsyncpa [#allocation16], 0
    %30 = vsyncpa [#allocation5], 0
    %s31 = scalar_lea.sflag [#allocation5], 1
    %32 = vsyncpa %s31, 0
    loop: start=0, step=1, limit=6
    $region2: #{tpu_custom_call.1} parent=1 // loop_pre_header
      _
    $region3: #{tpu_custom_call.1} parent=1 // loop_header
      %s34 = sphi 0, %s38
      %p35 = scmp.ge.s32.totalorder %s34, 6
      %s44 = sphi 0, %s46
      %s47 = sphi 0, %s44
      %s48 = sphi 0, %s47
      %s64 = sphi 0, %s48
      %s70 = sphi 0, %s72
      %s73 = sphi 0, %s70
      %s74 = sphi 0, %s73
      %s90 = sphi 0, %s74
      %s94 = sphi 0, %s94
      %s96 = sphi 0, %s94
      %s97 = sphi 0, %s96
      %s111 = sphi 0, %s97
      %s115 = sphi 0, %s115
      %s117 = sphi 0, %s115
      %s118 = sphi 0, %s117
      %s132 = sphi 0, %s118
      %s136 = sphi 0, %s136
      %s138 = sphi 0, %s136
      %s139 = sphi 0, %s138
      %s153 = sphi 0, %s139
      %s157 = sphi 0, %s157
      %s159 = sphi 0, %s157
      %s160 = sphi 0, %s159
      %s174 = sphi 0, %s160
      %s178 = sphi 0, %s178
      %s180 = sphi 0, %s178
      %s181 = sphi 0, %s180
      %s195 = sphi 0, %s181
      %s199 = sphi 0, %s199
      %s201 = sphi 0, %s199
      %s202 = sphi 0, %s201
      %s216 = sphi 0, %s202
      %s220 = sphi 0, %s220
      %s222 = sphi 0, %s220
      %s223 = sphi 0, %s222
      %s237 = sphi 0, %s223
      %s241 = sphi 0, %s241
      %s243 = sphi 0, %s241
      %s244 = sphi 0, %s243
      %s258 = sphi 0, %s244
      %s262 = sphi 0, %s262
      %s264 = sphi 0, %s262
      %s265 = sphi 0, %s264
      %s279 = sphi 0, %s265
      %s283 = sphi 0, %s283
      %s285 = sphi 0, %s283
      %s286 = sphi 0, %s285
      %s300 = sphi 0, %s286
      %s304 = sphi 0, %s304
      %s306 = sphi 0, %s304
      %s307 = sphi 0, %s306
      %s321 = sphi 0, %s307
      %s325 = sphi 0, %s325
      %s327 = sphi 0, %s325
      %s328 = sphi 0, %s327
      %s342 = sphi 0, %s328
      %s346 = sphi 0, %s346
      %s348 = sphi 0, %s346
      %s349 = sphi 0, %s348
      %s363 = sphi 0, %s349
      %s369 = sphi 0, %s371
      %s372 = sphi 0, %s369
      %s373 = sphi 0, %s372
      %s389 = sphi 0, %s373
    $region4: #{tpu_custom_call.1} parent=1 // loop_header_branch
      %37 = sbr.rel (%p35) target = $region8
    $region5: #{tpu_custom_call.1} parent=1 // loop_body
      %s39 = ssub.s32 %s34, 1
      %s40 = ssub.s32 %s34, 2
      %s41 = sadd.s32 %s34, 1
      %s42 = ssub.s32 %s34, %s41
      %p43 = scmp.eq.s32.totalorder %s42, 0
      %s45 = sadd.s32 %s44, 1
      %s46 = scalar_select %p43, %s44, %s45
      %p49 = pneg %p43
      %p50 = scmp.eq.s32.totalorder %s34, 3
      %p51 = por %p49, %p50
      %p52 = scmp.ne.s32.totalorder %s44, %s47
      %p53 = scmp.eq.s32.totalorder %s34, 0
      %p54 = por %p52, %p53
      %p55 = scmp.ne.s32.totalorder %s44, %s47
      %p56 = scmp.eq.s32.totalorder %s39, 3
      %p57 = por %p55, %p56
      %p58 = scmp.ne.s32.totalorder %s47, %s48
      %p59 = scmp.eq.s32.totalorder %s39, 0
      %p60 = por %p58, %p59
      %p61 = scmp.ne.s32.totalorder %s47, %s48
      %p62 = scmp.eq.s32.totalorder %s40, 3
      %p63 = por %p61, %p62
      %p65 = scmp.ne.s32.totalorder %s48, %s64
      %p66 = scmp.eq.s32.totalorder %s40, 0
      %p67 = por %p65, %p66
      %s68 = ssub.s32 %s34, %s41
      %p69 = scmp.eq.s32.totalorder %s68, 0
      %s71 = sadd.s32 %s70, 1
      %s72 = scalar_select %p69, %s70, %s71
      %p75 = pneg %p69
      %p76 = scmp.eq.s32.totalorder %s34, 3
      %p77 = por %p75, %p76
      %p78 = scmp.ne.s32.totalorder %s70, %s73
      %p79 = scmp.eq.s32.totalorder %s34, 0
      %p80 = por %p78, %p79
      %p81 = scmp.ne.s32.totalorder %s70, %s73
      %p82 = scmp.eq.s32.totalorder %s39, 3
      %p83 = por %p81, %p82
      %p84 = scmp.ne.s32.totalorder %s73, %s74
      %p85 = scmp.eq.s32.totalorder %s39, 0
      %p86 = por %p84, %p85
      %p87 = scmp.ne.s32.totalorder %s73, %s74
      %p88 = scmp.eq.s32.totalorder %s40, 3
      %p89 = por %p87, %p88
      %p91 = scmp.ne.s32.totalorder %s74, %s90
      %p92 = scmp.eq.s32.totalorder %s40, 0
      %p93 = por %p91, %p92
      %s95 = sadd.s32 %s94, 1
      %p98 = scmp.eq.s32.totalorder %s34, 3
      %p99 = scmp.ne.s32.totalorder %s94, %s96
      %p100 = scmp.eq.s32.totalorder %s34, 0
      %p101 = por %p99, %p100
      %p102 = scmp.ne.s32.totalorder %s94, %s96
      %p103 = scmp.eq.s32.totalorder %s39, 3
      %p104 = por %p102, %p103
      %p105 = scmp.ne.s32.totalorder %s96, %s97
      %p106 = scmp.eq.s32.totalorder %s39, 0
      %p107 = por %p105, %p106
      %p108 = scmp.ne.s32.totalorder %s96, %s97
      %p109 = scmp.eq.s32.totalorder %s40, 3
      %p110 = por %p108, %p109
      %p112 = scmp.ne.s32.totalorder %s97, %s111
      %p113 = scmp.eq.s32.totalorder %s40, 0
      %p114 = por %p112, %p113
      %s116 = sadd.s32 %s115, 1
      %p119 = scmp.eq.s32.totalorder %s34, 3
      %p120 = scmp.ne.s32.totalorder %s115, %s117
      %p121 = scmp.eq.s32.totalorder %s34, 0
      %p122 = por %p120, %p121
      %p123 = scmp.ne.s32.totalorder %s115, %s117
      %p124 = scmp.eq.s32.totalorder %s39, 3
      %p125 = por %p123, %p124
      %p126 = scmp.ne.s32.totalorder %s117, %s118
      %p127 = scmp.eq.s32.totalorder %s39, 0
      %p128 = por %p126, %p127
      %p129 = scmp.ne.s32.totalorder %s117, %s118
      %p130 = scmp.eq.s32.totalorder %s40, 3
      %p131 = por %p129, %p130
      %p133 = scmp.ne.s32.totalorder %s118, %s132
      %p134 = scmp.eq.s32.totalorder %s40, 0
      %p135 = por %p133, %p134
      %s137 = sadd.s32 %s136, 1
      %p140 = scmp.eq.s32.totalorder %s34, 3
      %p141 = scmp.ne.s32.totalorder %s136, %s138
      %p142 = scmp.eq.s32.totalorder %s34, 0
      %p143 = por %p141, %p142
      %p144 = scmp.ne.s32.totalorder %s136, %s138
      %p145 = scmp.eq.s32.totalorder %s39, 3
      %p146 = por %p144, %p145
      %p147 = scmp.ne.s32.totalorder %s138, %s139
      %p148 = scmp.eq.s32.totalorder %s39, 0
      %p149 = por %p147, %p148
      %p150 = scmp.ne.s32.totalorder %s138, %s139
      %p151 = scmp.eq.s32.totalorder %s40, 3
      %p152 = por %p150, %p151
      %p154 = scmp.ne.s32.totalorder %s139, %s153
      %p155 = scmp.eq.s32.totalorder %s40, 0
      %p156 = por %p154, %p155
      %s158 = sadd.s32 %s157, 1
      %p161 = scmp.eq.s32.totalorder %s34, 3
      %p162 = scmp.ne.s32.totalorder %s157, %s159
      %p163 = scmp.eq.s32.totalorder %s34, 0
      %p164 = por %p162, %p163
      %p165 = scmp.ne.s32.totalorder %s157, %s159
      %p166 = scmp.eq.s32.totalorder %s39, 3
      %p167 = por %p165, %p166
      %p168 = scmp.ne.s32.totalorder %s159, %s160
      %p169 = scmp.eq.s32.totalorder %s39, 0
      %p170 = por %p168, %p169
      %p171 = scmp.ne.s32.totalorder %s159, %s160
      %p172 = scmp.eq.s32.totalorder %s40, 3
      %p173 = por %p171, %p172
      %p175 = scmp.ne.s32.totalorder %s160, %s174
      %p176 = scmp.eq.s32.totalorder %s40, 0
      %p177 = por %p175, %p176
      %s179 = sadd.s32 %s178, 1
      %p182 = scmp.eq.s32.totalorder %s34, 3
      %p183 = scmp.ne.s32.totalorder %s178, %s180
      %p184 = scmp.eq.s32.totalorder %s34, 0
      %p185 = por %p183, %p184
      %p186 = scmp.ne.s32.totalorder %s178, %s180
      %p187 = scmp.eq.s32.totalorder %s39, 3
      %p188 = por %p186, %p187
      %p189 = scmp.ne.s32.totalorder %s180, %s181
      %p190 = scmp.eq.s32.totalorder %s39, 0
      %p191 = por %p189, %p190
      %p192 = scmp.ne.s32.totalorder %s180, %s181
      %p193 = scmp.eq.s32.totalorder %s40, 3
      %p194 = por %p192, %p193
      %p196 = scmp.ne.s32.totalorder %s181, %s195
      %p197 = scmp.eq.s32.totalorder %s40, 0
      %p198 = por %p196, %p197
      %s200 = sadd.s32 %s199, 1
      %p203 = scmp.eq.s32.totalorder %s34, 3
      %p204 = scmp.ne.s32.totalorder %s199, %s201
      %p205 = scmp.eq.s32.totalorder %s34, 0
      %p206 = por %p204, %p205
      %p207 = scmp.ne.s32.totalorder %s199, %s201
      %p208 = scmp.eq.s32.totalorder %s39, 3
      %p209 = por %p207, %p208
      %p210 = scmp.ne.s32.totalorder %s201, %s202
      %p211 = scmp.eq.s32.totalorder %s39, 0
      %p212 = por %p210, %p211
      %p213 = scmp.ne.s32.totalorder %s201, %s202
      %p214 = scmp.eq.s32.totalorder %s40, 3
      %p215 = por %p213, %p214
      %p217 = scmp.ne.s32.totalorder %s202, %s216
      %p218 = scmp.eq.s32.totalorder %s40, 0
      %p219 = por %p217, %p218
      %s221 = sadd.s32 %s220, 1
      %p224 = scmp.eq.s32.totalorder %s34, 3
      %p225 = scmp.ne.s32.totalorder %s220, %s222
      %p226 = scmp.eq.s32.totalorder %s34, 0
      %p227 = por %p225, %p226
      %p228 = scmp.ne.s32.totalorder %s220, %s222
      %p229 = scmp.eq.s32.totalorder %s39, 3
      %p230 = por %p228, %p229
      %p231 = scmp.ne.s32.totalorder %s222, %s223
      %p232 = scmp.eq.s32.totalorder %s39, 0
      %p233 = por %p231, %p232
      %p234 = scmp.ne.s32.totalorder %s222, %s223
      %p235 = scmp.eq.s32.totalorder %s40, 3
      %p236 = por %p234, %p235
      %p238 = scmp.ne.s32.totalorder %s223, %s237
      %p239 = scmp.eq.s32.totalorder %s40, 0
      %p240 = por %p238, %p239
      %s242 = sadd.s32 %s241, 1
      %p245 = scmp.eq.s32.totalorder %s34, 3
      %p246 = scmp.ne.s32.totalorder %s241, %s243
      %p247 = scmp.eq.s32.totalorder %s34, 0
      %p248 = por %p246, %p247
      %p249 = scmp.ne.s32.totalorder %s241, %s243
      %p250 = scmp.eq.s32.totalorder %s39, 3
      %p251 = por %p249, %p250
      %p252 = scmp.ne.s32.totalorder %s243, %s244
      %p253 = scmp.eq.s32.totalorder %s39, 0
      %p254 = por %p252, %p253
      %p255 = scmp.ne.s32.totalorder %s243, %s244
      %p256 = scmp.eq.s32.totalorder %s40, 3
      %p257 = por %p255, %p256
      %p259 = scmp.ne.s32.totalorder %s244, %s258
      %p260 = scmp.eq.s32.totalorder %s40, 0
      %p261 = por %p259, %p260
      %s263 = sadd.s32 %s262, 1
      %p266 = scmp.eq.s32.totalorder %s34, 3
      %p267 = scmp.ne.s32.totalorder %s262, %s264
      %p268 = scmp.eq.s32.totalorder %s34, 0
      %p269 = por %p267, %p268
      %p270 = scmp.ne.s32.totalorder %s262, %s264
      %p271 = scmp.eq.s32.totalorder %s39, 3
      %p272 = por %p270, %p271
      %p273 = scmp.ne.s32.totalorder %s264, %s265
      %p274 = scmp.eq.s32.totalorder %s39, 0
      %p275 = por %p273, %p274
      %p276 = scmp.ne.s32.totalorder %s264, %s265
      %p277 = scmp.eq.s32.totalorder %s40, 3
      %p278 = por %p276, %p277
      %p280 = scmp.ne.s32.totalorder %s265, %s279
      %p281 = scmp.eq.s32.totalorder %s40, 0
      %p282 = por %p280, %p281
      %s284 = sadd.s32 %s283, 1
      %p287 = scmp.eq.s32.totalorder %s34, 3
      %p288 = scmp.ne.s32.totalorder %s283, %s285
      %p289 = scmp.eq.s32.totalorder %s34, 0
      %p290 = por %p288, %p289
      %p291 = scmp.ne.s32.totalorder %s283, %s285
      %p292 = scmp.eq.s32.totalorder %s39, 3
      %p293 = por %p291, %p292
      %p294 = scmp.ne.s32.totalorder %s285, %s286
      %p295 = scmp.eq.s32.totalorder %s39, 0
      %p296 = por %p294, %p295
      %p297 = scmp.ne.s32.totalorder %s285, %s286
      %p298 = scmp.eq.s32.totalorder %s40, 3
      %p299 = por %p297, %p298
      %p301 = scmp.ne.s32.totalorder %s286, %s300
      %p302 = scmp.eq.s32.totalorder %s40, 0
      %p303 = por %p301, %p302
      %s305 = sadd.s32 %s304, 1
      %p308 = scmp.eq.s32.totalorder %s34, 3
      %p309 = scmp.ne.s32.totalorder %s304, %s306
      %p310 = scmp.eq.s32.totalorder %s34, 0
      %p311 = por %p309, %p310
      %p312 = scmp.ne.s32.totalorder %s304, %s306
      %p313 = scmp.eq.s32.totalorder %s39, 3
      %p314 = por %p312, %p313
      %p315 = scmp.ne.s32.totalorder %s306, %s307
      %p316 = scmp.eq.s32.totalorder %s39, 0
      %p317 = por %p315, %p316
      %p318 = scmp.ne.s32.totalorder %s306, %s307
      %p319 = scmp.eq.s32.totalorder %s40, 3
      %p320 = por %p318, %p319
      %p322 = scmp.ne.s32.totalorder %s307, %s321
      %p323 = scmp.eq.s32.totalorder %s40, 0
      %p324 = por %p322, %p323
      %s326 = sadd.s32 %s325, 1
      %p329 = scmp.eq.s32.totalorder %s34, 3
      %p330 = scmp.ne.s32.totalorder %s325, %s327
      %p331 = scmp.eq.s32.totalorder %s34, 0
      %p332 = por %p330, %p331
      %p333 = scmp.ne.s32.totalorder %s325, %s327
      %p334 = scmp.eq.s32.totalorder %s39, 3
      %p335 = por %p333, %p334
      %p336 = scmp.ne.s32.totalorder %s327, %s328
      %p337 = scmp.eq.s32.totalorder %s39, 0
      %p338 = por %p336, %p337
      %p339 = scmp.ne.s32.totalorder %s327, %s328
      %p340 = scmp.eq.s32.totalorder %s40, 3
      %p341 = por %p339, %p340
      %p343 = scmp.ne.s32.totalorder %s328, %s342
      %p344 = scmp.eq.s32.totalorder %s40, 0
      %p345 = por %p343, %p344
      %s347 = sadd.s32 %s346, 1
      %p350 = scmp.eq.s32.totalorder %s34, 3
      %p351 = scmp.ne.s32.totalorder %s346, %s348
      %p352 = scmp.eq.s32.totalorder %s34, 0
      %p353 = por %p351, %p352
      %p354 = scmp.ne.s32.totalorder %s346, %s348
      %p355 = scmp.eq.s32.totalorder %s39, 3
      %p356 = por %p354, %p355
      %p357 = scmp.ne.s32.totalorder %s348, %s349
      %p358 = scmp.eq.s32.totalorder %s39, 0
      %p359 = por %p357, %p358
      %p360 = scmp.ne.s32.totalorder %s348, %s349
      %p361 = scmp.eq.s32.totalorder %s40, 3
      %p362 = por %p360, %p361
      %p364 = scmp.ne.s32.totalorder %s349, %s363
      %p365 = scmp.eq.s32.totalorder %s40, 0
      %p366 = por %p364, %p365
      %s367 = ssub.s32 %s34, %s41
      %p368 = scmp.eq.s32.totalorder %s367, 0
      %s370 = sadd.s32 %s369, 1
      %s371 = scalar_select %p368, %s369, %s370
      %p374 = pneg %p368
      %p375 = scmp.eq.s32.totalorder %s34, 3
      %p376 = por %p374, %p375
      %p377 = scmp.ne.s32.totalorder %s369, %s372
      %p378 = scmp.eq.s32.totalorder %s34, 0
      %p379 = por %p377, %p378
      %p380 = scmp.ne.s32.totalorder %s369, %s372
      %p381 = scmp.eq.s32.totalorder %s39, 3
      %p382 = por %p380, %p381
      %p383 = scmp.ne.s32.totalorder %s372, %s373
      %p384 = scmp.eq.s32.totalorder %s39, 0
      %p385 = por %p383, %p384
      %p386 = scmp.ne.s32.totalorder %s372, %s373
      %p387 = scmp.eq.s32.totalorder %s40, 3
      %p388 = por %p386, %p387
      %p390 = scmp.ne.s32.totalorder %s373, %s389
      %p391 = scmp.eq.s32.totalorder %s40, 0
      %p392 = por %p390, %p391
      %p393 = scmp.le.s32.totalorder 1, %s34
      %p394 = scmp.lt.s32.totalorder %s34, 5
      %p395 = pnand %p393, %p394
      %p396 = pneg %p395
      // Predicated region
      $region9: #{tpu_custom_call.1} parent=5 // pred_check
        _
      $region10: #{tpu_custom_call.1} parent=5 // pred_check_branch
        %398 = sbr.rel (%p395) target = $region12
      $region11: #{tpu_custom_call.1} parent=5 // pred_region
        %s399 = ssub.s32 %s34, 1
        // Predicated region
        $region13: #{tpu_custom_call.1} parent=11 // pred_check
          %p400 = pneg %p107
        $region14: #{tpu_custom_call.1} parent=11 // pred_check_branch
          %402 = sbr.rel (%p400) target = $region16
        $region15: #{tpu_custom_call.1} parent=11 // pred_region
          %s404 = ssub.s32 1024, 1024
          %405 = vsyncadd [#allocation7], %s404
          %s406 = sshll.u32 [#allocation8], 4
          %s407 = int_to_ptr.vmem [resolvable:$true] %s406
          %412 = dma.hbm_to_vmem [thread:$0]  %s2, 1024, %s407, [#allocation7], 64, 64, 4
        $region16: #{tpu_custom_call.1} parent=11 // pred_fallthru
          _
        // Predicated region
        $region17: #{tpu_custom_call.1} parent=11 // pred_check
          %p413 = pneg %p128
        $region18: #{tpu_custom_call.1} parent=11 // pred_check_branch
          %415 = sbr.rel (%p413) target = $region20
        $region19: #{tpu_custom_call.1} parent=11 // pred_region
          _
        $region20: #{tpu_custom_call.1} parent=11 // pred_fallthru
          _
        // Predicated region
        $region21: #{tpu_custom_call.1} parent=11 // pred_check
          %p416 = pneg %p149
        $region22: #{tpu_custom_call.1} parent=11 // pred_check_branch
          %418 = sbr.rel (%p416) target = $region24
        $region23: #{tpu_custom_call.1} parent=11 // pred_region
          %s420 = ssub.s32 1024, 1024
          %421 = vsyncadd [#allocation10], %s420
          %s422 = sshll.u32 [#allocation9], 4
          %s423 = int_to_ptr.vmem [resolvable:$true] %s422
          %428 = dma.hbm_to_vmem [thread:$0]  %s4, 1024, %s423, [#allocation10], 64, 64, 4
        $region24: #{tpu_custom_call.1} parent=11 // pred_fallthru
          _
        // Predicated region
        $region25: #{tpu_custom_call.1} parent=11 // pred_check
          %p429 = pneg %p170
        $region26: #{tpu_custom_call.1} parent=11 // pred_check_branch
          %431 = sbr.rel (%p429) target = $region28
        $region27: #{tpu_custom_call.1} parent=11 // pred_region
          %s433 = ssub.s32 1024, 1024
          %434 = vsyncadd [#allocation10], %s433
          %s435 = sshll.u32 [#allocation11], 4
          %s436 = int_to_ptr.vmem [resolvable:$true] %s435
          %441 = dma.hbm_to_vmem [thread:$0]  %s5, 1024, %s436, [#allocation10], 64, 64, 4
        $region28: #{tpu_custom_call.1} parent=11 // pred_fallthru
          _
        // Predicated region
        $region29: #{tpu_custom_call.1} parent=11 // pred_check
          %p442 = pneg %p191
        $region30: #{tpu_custom_call.1} parent=11 // pred_check_branch
          %444 = sbr.rel (%p442) target = $region32
        $region31: #{tpu_custom_call.1} parent=11 // pred_region
          _
        $region32: #{tpu_custom_call.1} parent=11 // pred_fallthru
          _
        // Predicated region
        $region33: #{tpu_custom_call.1} parent=11 // pred_check
          %p445 = pneg %p212
        $region34: #{tpu_custom_call.1} parent=11 // pred_check_branch
          %447 = sbr.rel (%p445) target = $region36
        $region35: #{tpu_custom_call.1} parent=11 // pred_region
          %s449 = ssub.s32 1024, 1024
          %450 = vsyncadd [#allocation13], %s449
          %s451 = sshll.u32 [#allocation12], 4
          %s452 = int_to_ptr.vmem [resolvable:$true] %s451
          %457 = dma.hbm_to_vmem [thread:$0]  %s7, 1024, %s452, [#allocation13], 64, 64, 4
        $region36: #{tpu_custom_call.1} parent=11 // pred_fallthru
          _
        // Predicated region
        $region37: #{tpu_custom_call.1} parent=11 // pred_check
          %p458 = pneg %p233
        $region38: #{tpu_custom_call.1} parent=11 // pred_check_branch
          %460 = sbr.rel (%p458) target = $region40
        $region39: #{tpu_custom_call.1} parent=11 // pred_region
          _
        $region40: #{tpu_custom_call.1} parent=11 // pred_fallthru
          _
        // Predicated region
        $region41: #{tpu_custom_call.1} parent=11 // pred_check
          %p461 = pneg %p254
        $region42: #{tpu_custom_call.1} parent=11 // pred_check_branch
          %463 = sbr.rel (%p461) target = $region44
        $region43: #{tpu_custom_call.1} parent=11 // pred_region
          %s465 = ssub.s32 24576, 24576
          %466 = vsyncadd [#allocation13], %s465
          %s467 = sshll.u32 [#allocation14], 4
          %s468 = int_to_ptr.vmem [resolvable:$true] %s467
          %473 = dma.hbm_to_vmem [thread:$0]  %s9, 24576, %s468, [#allocation13], 128, 128, 8
        $region44: #{tpu_custom_call.1} parent=11 // pred_fallthru
          _
        // Predicated region
        $region45: #{tpu_custom_call.1} parent=11 // pred_check
          %p474 = pneg %p275
        $region46: #{tpu_custom_call.1} parent=11 // pred_check_branch
          %476 = sbr.rel (%p474) target = $region48
        $region47: #{tpu_custom_call.1} parent=11 // pred_region
          _
        $region48: #{tpu_custom_call.1} parent=11 // pred_fallthru
          _
        // Predicated region
        $region49: #{tpu_custom_call.1} parent=11 // pred_check
          %p477 = pneg %p296
        $region50: #{tpu_custom_call.1} parent=11 // pred_check_branch
          %479 = sbr.rel (%p477) target = $region52
        $region51: #{tpu_custom_call.1} parent=11 // pred_region
          %s481 = ssub.s32 2048, 2048
          %482 = vsyncadd [#allocation16], %s481
          %s483 = sshll.u32 [#allocation15], 4
          %s484 = int_to_ptr.vmem [resolvable:$true] %s483
          %489 = dma.hbm_to_vmem [thread:$0]  %s11, 2048, %s484, [#allocation16], 128, 128, 8
        $region52: #{tpu_custom_call.1} parent=11 // pred_fallthru
          _
        // Predicated region
        $region53: #{tpu_custom_call.1} parent=11 // pred_check
          %p490 = pneg %p317
        $region54: #{tpu_custom_call.1} parent=11 // pred_check_branch
          %492 = sbr.rel (%p490) target = $region56
        $region55: #{tpu_custom_call.1} parent=11 // pred_region
          _
        $region56: #{tpu_custom_call.1} parent=11 // pred_fallthru
          _
        // Predicated region
        $region57: #{tpu_custom_call.1} parent=11 // pred_check
          %p493 = pneg %p338
        $region58: #{tpu_custom_call.1} parent=11 // pred_check_branch
          %495 = sbr.rel (%p493) target = $region60
        $region59: #{tpu_custom_call.1} parent=11 // pred_region
          %s497 = ssub.s32 2048, 2048
          %498 = vsyncadd [#allocation16], %s497
          %s499 = sshll.u32 [#allocation17], 4
          %s500 = int_to_ptr.vmem [resolvable:$true] %s499
          %505 = dma.hbm_to_vmem [thread:$0]  %s13, 2048, %s500, [#allocation16], 128, 128, 8
        $region60: #{tpu_custom_call.1} parent=11 // pred_fallthru
          _
        // Predicated region
        $region61: #{tpu_custom_call.1} parent=11 // pred_check
          %p506 = pneg %p359
        $region62: #{tpu_custom_call.1} parent=11 // pred_check_branch
          %508 = sbr.rel (%p506) target = $region64
        $region63: #{tpu_custom_call.1} parent=11 // pred_region
          _
        $region64: #{tpu_custom_call.1} parent=11 // pred_fallthru
          _
      $region12: #{tpu_custom_call.1} parent=5 // pred_fallthru
        _
      %p509 = scmp.lt.s32.totalorder %s34, 4
      // Predicated region
      $region65: #{tpu_custom_call.1} parent=5 // pred_check
        %p510 = pneg %p509
      $region66: #{tpu_custom_call.1} parent=5 // pred_check_branch
        %512 = sbr.rel (%p510) target = $region68
      $region67: #{tpu_custom_call.1} parent=5 // pred_region
        // Predicated region
        $region69: #{tpu_custom_call.1} parent=67 // pred_check
          %p513 = pneg %p54
        $region70: #{tpu_custom_call.1} parent=67 // pred_check_branch
          %515 = sbr.rel (%p513) target = $region72
        $region71: #{tpu_custom_call.1} parent=67 // pred_region
          %s516 = sand.u32 %s44, 1
          %s517 = scalar_lea.sflag [#allocation4], %s516
          %s518 = sand.u32 %s44, 1
          %s519 = smul.addr %s518, 16
          %s520 = scalar_lea.vmem [#allocation3], %s519
          %s522 = ssub.s32 256, 256
          %523 = vsyncadd %s517, %s522
          %s524 = smul.addr %s34, 2
          %s525 = smul.addr %s524, 128
          %s526 = scalar_lea.hbm %s0, %s525
          %s527 = sshll.u32 %s520, 4
          %s528 = int_to_ptr.vmem [resolvable:$true] %s527
          %533 = dma.hbm_to_vmem [thread:$0]  %s526, 256, %s528, %s517, 128, 128, 8
        $region72: #{tpu_custom_call.1} parent=67 // pred_fallthru
          _
        // Predicated region
        $region73: #{tpu_custom_call.1} parent=67 // pred_check
          %p534 = pneg %p80
        $region74: #{tpu_custom_call.1} parent=67 // pred_check_branch
          %536 = sbr.rel (%p534) target = $region76
        $region75: #{tpu_custom_call.1} parent=67 // pred_region
          %s537 = sand.u32 %s34, 1
          %s538 = scalar_lea.sflag [#allocation7], %s537
          %s539 = sand.u32 %s70, 1
          %s540 = smul.addr %s539, 8
          %s541 = scalar_lea.vmem [#allocation6], %s540
          %s543 = ssub.s32 128, 128
          %544 = vsyncadd %s538, %s543
          %s545 = smul.addr %s34, 2
          %s546 = smul.addr %s545, 64
          %s547 = scalar_lea.hbm %s1, %s546
          %s548 = sshll.u32 %s541, 4
          %s549 = int_to_ptr.vmem [resolvable:$true] %s548
          %554 = dma.hbm_to_vmem [thread:$0]  %s547, 128, %s549, %s538, 64, 64, 4
        $region76: #{tpu_custom_call.1} parent=67 // pred_fallthru
          _
      $region68: #{tpu_custom_call.1} parent=5 // pred_fallthru
        _
      %p555 = scmp.le.s32.totalorder 1, %s34
      %p556 = scmp.lt.s32.totalorder %s34, 5
      %p557 = pnand %p555, %p556
      %p558 = pneg %p557
      // Predicated region
      $region77: #{tpu_custom_call.1} parent=5 // pred_check
        _
      $region78: #{tpu_custom_call.1} parent=5 // pred_check_branch
        %560 = sbr.rel (%p557) target = $region80
      $region79: #{tpu_custom_call.1} parent=5 // pred_region
        %s561 = ssub.s32 %s34, 1
        %s562 = sand.u32 %s47, 1
        %s563 = scalar_lea.sflag [#allocation4], %s562
        %s564 = sand.u32 %s47, 1
        %s565 = smul.addr %s564, 16
        %s566 = scalar_lea.vmem [#allocation3], %s565
        // Predicated region
        $region81: #{tpu_custom_call.1} parent=79 // pred_check
          %p567 = pneg %p60
        $region82: #{tpu_custom_call.1} parent=79 // pred_check_branch
          %569 = sbr.rel (%p567) target = $region84
        $region83: #{tpu_custom_call.1} parent=79 // pred_region
          %570 = dma.done %s563, 256
        $region84: #{tpu_custom_call.1} parent=79 // pred_fallthru
          _
        %s571 = sand.u32 %s39, 1
        %s572 = scalar_lea.sflag [#allocation7], %s571
        %s573 = sand.u32 %s73, 1
        %s574 = smul.addr %s573, 8
        %s575 = scalar_lea.vmem [#allocation6], %s574
        // Predicated region
        $region85: #{tpu_custom_call.1} parent=79 // pred_check
          %p576 = pneg %p86
        $region86: #{tpu_custom_call.1} parent=79 // pred_check_branch
          %578 = sbr.rel (%p576) target = $region88
        $region87: #{tpu_custom_call.1} parent=79 // pred_region
          %579 = dma.done %s572, 128
        $region88: #{tpu_custom_call.1} parent=79 // pred_fallthru
          _
        // Predicated region
        $region89: #{tpu_custom_call.1} parent=79 // pred_check
          %p580 = pneg %p107
        $region90: #{tpu_custom_call.1} parent=79 // pred_check_branch
          %582 = sbr.rel (%p580) target = $region92
        $region91: #{tpu_custom_call.1} parent=79 // pred_region
          %583 = dma.done [#allocation7], 1024
        $region92: #{tpu_custom_call.1} parent=79 // pred_fallthru
          _
        // Predicated region
        $region93: #{tpu_custom_call.1} parent=79 // pred_check
          %p584 = pneg %p149
        $region94: #{tpu_custom_call.1} parent=79 // pred_check_branch
          %586 = sbr.rel (%p584) target = $region96
        $region95: #{tpu_custom_call.1} parent=79 // pred_region
          %587 = dma.done [#allocation10], 1024
        $region96: #{tpu_custom_call.1} parent=79 // pred_fallthru
          _
        // Predicated region
        $region97: #{tpu_custom_call.1} parent=79 // pred_check
          %p588 = pneg %p170
        $region98: #{tpu_custom_call.1} parent=79 // pred_check_branch
          %590 = sbr.rel (%p588) target = $region100
        $region99: #{tpu_custom_call.1} parent=79 // pred_region
          %591 = dma.done [#allocation10], 1024
        $region100: #{tpu_custom_call.1} parent=79 // pred_fallthru
          _
        // Predicated region
        $region101: #{tpu_custom_call.1} parent=79 // pred_check
          %p592 = pneg %p212
        $region102: #{tpu_custom_call.1} parent=79 // pred_check_branch
          %594 = sbr.rel (%p592) target = $region104
        $region103: #{tpu_custom_call.1} parent=79 // pred_region
          %595 = dma.done [#allocation13], 1024
        $region104: #{tpu_custom_call.1} parent=79 // pred_fallthru
          _
        // Predicated region
        $region105: #{tpu_custom_call.1} parent=79 // pred_check
          %p596 = pneg %p254
        $region106: #{tpu_custom_call.1} parent=79 // pred_check_branch
          %598 = sbr.rel (%p596) target = $region108
        $region107: #{tpu_custom_call.1} parent=79 // pred_region
          %599 = dma.done [#allocation13], 24576
        $region108: #{tpu_custom_call.1} parent=79 // pred_fallthru
          _
        // Predicated region
        $region109: #{tpu_custom_call.1} parent=79 // pred_check
          %p600 = pneg %p296
        $region110: #{tpu_custom_call.1} parent=79 // pred_check_branch
          %602 = sbr.rel (%p600) target = $region112
        $region111: #{tpu_custom_call.1} parent=79 // pred_region
          %603 = dma.done [#allocation16], 2048
        $region112: #{tpu_custom_call.1} parent=79 // pred_fallthru
          _
        // Predicated region
        $region113: #{tpu_custom_call.1} parent=79 // pred_check
          %p604 = pneg %p338
        $region114: #{tpu_custom_call.1} parent=79 // pred_check_branch
          %606 = sbr.rel (%p604) target = $region116
        $region115: #{tpu_custom_call.1} parent=79 // pred_region
          %607 = dma.done [#allocation16], 2048
        $region116: #{tpu_custom_call.1} parent=79 // pred_fallthru
          _
        %s608 = sand.u32 %s47, 1
        %s609 = scalar_lea.sflag [#allocation4], %s608
        %s610 = sand.u32 %s47, 1
        %s611 = smul.addr %s610, 16
        %s612 = scalar_lea.vmem [#allocation3], %s611
        %p613 = pneg %p60
        %p614 = pneg %p57
        %s615 = sand.u32 %s39, 1
        %s616 = scalar_lea.sflag [#allocation7], %s615
        %s617 = sand.u32 %s73, 1
        %s618 = smul.addr %s617, 8
        %s619 = scalar_lea.vmem [#allocation6], %s618
        %p620 = pneg %p86
        %p621 = pneg %p83
        %p622 = pneg %p107
        %p623 = pneg %p104
        %p624 = pneg %p128
        %p625 = pneg %p125
        %p626 = pneg %p149
        %p627 = pneg %p146
        %p628 = pneg %p170
        %p629 = pneg %p167
        %p630 = pneg %p191
        %p631 = pneg %p188
        %p632 = pneg %p212
        %p633 = pneg %p209
        %p634 = pneg %p233
        %p635 = pneg %p230
        %p636 = pneg %p254
        %p637 = pneg %p251
        %p638 = pneg %p275
        %p639 = pneg %p272
        %p640 = pneg %p296
        %p641 = pneg %p293
        %p642 = pneg %p317
        %p643 = pneg %p314
        %p644 = pneg %p338
        %p645 = pneg %p335
        %p646 = pneg %p359
        %p647 = pneg %p356
        %p648 = pneg %p385
        %p649 = pneg %p382
        %s650 = sand.u32 %s372, 1
        %s651 = scalar_lea.sflag [#allocation5], %s650
        %s652 = sand.u32 %s372, 1
        %s653 = smul.addr %s652, 8
        %s654 = scalar_lea.vmem [#allocation18], %s653
        %v656 = vld [vmem:[%s566] sm:$0xff]
        %v657 = vld [vmem:[%s566 + $0x8] sm:$0xff]
        %v658 = vadd.f32 %v656, %v657
        %v659 = vrot.slane %v658, 4
        %v660 = vadd.f32 %v658, %v659
        %v661 = vrot.slane %v660, 2
        %v662 = vadd.f32 %v660, %v661
        %v663 = vrot.slane %v662, 1
        %v664 = vadd.f32 %v662, %v663
        %v665 = vmul.f32 %v664, 0.0625
        %v666 = vmul.f32 %v656, %v656
        %v667 = vmul.f32 %v657, %v657
        %v668 = vadd.f32 %v666, %v667
        %v669 = vrot.slane %v668, 4
        %v670 = vadd.f32 %v668, %v669
        %v671 = vrot.slane %v670, 2
        %v672 = vadd.f32 %v670, %v671
        %v673 = vrot.slane %v672, 1
        %v674 = vadd.f32 %v672, %v673
        %v675 = vmul.f32 %v674, 0.0625
        %v676 = vmul.f32 %v665, %v665
        %v677 = vsub.f32 %v675, %v676
        %v678 = vmax.f32 %v677, 1e-05
        %v679 = vrsqrt.pop %v678
        %v680 = vmul.f32 %v678, %v679
        %vm681 = vcmp.eq.f32.partialorder %v678, inf
        %v682 = vsel %vm681, %v678, %v680
        %vm683 = vcmp.eq.f32.partialorder %v678, 0.0
        %v684 = vand.u32 %v678, 2147483648
        %v685 = vsel %vm683, %v684, %v682
        %vm686 = vcmp.le.f32.partialorder %v685, 0.0031622776
        %v687 = vsel %vm686, 0.0, %v685
        %v688 = vmin.f32 %v656, %v657
        %v689 = vrot.slane %v688, 4
        %v690 = vmin.f32 %v688, %v689
        %v691 = vrot.slane %v690, 2
        %v692 = vmin.f32 %v690, %v691
        %v693 = vrot.slane %v692, 1
        %v694 = vmin.f32 %v692, %v693
        %v695 = vmax.f32 %v656, %v657
        %v696 = vrot.slane %v695, 4
        %v697 = vmax.f32 %v695, %v696
        %v698 = vrot.slane %v697, 2
        %v699 = vmax.f32 %v697, %v698
        %v700 = vrot.slane %v699, 1
        %v701 = vmax.f32 %v699, %v700
        %vm702 = vcmp.ne.f32.partialorder %v664, %v664
        %vm703 = vcmp.ne.f32.partialorder %v665, %v665
        %vm704 = vcmp.ne.f32.partialorder %v687, %v687
        %vm705 = vcmp.ne.f32.partialorder %v694, %v694
        %vm706 = vcmp.ne.f32.partialorder %v701, %v701
        %v707 = vand.u32 2147483647, %v664
        %v708 = vand.u32 2147483647, %v665
        %v709 = vand.u32 2147483647, %v687
        %v710 = vand.u32 2147483647, %v694
        %v711 = vand.u32 2147483647, %v701
        %vm712 = vcmp.eq.f32.partialorder %v707, inf
        %vm713 = vcmp.eq.f32.partialorder %v708, inf
        %vm714 = vcmp.eq.f32.partialorder %v709, inf
        %vm715 = vcmp.eq.f32.partialorder %v710, inf
        %vm716 = vcmp.eq.f32.partialorder %v711, inf
        %vm717 = vmor %vm702, %vm712
        %vm718 = vmor %vm703, %vm713
        %vm719 = vmor %vm704, %vm714
        %vm720 = vmor %vm705, %vm715
        %vm721 = vmor %vm706, %vm716
        %v722 = vsel %vm717, 1.0, %v664
        %v723 = vsel %vm718, 1.0, %v665
        %v724 = vsel %vm719, 1.0, %v687
        %v725 = vsel %vm720, 1.0, %v694
        %v726 = vsel %vm721, 1.0, %v701
        %v727 = vld [vmem:[%s575] sm:$0xf]
        %v728 = vld [vmem:[%s575 + $0x4] sm:$0xf]
        %v729 = vld [vmem:[#allocation8] sm:$0xf]
        %v730 = vld [vmem:[#allocation8 + $0x4] sm:$0xf]
        %v731 = vld [vmem:[#allocation8 + $0x8] sm:$0xf]
        %v732 = vld [vmem:[#allocation8 + $0xc] sm:$0xf]
        %v733 = vld [vmem:[#allocation8 + $0x10] sm:$0xf]
        %v734 = vld [vmem:[#allocation8 + $0x14] sm:$0xf]
        %v735 = vld [vmem:[#allocation8 + $0x18] sm:$0xf]
        %v736 = vld [vmem:[#allocation8 + $0x1c] sm:$0xf]
        %v737 = vld [vmem:[#allocation8 + $0x20] sm:$0xf]
        %v738 = vld [vmem:[#allocation8 + $0x24] sm:$0xf]
        %v739 = vld [vmem:[#allocation8 + $0x28] sm:$0xf]
        %v740 = vld [vmem:[#allocation8 + $0x2c] sm:$0xf]
        %v741 = vld [vmem:[#allocation8 + $0x30] sm:$0xf]
        %v742 = vld [vmem:[#allocation8 + $0x34] sm:$0xf]
        %v743 = vld [vmem:[#allocation8 + $0x38] sm:$0xf]
        %v744 = vld [vmem:[#allocation8 + $0x3c] sm:$0xf]
        %v745 = vld [vmem:[%s3] sm:$0x1]
        %v746 = vld [vmem:[#allocation9] sm:$0xf]
        %v747 = vld [vmem:[#allocation9 + $0x4] sm:$0xf]
        %v748 = vld [vmem:[#allocation9 + $0x8] sm:$0xf]
        %v749 = vld [vmem:[#allocation9 + $0xc] sm:$0xf]
        %v750 = vld [vmem:[#allocation9 + $0x10] sm:$0xf]
        %v751 = vld [vmem:[#allocation9 + $0x14] sm:$0xf]
        %v752 = vld [vmem:[#allocation9 + $0x18] sm:$0xf]
        %v753 = vld [vmem:[#allocation9 + $0x1c] sm:$0xf]
        %v754 = vld [vmem:[#allocation9 + $0x20] sm:$0xf]
        %v755 = vld [vmem:[#allocation9 + $0x24] sm:$0xf]
        %v756 = vld [vmem:[#allocation9 + $0x28] sm:$0xf]
        %v757 = vld [vmem:[#allocation9 + $0x2c] sm:$0xf]
        %v758 = vld [vmem:[#allocation9 + $0x30] sm:$0xf]
        %v759 = vld [vmem:[#allocation9 + $0x34] sm:$0xf]
        %v760 = vld [vmem:[#allocation9 + $0x38] sm:$0xf]
        %v761 = vld [vmem:[#allocation9 + $0x3c] sm:$0xf]
        %v762 = vpack.c.bf16 %v657, %v656
        %v765 = vunpack.c.l.b16 %v727
        %v766 = vunpack.c.l.b16 %v728
        %v767 = vpack.c.b16 %v766, %v765
        %vm768 = vcmask 130048
        %v770 = vsel %vm768, %v767, 0
        %772 = vmatprep.subr.bf16.mxu0 0
        %773 = vmatpush1.bf16.msra.mxu0 %v762
        %774 = vmatprep.subr.bf16.mxu0 0
        %775 = vmatpush1.bf16.msra.mxu0 0
        %776 = vmatprep.subr.bf16.mxu0 0
        %777 = vmatpush1.bf16.msra.mxu0 0
        %778 = vmatprep.subr.bf16.mxu0 0
        %779 = vmatpush1.bf16.msra.mxu0 0
        %780 = vmatprep.subr.bf16.mxu0 0
        %781 = vmatpush1.bf16.msra.mxu0 0
        %782 = vmatprep.subr.bf16.mxu0 0
        %783 = vmatpush1.bf16.msra.mxu0 0
        %784 = vmatprep.subr.bf16.mxu0 0
        %785 = vmatpush1.bf16.msra.mxu0 0
        %786 = vmatprep.subr.bf16.mxu0 0
        %787 = vmatpush1.bf16.msra.mxu0 0
        %788 = vmatprep.subr.bf16.mxu0 0
        %789 = vmatpush1.bf16.msra.mxu0 0
        %790 = vmatprep.subr.bf16.mxu0 0
        %791 = vmatpush1.bf16.msra.mxu0 0
        %792 = vmatprep.subr.bf16.mxu0 0
        %793 = vmatpush1.bf16.msra.mxu0 0
        %794 = vmatprep.subr.bf16.mxu0 0
        %795 = vmatpush1.bf16.msra.mxu0 0
        %796 = vmatprep.subr.bf16.mxu0 0
        %797 = vmatpush1.bf16.msra.mxu0 0
        %798 = vmatprep.subr.bf16.mxu0 0
        %799 = vmatpush1.bf16.msra.mxu0 0
        %800 = vmatprep.subr.bf16.mxu0 0
        %801 = vmatpush1.bf16.msra.mxu0 0
        %802 = vmatprep.subr.bf16.mxu0 0
        %803 = vmatpush1.bf16.msra.mxu0 0
        %804 = vmatprep.mubr.bf16.mxu0 0
        %805 = vmatmul.mubr.bf16.gmra.mrb[0].mxu0 %v770
        %v806 = vpop.f32.mrb[0].mxu0
        %v807 = vadd.f32 0.0, %v806
        %v808 = vpop.f32.mrb[0].mxu0
        %v809 = vpop.f32.mrb[0].mxu0
        %v810 = vadd.f32 0.0, %v809
        %v811 = vpop.f32.mrb[0].mxu0
        %812 = vdwg.mxu0
        %v813 = vpack.c.bf16 %v810, %v807
        %v815 = vlaneseq
        %v816 = vshrl.u32 %v815, 7
        %v817 = vsub.s32 0, %v816
        %v818 = vrot.slane %v745, %v817
        %v836 = vunpack.c.l.b16 %v729
        %v837 = vunpack.c.l.b16 %v730
        %v838 = vunpack.c.l.b16 %v731
        %v839 = vunpack.c.l.b16 %v732
        %v840 = vunpack.c.l.b16 %v733
        %v841 = vunpack.c.l.b16 %v734
        %v842 = vunpack.c.l.b16 %v735
        %v843 = vunpack.c.l.b16 %v736
        %v844 = vunpack.c.l.b16 %v737
        %v845 = vunpack.c.l.b16 %v738
        %v846 = vunpack.c.l.b16 %v739
        %v847 = vunpack.c.l.b16 %v740
        %v848 = vunpack.c.l.b16 %v741
        %v849 = vunpack.c.l.b16 %v742
        %v850 = vunpack.c.l.b16 %v743
        %v851 = vunpack.c.l.b16 %v744
        %v852 = vpack.c.b16 %v837, %v836
        %v853 = vpack.c.b16 %v839, %v838
        %v854 = vpack.c.b16 %v841, %v840
        %v855 = vpack.c.b16 %v843, %v842
        %v856 = vpack.c.b16 %v845, %v844
        %v857 = vpack.c.b16 %v847, %v846
        %v858 = vpack.c.b16 %v849, %v848
        %v859 = vpack.c.b16 %v851, %v850
        %868 = vmatprep.subr.bf16.mxu0 0
        %869 = vmatpush1.bf16.msra.mxu0 %v852
        %870 = vmatprep.subr.bf16.mxu0 0
        %871 = vmatpush1.bf16.msra.mxu0 %v853
        %872 = vmatprep.subr.bf16.mxu0 0
        %873 = vmatpush1.bf16.msra.mxu0 %v854
        %874 = vmatprep.subr.bf16.mxu0 0
        %875 = vmatpush1.bf16.msra.mxu0 %v855
        %876 = vmatprep.subr.bf16.mxu0 0
        %877 = vmatpush1.bf16.msra.mxu0 %v856
        %878 = vmatprep.subr.bf16.mxu0 0
        %879 = vmatpush1.bf16.msra.mxu0 %v857
        %880 = vmatprep.subr.bf16.mxu0 0
        %881 = vmatpush1.bf16.msra.mxu0 %v858
        %882 = vmatprep.subr.bf16.mxu0 0
        %883 = vmatpush1.bf16.msra.mxu0 %v859
        %884 = vmatprep.subr.bf16.mxu0 0
        %885 = vmatpush1.bf16.msra.mxu0 0
        %886 = vmatprep.subr.bf16.mxu0 0
        %887 = vmatpush1.bf16.msra.mxu0 0
        %888 = vmatprep.subr.bf16.mxu0 0
        %889 = vmatpush1.bf16.msra.mxu0 0
        %890 = vmatprep.subr.bf16.mxu0 0
        %891 = vmatpush1.bf16.msra.mxu0 0
        %892 = vmatprep.subr.bf16.mxu0 0
        %893 = vmatpush1.bf16.msra.mxu0 0
        %894 = vmatprep.subr.bf16.mxu0 0
        %895 = vmatpush1.bf16.msra.mxu0 0
        %896 = vmatprep.subr.bf16.mxu0 0
        %897 = vmatpush1.bf16.msra.mxu0 0
        %898 = vmatprep.subr.bf16.mxu0 0
        %899 = vmatpush1.bf16.msra.mxu0 0
        %900 = vmatprep.mubr.bf16.mxu0 0
        %901 = vmatmul.mubr.bf16.gmra.mrb[0].mxu0 %v813
        %v902 = vpop.f32.mrb[0].mxu0
        %v903 = vadd.f32 %v818, %v902
        %v904 = vpop.f32.mrb[0].mxu0
        %v905 = vpop.f32.mrb[0].mxu0
        %v906 = vadd.f32 %v818, %v905
        %v907 = vpop.f32.mrb[0].mxu0
        %908 = vdwg.mxu0
        %v925 = vunpack.c.l.b16 %v746
        %v926 = vunpack.c.l.b16 %v747
        %v927 = vunpack.c.l.b16 %v748
        %v928 = vunpack.c.l.b16 %v749
        %v929 = vunpack.c.l.b16 %v750
        %v930 = vunpack.c.l.b16 %v751
        %v931 = vunpack.c.l.b16 %v752
        %v932 = vunpack.c.l.b16 %v753
        %v933 = vunpack.c.l.b16 %v754
        %v934 = vunpack.c.l.b16 %v755
        %v935 = vunpack.c.l.b16 %v756
        %v936 = vunpack.c.l.b16 %v757
        %v937 = vunpack.c.l.b16 %v758
        %v938 = vunpack.c.l.b16 %v759
        %v939 = vunpack.c.l.b16 %v760
        %v940 = vunpack.c.l.b16 %v761
        %v941 = vpack.c.b16 %v926, %v925
        %v942 = vpack.c.b16 %v928, %v927
        %v943 = vpack.c.b16 %v930, %v929
        %v944 = vpack.c.b16 %v932, %v931
        %v945 = vpack.c.b16 %v934, %v933
        %v946 = vpack.c.b16 %v936, %v935
        %v947 = vpack.c.b16 %v938, %v937
        %v948 = vpack.c.b16 %v940, %v939
        %957 = vmatprep.subr.bf16.mxu0 0
        %958 = vmatpush1.bf16.msra.mxu0 %v941
        %959 = vmatprep.subr.bf16.mxu0 0
        %960 = vmatpush1.bf16.msra.mxu0 %v942
        %961 = vmatprep.subr.bf16.mxu0 0
        %962 = vmatpush1.bf16.msra.mxu0 %v943
        %963 = vmatprep.subr.bf16.mxu0 0
        %964 = vmatpush1.bf16.msra.mxu0 %v944
        %965 = vmatprep.subr.bf16.mxu0 0
        %966 = vmatpush1.bf16.msra.mxu0 %v945
        %967 = vmatprep.subr.bf16.mxu0 0
        %968 = vmatpush1.bf16.msra.mxu0 %v946
        %969 = vmatprep.subr.bf16.mxu0 0
        %970 = vmatpush1.bf16.msra.mxu0 %v947
        %971 = vmatprep.subr.bf16.mxu0 0
        %972 = vmatpush1.bf16.msra.mxu0 %v948
        %973 = vmatprep.subr.bf16.mxu0 0
        %974 = vmatpush1.bf16.msra.mxu0 0
        %975 = vmatprep.subr.bf16.mxu0 0
        %976 = vmatpush1.bf16.msra.mxu0 0
        %977 = vmatprep.subr.bf16.mxu0 0
        %978 = vmatpush1.bf16.msra.mxu0 0
        %979 = vmatprep.subr.bf16.mxu0 0
        %980 = vmatpush1.bf16.msra.mxu0 0
        %981 = vmatprep.subr.bf16.mxu0 0
        %982 = vmatpush1.bf16.msra.mxu0 0
        %983 = vmatprep.subr.bf16.mxu0 0
        %984 = vmatpush1.bf16.msra.mxu0 0
        %985 = vmatprep.subr.bf16.mxu0 0
        %986 = vmatpush1.bf16.msra.mxu0 0
        %987 = vmatprep.subr.bf16.mxu0 0
        %988 = vmatpush1.bf16.msra.mxu0 0
        %989 = vmatprep.mubr.bf16.mxu0 0
        %990 = vmatmul.mubr.bf16.gmra.mrb[0].mxu0 %v762
        %v991 = vpop.f32.mrb[0].mxu0
        %v992 = vadd.f32 0.0, %v991
        %v993 = vpop.f32.mrb[0].mxu0
        %v994 = vpop.f32.mrb[0].mxu0
        %v995 = vadd.f32 0.0, %v994
        %v996 = vpop.f32.mrb[0].mxu0
        %997 = vdwg.mxu0
        %v998 = vadd.f32 %v903, %v992
        %v999 = vadd.f32 %v906, %v995
        %v1000 = vmax.f32 %v998, 0.0
        %v1001 = vmax.f32 %v999, 0.0
        %v1002 = vld [vmem:[#allocation11] sm:$0xf]
        %v1003 = vld [vmem:[#allocation11 + $0x4] sm:$0xf]
        %v1004 = vld [vmem:[#allocation11 + $0x8] sm:$0xf]
        %v1005 = vld [vmem:[#allocation11 + $0xc] sm:$0xf]
        %v1006 = vld [vmem:[#allocation11 + $0x10] sm:$0xf]
        %v1007 = vld [vmem:[#allocation11 + $0x14] sm:$0xf]
        %v1008 = vld [vmem:[#allocation11 + $0x18] sm:$0xf]
        %v1009 = vld [vmem:[#allocation11 + $0x1c] sm:$0xf]
        %v1010 = vld [vmem:[#allocation11 + $0x20] sm:$0xf]
        %v1011 = vld [vmem:[#allocation11 + $0x24] sm:$0xf]
        %v1012 = vld [vmem:[#allocation11 + $0x28] sm:$0xf]
        %v1013 = vld [vmem:[#allocation11 + $0x2c] sm:$0xf]
        %v1014 = vld [vmem:[#allocation11 + $0x30] sm:$0xf]
        %v1015 = vld [vmem:[#allocation11 + $0x34] sm:$0xf]
        %v1016 = vld [vmem:[#allocation11 + $0x38] sm:$0xf]
        %v1017 = vld [vmem:[#allocation11 + $0x3c] sm:$0xf]
        %v1018 = vld [vmem:[%s6] sm:$0x1]
        %v1019 = vld [vmem:[#allocation12] sm:$0xf]
        %v1020 = vld [vmem:[#allocation12 + $0x4] sm:$0xf]
        %v1021 = vld [vmem:[#allocation12 + $0x8] sm:$0xf]
        %v1022 = vld [vmem:[#allocation12 + $0xc] sm:$0xf]
        %v1023 = vld [vmem:[#allocation12 + $0x10] sm:$0xf]
        %v1024 = vld [vmem:[#allocation12 + $0x14] sm:$0xf]
        %v1025 = vld [vmem:[#allocation12 + $0x18] sm:$0xf]
        %v1026 = vld [vmem:[#allocation12 + $0x1c] sm:$0xf]
        %v1027 = vld [vmem:[#allocation12 + $0x20] sm:$0xf]
        %v1028 = vld [vmem:[#allocation12 + $0x24] sm:$0xf]
        %v1029 = vld [vmem:[#allocation12 + $0x28] sm:$0xf]
        %v1030 = vld [vmem:[#allocation12 + $0x2c] sm:$0xf]
        %v1031 = vld [vmem:[#allocation12 + $0x30] sm:$0xf]
        %v1032 = vld [vmem:[#allocation12 + $0x34] sm:$0xf]
        %v1033 = vld [vmem:[#allocation12 + $0x38] sm:$0xf]
        %v1034 = vld [vmem:[#allocation12 + $0x3c] sm:$0xf]
        %v1035 = vpack.c.bf16 %v1001, %v1000
        %1036 = vmatprep.subr.bf16.mxu0 0
        %1037 = vmatpush1.bf16.msra.mxu0 %v1035
        %1038 = vmatprep.subr.bf16.mxu0 0
        %1039 = vmatpush1.bf16.msra.mxu0 0
        %1040 = vmatprep.subr.bf16.mxu0 0
        %1041 = vmatpush1.bf16.msra.mxu0 0
        %1042 = vmatprep.subr.bf16.mxu0 0
        %1043 = vmatpush1.bf16.msra.mxu0 0
        %1044 = vmatprep.subr.bf16.mxu0 0
        %1045 = vmatpush1.bf16.msra.mxu0 0
        %1046 = vmatprep.subr.bf16.mxu0 0
        %1047 = vmatpush1.bf16.msra.mxu0 0
        %1048 = vmatprep.subr.bf16.mxu0 0
        %1049 = vmatpush1.bf16.msra.mxu0 0
        %1050 = vmatprep.subr.bf16.mxu0 0
        %1051 = vmatpush1.bf16.msra.mxu0 0
        %1052 = vmatprep.subr.bf16.mxu0 0
        %1053 = vmatpush1.bf16.msra.mxu0 0
        %1054 = vmatprep.subr.bf16.mxu0 0
        %1055 = vmatpush1.bf16.msra.mxu0 0
        %1056 = vmatprep.subr.bf16.mxu0 0
        %1057 = vmatpush1.bf16.msra.mxu0 0
        %1058 = vmatprep.subr.bf16.mxu0 0
        %1059 = vmatpush1.bf16.msra.mxu0 0
        %1060 = vmatprep.subr.bf16.mxu0 0
        %1061 = vmatpush1.bf16.msra.mxu0 0
        %1062 = vmatprep.subr.bf16.mxu0 0
        %1063 = vmatpush1.bf16.msra.mxu0 0
        %1064 = vmatprep.subr.bf16.mxu0 0
        %1065 = vmatpush1.bf16.msra.mxu0 0
        %1066 = vmatprep.subr.bf16.mxu0 0
        %1067 = vmatpush1.bf16.msra.mxu0 0
        %1068 = vmatprep.mubr.bf16.mxu0 0
        %1069 = vmatmul.mubr.bf16.gmra.mrb[0].mxu0 %v770
        %v1070 = vpop.f32.mrb[0].mxu0
        %v1071 = vadd.f32 0.0, %v1070
        %v1072 = vpop.f32.mrb[0].mxu0
        %v1073 = vpop.f32.mrb[0].mxu0
        %v1074 = vadd.f32 0.0, %v1073
        %v1075 = vpop.f32.mrb[0].mxu0
        %1076 = vdwg.mxu0
        %v1077 = vpack.c.bf16 %v1074, %v1071
        %v1079 = vlaneseq
        %v1080 = vshrl.u32 %v1079, 7
        %v1081 = vsub.s32 0, %v1080
        %v1082 = vrot.slane %v1018, %v1081
        %v1100 = vunpack.c.l.b16 %v1002
        %v1101 = vunpack.c.l.b16 %v1003
        %v1102 = vunpack.c.l.b16 %v1004
        %v1103 = vunpack.c.l.b16 %v1005
        %v1104 = vunpack.c.l.b16 %v1006
        %v1105 = vunpack.c.l.b16 %v1007
        %v1106 = vunpack.c.l.b16 %v1008
        %v1107 = vunpack.c.l.b16 %v1009
        %v1108 = vunpack.c.l.b16 %v1010
        %v1109 = vunpack.c.l.b16 %v1011
        %v1110 = vunpack.c.l.b16 %v1012
        %v1111 = vunpack.c.l.b16 %v1013
        %v1112 = vunpack.c.l.b16 %v1014
        %v1113 = vunpack.c.l.b16 %v1015
        %v1114 = vunpack.c.l.b16 %v1016
        %v1115 = vunpack.c.l.b16 %v1017
        %v1116 = vpack.c.b16 %v1101, %v1100
        %v1117 = vpack.c.b16 %v1103, %v1102
        %v1118 = vpack.c.b16 %v1105, %v1104
        %v1119 = vpack.c.b16 %v1107, %v1106
        %v1120 = vpack.c.b16 %v1109, %v1108
        %v1121 = vpack.c.b16 %v1111, %v1110
        %v1122 = vpack.c.b16 %v1113, %v1112
        %v1123 = vpack.c.b16 %v1115, %v1114
        %1132 = vmatprep.subr.bf16.mxu0 0
        %1133 = vmatpush1.bf16.msra.mxu0 %v1116
        %1134 = vmatprep.subr.bf16.mxu0 0
        %1135 = vmatpush1.bf16.msra.mxu0 %v1117
        %1136 = vmatprep.subr.bf16.mxu0 0
        %1137 = vmatpush1.bf16.msra.mxu0 %v1118
        %1138 = vmatprep.subr.bf16.mxu0 0
        %1139 = vmatpush1.bf16.msra.mxu0 %v1119
        %1140 = vmatprep.subr.bf16.mxu0 0
        %1141 = vmatpush1.bf16.msra.mxu0 %v1120
        %1142 = vmatprep.subr.bf16.mxu0 0
        %1143 = vmatpush1.bf16.msra.mxu0 %v1121
        %1144 = vmatprep.subr.bf16.mxu0 0
        %1145 = vmatpush1.bf16.msra.mxu0 %v1122
        %1146 = vmatprep.subr.bf16.mxu0 0
        %1147 = vmatpush1.bf16.msra.mxu0 %v1123
        %1148 = vmatprep.subr.bf16.mxu0 0
        %1149 = vmatpush1.bf16.msra.mxu0 0
        %1150 = vmatprep.subr.bf16.mxu0 0
        %1151 = vmatpush1.bf16.msra.mxu0 0
        %1152 = vmatprep.subr.bf16.mxu0 0
        %1153 = vmatpush1.bf16.msra.mxu0 0
        %1154 = vmatprep.subr.bf16.mxu0 0
        %1155 = vmatpush1.bf16.msra.mxu0 0
        %1156 = vmatprep.subr.bf16.mxu0 0
        %1157 = vmatpush1.bf16.msra.mxu0 0
        %1158 = vmatprep.subr.bf16.mxu0 0
        %1159 = vmatpush1.bf16.msra.mxu0 0
        %1160 = vmatprep.subr.bf16.mxu0 0
        %1161 = vmatpush1.bf16.msra.mxu0 0
        %1162 = vmatprep.subr.bf16.mxu0 0
        %1163 = vmatpush1.bf16.msra.mxu0 0
        %1164 = vmatprep.mubr.bf16.mxu0 0
        %1165 = vmatmul.mubr.bf16.gmra.mrb[0].mxu0 %v1077
        %v1166 = vpop.f32.mrb[0].mxu0
        %v1167 = vadd.f32 %v1082, %v1166
        %v1168 = vpop.f32.mrb[0].mxu0
        %v1169 = vpop.f32.mrb[0].mxu0
        %v1170 = vadd.f32 %v1082, %v1169
        %v1171 = vpop.f32.mrb[0].mxu0
        %1172 = vdwg.mxu0
        %v1189 = vunpack.c.l.b16 %v1019
        %v1190 = vunpack.c.l.b16 %v1020
        %v1191 = vunpack.c.l.b16 %v1021
        %v1192 = vunpack.c.l.b16 %v1022
        %v1193 = vunpack.c.l.b16 %v1023
        %v1194 = vunpack.c.l.b16 %v1024
        %v1195 = vunpack.c.l.b16 %v1025
        %v1196 = vunpack.c.l.b16 %v1026
        %v1197 = vunpack.c.l.b16 %v1027
        %v1198 = vunpack.c.l.b16 %v1028
        %v1199 = vunpack.c.l.b16 %v1029
        %v1200 = vunpack.c.l.b16 %v1030
        %v1201 = vunpack.c.l.b16 %v1031
        %v1202 = vunpack.c.l.b16 %v1032
        %v1203 = vunpack.c.l.b16 %v1033
        %v1204 = vunpack.c.l.b16 %v1034
        %v1205 = vpack.c.b16 %v1190, %v1189
        %v1206 = vpack.c.b16 %v1192, %v1191
        %v1207 = vpack.c.b16 %v1194, %v1193
        %v1208 = vpack.c.b16 %v1196, %v1195
        %v1209 = vpack.c.b16 %v1198, %v1197
        %v1210 = vpack.c.b16 %v1200, %v1199
        %v1211 = vpack.c.b16 %v1202, %v1201
        %v1212 = vpack.c.b16 %v1204, %v1203
        %1221 = vmatprep.subr.bf16.mxu0 0
        %1222 = vmatpush1.bf16.msra.mxu0 %v1205
        %1223 = vmatprep.subr.bf16.mxu0 0
        %1224 = vmatpush1.bf16.msra.mxu0 %v1206
        %1225 = vmatprep.subr.bf16.mxu0 0
        %1226 = vmatpush1.bf16.msra.mxu0 %v1207
        %1227 = vmatprep.subr.bf16.mxu0 0
        %1228 = vmatpush1.bf16.msra.mxu0 %v1208
        %1229 = vmatprep.subr.bf16.mxu0 0
        %1230 = vmatpush1.bf16.msra.mxu0 %v1209
        %1231 = vmatprep.subr.bf16.mxu0 0
        %1232 = vmatpush1.bf16.msra.mxu0 %v1210
        %1233 = vmatprep.subr.bf16.mxu0 0
        %1234 = vmatpush1.bf16.msra.mxu0 %v1211
        %1235 = vmatprep.subr.bf16.mxu0 0
        %1236 = vmatpush1.bf16.msra.mxu0 %v1212
        %1237 = vmatprep.subr.bf16.mxu0 0
        %1238 = vmatpush1.bf16.msra.mxu0 0
        %1239 = vmatprep.subr.bf16.mxu0 0
        %1240 = vmatpush1.bf16.msra.mxu0 0
        %1241 = vmatprep.subr.bf16.mxu0 0
        %1242 = vmatpush1.bf16.msra.mxu0 0
        %1243 = vmatprep.subr.bf16.mxu0 0
        %1244 = vmatpush1.bf16.msra.mxu0 0
        %1245 = vmatprep.subr.bf16.mxu0 0
        %1246 = vmatpush1.bf16.msra.mxu0 0
        %1247 = vmatprep.subr.bf16.mxu0 0
        %1248 = vmatpush1.bf16.msra.mxu0 0
        %1249 = vmatprep.subr.bf16.mxu0 0
        %1250 = vmatpush1.bf16.msra.mxu0 0
        %1251 = vmatprep.subr.bf16.mxu0 0
        %1252 = vmatpush1.bf16.msra.mxu0 0
        %1253 = vmatprep.mubr.bf16.mxu0 0
        %1254 = vmatmul.mubr.bf16.gmra.mrb[0].mxu0 %v1035
        %v1255 = vpop.f32.mrb[0].mxu0
        %v1256 = vadd.f32 0.0, %v1255
        %v1257 = vpop.f32.mrb[0].mxu0
        %v1258 = vpop.f32.mrb[0].mxu0
        %v1259 = vadd.f32 0.0, %v1258
        %v1260 = vpop.f32.mrb[0].mxu0
        %1261 = vdwg.mxu0
        %v1262 = vadd.f32 %v1167, %v1256
        %v1263 = vadd.f32 %v1170, %v1259
        %v1264 = vmax.f32 %v1262, 0.0
        %v1265 = vmax.f32 %v1263, 0.0
        %v1266 = vadd.f32 %v1264, %v1265
        %v1267 = vrot.slane %v1266, 4
        %v1268 = vadd.f32 %v1266, %v1267
        %v1269 = vrot.slane %v1268, 2
        %v1270 = vadd.f32 %v1268, %v1269
        %v1271 = vrot.slane %v1270, 1
        %v1272 = vadd.f32 %v1270, %v1271
        %v1273 = vmul.f32 %v1272, 0.0625
        %v1274 = vmul.f32 %v1264, %v1264
        %v1275 = vmul.f32 %v1265, %v1265
        %v1276 = vadd.f32 %v1274, %v1275
        %v1277 = vrot.slane %v1276, 4
        %v1278 = vadd.f32 %v1276, %v1277
        %v1279 = vrot.slane %v1278, 2
        %v1280 = vadd.f32 %v1278, %v1279
        %v1281 = vrot.slane %v1280, 1
        %v1282 = vadd.f32 %v1280, %v1281
        %v1283 = vmul.f32 %v1282, 0.0625
        %v1284 = vmul.f32 %v1273, %v1273
        %v1285 = vsub.f32 %v1283, %v1284
        %v1286 = vmax.f32 %v1285, 1e-05
        %v1287 = vrsqrt.pop %v1286
        %v1288 = vmul.f32 %v1286, %v1287
        %vm1289 = vcmp.eq.f32.partialorder %v1286, inf
        %v1290 = vsel %vm1289, %v1286, %v1288
        %vm1291 = vcmp.eq.f32.partialorder %v1286, 0.0
        %v1292 = vand.u32 %v1286, 2147483648
        %v1293 = vsel %vm1291, %v1292, %v1290
        %vm1294 = vcmp.le.f32.partialorder %v1293, 0.0031622776
        %v1295 = vsel %vm1294, 0.0, %v1293
        %v1296 = vmin.f32 %v1264, %v1265
        %v1297 = vrot.slane %v1296, 4
        %v1298 = vmin.f32 %v1296, %v1297
        %v1299 = vrot.slane %v1298, 2
        %v1300 = vmin.f32 %v1298, %v1299
        %v1301 = vrot.slane %v1300, 1
        %v1302 = vmin.f32 %v1300, %v1301
        %v1303 = vmax.f32 %v1264, %v1265
        %v1304 = vrot.slane %v1303, 4
        %v1305 = vmax.f32 %v1303, %v1304
        %v1306 = vrot.slane %v1305, 2
        %v1307 = vmax.f32 %v1305, %v1306
        %v1308 = vrot.slane %v1307, 1
        %v1309 = vmax.f32 %v1307, %v1308
        %v1312 = vcombine.high %v1264, %v1264
        %v1314 = vunpack.c.l.s4 1966171168
        %v1315 = vunpack.c.0.s8 %v1314
        %v1316 = vlaneseq
        %v1317 = vshrl.u32 %v1316, 7
        %v1318 = vsub.s32 %v1315, %v1317
        %v1319 = vrot.slane %v1264, %v1318
        %v1321 = vunpack.c.l.s4 1966171168
        %v1322 = vunpack.c.0.s8 %v1321
        %v1323 = vlaneseq
        %v1324 = vshrl.u32 %v1323, 7
        %v1325 = vsub.s32 %v1322, %v1324
        %v1326 = vrot.slane %v1312, %v1325
        %v1327 = vcombine.high %v1319, %v1319
        %v1328 = vcombine.high %v1326, %v1326
        %v1330 = vunpack.c.l.s4 1966171168
        %v1331 = vunpack.c.0.s8 %v1330
        %v1332 = vlaneseq
        %v1333 = vshrl.u32 %v1332, 7
        %v1334 = vsub.s32 %v1331, %v1333
        %v1335 = vrot.slane %v1319, %v1334
        %v1337 = vunpack.c.l.s4 1966171168
        %v1338 = vunpack.c.0.s8 %v1337
        %v1339 = vlaneseq
        %v1340 = vshrl.u32 %v1339, 7
        %v1341 = vsub.s32 %v1338, %v1340
        %v1342 = vrot.slane %v1326, %v1341
        %v1344 = vunpack.c.l.s4 1966171168
        %v1345 = vunpack.c.0.s8 %v1344
        %v1346 = vlaneseq
        %v1347 = vshrl.u32 %v1346, 7
        %v1348 = vsub.s32 %v1345, %v1347
        %v1349 = vrot.slane %v1327, %v1348
        %v1351 = vunpack.c.l.s4 1966171168
        %v1352 = vunpack.c.0.s8 %v1351
        %v1353 = vlaneseq
        %v1354 = vshrl.u32 %v1353, 7
        %v1355 = vsub.s32 %v1352, %v1354
        %v1356 = vrot.slane %v1328, %v1355
        %v1357 = vcombine.high %v1335, %v1335
        %v1358 = vcombine.high %v1342, %v1342
        %v1359 = vcombine.high %v1349, %v1349
        %v1360 = vcombine.high %v1356, %v1356
        %v1361 = vcombine.high %v1265, %v1265
        %v1363 = vunpack.c.l.s4 1966171168
        %v1364 = vunpack.c.0.s8 %v1363
        %v1365 = vlaneseq
        %v1366 = vshrl.u32 %v1365, 7
        %v1367 = vsub.s32 %v1364, %v1366
        %v1368 = vrot.slane %v1265, %v1367
        %v1370 = vunpack.c.l.s4 1966171168
        %v1371 = vunpack.c.0.s8 %v1370
        %v1372 = vlaneseq
        %v1373 = vshrl.u32 %v1372, 7
        %v1374 = vsub.s32 %v1371, %v1373
        %v1375 = vrot.slane %v1361, %v1374
        %v1376 = vcombine.high %v1368, %v1368
        %v1377 = vcombine.high %v1375, %v1375
        %v1379 = vunpack.c.l.s4 1966171168
        %v1380 = vunpack.c.0.s8 %v1379
        %v1381 = vlaneseq
        %v1382 = vshrl.u32 %v1381, 7
        %v1383 = vsub.s32 %v1380, %v1382
        %v1384 = vrot.slane %v1368, %v1383
        %v1386 = vunpack.c.l.s4 1966171168
        %v1387 = vunpack.c.0.s8 %v1386
        %v1388 = vlaneseq
        %v1389 = vshrl.u32 %v1388, 7
        %v1390 = vsub.s32 %v1387, %v1389
        %v1391 = vrot.slane %v1375, %v1390
        %v1393 = vunpack.c.l.s4 1966171168
        %v1394 = vunpack.c.0.s8 %v1393
        %v1395 = vlaneseq
        %v1396 = vshrl.u32 %v1395, 7
        %v1397 = vsub.s32 %v1394, %v1396
        %v1398 = vrot.slane %v1376, %v1397
        %v1400 = vunpack.c.l.s4 1966171168
        %v1401 = vunpack.c.0.s8 %v1400
        %v1402 = vlaneseq
        %v1403 = vshrl.u32 %v1402, 7
        %v1404 = vsub.s32 %v1401, %v1403
        %v1405 = vrot.slane %v1377, %v1404
        %v1406 = vcombine.high %v1384, %v1384
        %v1407 = vcombine.high %v1391, %v1391
        %v1408 = vcombine.high %v1398, %v1398
        %v1409 = vcombine.high %v1405, %v1405
        %v1410 = vlaneseq
        %v1411 = vshrl.u32 %v1410, 7
        %v1412 = vsub.s32 0, %v1411
        %v1413 = vrot.slane %v1335, %v1412
        %v1414 = vlaneseq
        %v1415 = vshrl.u32 %v1414, 7
        %v1416 = vsub.s32 0, %v1415
        %v1417 = vrot.slane %v1349, %v1416
        %v1418 = vlaneseq
        %v1419 = vshrl.u32 %v1418, 7
        %v1420 = vsub.s32 0, %v1419
        %v1421 = vrot.slane %v1357, %v1420
        %v1422 = vlaneseq
        %v1423 = vshrl.u32 %v1422, 7
        %v1424 = vsub.s32 0, %v1423
        %v1425 = vrot.slane %v1359, %v1424
        %v1426 = vlaneseq
        %v1427 = vshrl.u32 %v1426, 7
        %v1428 = vsub.s32 0, %v1427
        %v1429 = vrot.slane %v1342, %v1428
        %v1430 = vlaneseq
        %v1431 = vshrl.u32 %v1430, 7
        %v1432 = vsub.s32 0, %v1431
        %v1433 = vrot.slane %v1356, %v1432
        %v1434 = vlaneseq
        %v1435 = vshrl.u32 %v1434, 7
        %v1436 = vsub.s32 0, %v1435
        %v1437 = vrot.slane %v1358, %v1436
        %v1438 = vlaneseq
        %v1439 = vshrl.u32 %v1438, 7
        %v1440 = vsub.s32 0, %v1439
        %v1441 = vrot.slane %v1360, %v1440
        %v1442 = vlaneseq
        %v1443 = vshrl.u32 %v1442, 7
        %v1444 = vsub.s32 0, %v1443
        %v1445 = vrot.slane %v1384, %v1444
        %v1446 = vlaneseq
        %v1447 = vshrl.u32 %v1446, 7
        %v1448 = vsub.s32 0, %v1447
        %v1449 = vrot.slane %v1398, %v1448
        %v1450 = vlaneseq
        %v1451 = vshrl.u32 %v1450, 7
        %v1452 = vsub.s32 0, %v1451
        %v1453 = vrot.slane %v1406, %v1452
        %v1454 = vlaneseq
        %v1455 = vshrl.u32 %v1454, 7
        %v1456 = vsub.s32 0, %v1455
        %v1457 = vrot.slane %v1408, %v1456
        %v1458 = vlaneseq
        %v1459 = vshrl.u32 %v1458, 7
        %v1460 = vsub.s32 0, %v1459
        %v1461 = vrot.slane %v1391, %v1460
        %v1462 = vlaneseq
        %v1463 = vshrl.u32 %v1462, 7
        %v1464 = vsub.s32 0, %v1463
        %v1465 = vrot.slane %v1405, %v1464
        %v1466 = vlaneseq
        %v1467 = vshrl.u32 %v1466, 7
        %v1468 = vsub.s32 0, %v1467
        %v1469 = vrot.slane %v1407, %v1468
        %v1470 = vlaneseq
        %v1471 = vshrl.u32 %v1470, 7
        %v1472 = vsub.s32 0, %v1471
        %v1473 = vrot.slane %v1409, %v1472
        %vm1490 = vcmp.lt.f32.partialorder %v1264, %v1413
        %vm1491 = vcmp.lt.f32.partialorder %v1264, %v1417
        %vm1492 = vcmp.lt.f32.partialorder %v1264, %v1421
        %vm1493 = vcmp.lt.f32.partialorder %v1264, %v1425
        %vm1494 = vcmp.lt.f32.partialorder %v1264, %v1429
        %vm1495 = vcmp.lt.f32.partialorder %v1264, %v1433
        %vm1496 = vcmp.lt.f32.partialorder %v1264, %v1437
        %vm1497 = vcmp.lt.f32.partialorder %v1264, %v1441
        %vm1498 = vcmp.lt.f32.partialorder %v1264, %v1445
        %vm1499 = vcmp.lt.f32.partialorder %v1264, %v1449
        %vm1500 = vcmp.lt.f32.partialorder %v1264, %v1453
        %vm1501 = vcmp.lt.f32.partialorder %v1264, %v1457
        %vm1502 = vcmp.lt.f32.partialorder %v1264, %v1461
        %vm1503 = vcmp.lt.f32.partialorder %v1264, %v1465
        %vm1504 = vcmp.lt.f32.partialorder %v1264, %v1469
        %vm1505 = vcmp.lt.f32.partialorder %v1264, %v1473
        %v1506 = vsel %vm1490, 1, 0
        %v1507 = vsel %vm1491, 1, 0
        %v1508 = vsel %vm1492, 1, 0
        %v1509 = vsel %vm1493, 1, 0
        %v1510 = vsel %vm1494, 1, 0
        %v1511 = vsel %vm1495, 1, 0
        %v1512 = vsel %vm1496, 1, 0
        %v1513 = vsel %vm1497, 1, 0
        %v1514 = vsel %vm1498, 1, 0
        %v1515 = vsel %vm1499, 1, 0
        %v1516 = vsel %vm1500, 1, 0
        %v1517 = vsel %vm1501, 1, 0
        %v1518 = vsel %vm1502, 1, 0
        %v1519 = vsel %vm1503, 1, 0
        %v1520 = vsel %vm1504, 1, 0
        %v1521 = vsel %vm1505, 1, 0
        %v1522 = vcvt.s32.f32 %v1506
        %v1523 = vcvt.s32.f32 %v1507
        %v1524 = vcvt.s32.f32 %v1508
        %v1525 = vcvt.s32.f32 %v1509
        %v1526 = vcvt.s32.f32 %v1510
        %v1527 = vcvt.s32.f32 %v1511
        %v1528 = vcvt.s32.f32 %v1512
        %v1529 = vcvt.s32.f32 %v1513
        %v1530 = vcvt.s32.f32 %v1514
        %v1531 = vcvt.s32.f32 %v1515
        %v1532 = vcvt.s32.f32 %v1516
        %v1533 = vcvt.s32.f32 %v1517
        %v1534 = vcvt.s32.f32 %v1518
        %v1535 = vcvt.s32.f32 %v1519
        %v1536 = vcvt.s32.f32 %v1520
        %v1537 = vcvt.s32.f32 %v1521
        %v1538 = vrot.slane %v1522, 4
        %v1539 = vadd.f32 %v1522, %v1538
        %v1540 = vrot.slane %v1539, 2
        %v1541 = vadd.f32 %v1539, %v1540
        %v1542 = vrot.slane %v1541, 1
        %v1543 = vadd.f32 %v1541, %v1542
        %v1544 = vrot.slane %v1523, 4
        %v1545 = vadd.f32 %v1523, %v1544
        %v1546 = vrot.slane %v1545, 2
        %v1547 = vadd.f32 %v1545, %v1546
        %v1548 = vrot.slane %v1547, 1
        %v1549 = vadd.f32 %v1547, %v1548
        %v1550 = vrot.slane %v1524, 4
        %v1551 = vadd.f32 %v1524, %v1550
        %v1552 = vrot.slane %v1551, 2
        %v1553 = vadd.f32 %v1551, %v1552
        %v1554 = vrot.slane %v1553, 1
        %v1555 = vadd.f32 %v1553, %v1554
        %v1556 = vrot.slane %v1525, 4
        %v1557 = vadd.f32 %v1525, %v1556
        %v1558 = vrot.slane %v1557, 2
        %v1559 = vadd.f32 %v1557, %v1558
        %v1560 = vrot.slane %v1559, 1
        %v1561 = vadd.f32 %v1559, %v1560
        %v1562 = vrot.slane %v1526, 4
        %v1563 = vadd.f32 %v1526, %v1562
        %v1564 = vrot.slane %v1563, 2
        %v1565 = vadd.f32 %v1563, %v1564
        %v1566 = vrot.slane %v1565, 1
        %v1567 = vadd.f32 %v1565, %v1566
        %v1568 = vrot.slane %v1527, 4
        %v1569 = vadd.f32 %v1527, %v1568
        %v1570 = vrot.slane %v1569, 2
        %v1571 = vadd.f32 %v1569, %v1570
        %v1572 = vrot.slane %v1571, 1
        %v1573 = vadd.f32 %v1571, %v1572
        %v1574 = vrot.slane %v1528, 4
        %v1575 = vadd.f32 %v1528, %v1574
        %v1576 = vrot.slane %v1575, 2
        %v1577 = vadd.f32 %v1575, %v1576
        %v1578 = vrot.slane %v1577, 1
        %v1579 = vadd.f32 %v1577, %v1578
        %v1580 = vrot.slane %v1529, 4
        %v1581 = vadd.f32 %v1529, %v1580
        %v1582 = vrot.slane %v1581, 2
        %v1583 = vadd.f32 %v1581, %v1582
        %v1584 = vrot.slane %v1583, 1
        %v1585 = vadd.f32 %v1583, %v1584
        %v1586 = vrot.slane %v1530, 4
        %v1587 = vadd.f32 %v1530, %v1586
        %v1588 = vrot.slane %v1587, 2
        %v1589 = vadd.f32 %v1587, %v1588
        %v1590 = vrot.slane %v1589, 1
        %v1591 = vadd.f32 %v1589, %v1590
        %v1592 = vrot.slane %v1531, 4
        %v1593 = vadd.f32 %v1531, %v1592
        %v1594 = vrot.slane %v1593, 2
        %v1595 = vadd.f32 %v1593, %v1594
        %v1596 = vrot.slane %v1595, 1
        %v1597 = vadd.f32 %v1595, %v1596
        %v1598 = vrot.slane %v1532, 4
        %v1599 = vadd.f32 %v1532, %v1598
        %v1600 = vrot.slane %v1599, 2
        %v1601 = vadd.f32 %v1599, %v1600
        %v1602 = vrot.slane %v1601, 1
        %v1603 = vadd.f32 %v1601, %v1602
        %v1604 = vrot.slane %v1533, 4
        %v1605 = vadd.f32 %v1533, %v1604
        %v1606 = vrot.slane %v1605, 2
        %v1607 = vadd.f32 %v1605, %v1606
        %v1608 = vrot.slane %v1607, 1
        %v1609 = vadd.f32 %v1607, %v1608
        %v1610 = vrot.slane %v1534, 4
        %v1611 = vadd.f32 %v1534, %v1610
        %v1612 = vrot.slane %v1611, 2
        %v1613 = vadd.f32 %v1611, %v1612
        %v1614 = vrot.slane %v1613, 1
        %v1615 = vadd.f32 %v1613, %v1614
        %v1616 = vrot.slane %v1535, 4
        %v1617 = vadd.f32 %v1535, %v1616
        %v1618 = vrot.slane %v1617, 2
        %v1619 = vadd.f32 %v1617, %v1618
        %v1620 = vrot.slane %v1619, 1
        %v1621 = vadd.f32 %v1619, %v1620
        %v1622 = vrot.slane %v1536, 4
        %v1623 = vadd.f32 %v1536, %v1622
        %v1624 = vrot.slane %v1623, 2
        %v1625 = vadd.f32 %v1623, %v1624
        %v1626 = vrot.slane %v1625, 1
        %v1627 = vadd.f32 %v1625, %v1626
        %v1628 = vrot.slane %v1537, 4
        %v1629 = vadd.f32 %v1537, %v1628
        %v1630 = vrot.slane %v1629, 2
        %v1631 = vadd.f32 %v1629, %v1630
        %v1632 = vrot.slane %v1631, 1
        %v1633 = vadd.f32 %v1631, %v1632
        %v1634 = vadd.f32 %v1543, 0.0
        %v1635 = vadd.f32 %v1549, 0.0
        %v1636 = vadd.f32 %v1555, 0.0
        %v1637 = vadd.f32 %v1561, 0.0
        %v1638 = vadd.f32 %v1567, 0.0
        %v1639 = vadd.f32 %v1573, 0.0
        %v1640 = vadd.f32 %v1579, 0.0
        %v1641 = vadd.f32 %v1585, 0.0
        %v1642 = vadd.f32 %v1591, 0.0
        %v1643 = vadd.f32 %v1597, 0.0
        %v1644 = vadd.f32 %v1603, 0.0
        %v1645 = vadd.f32 %v1609, 0.0
        %v1646 = vadd.f32 %v1615, 0.0
        %v1647 = vadd.f32 %v1621, 0.0
        %v1648 = vadd.f32 %v1627, 0.0
        %v1649 = vadd.f32 %v1633, 0.0
        %vm1650 = vcmp.le.f32.partialorder %v1264, %v1413
        %vm1651 = vcmp.le.f32.partialorder %v1264, %v1417
        %vm1652 = vcmp.le.f32.partialorder %v1264, %v1421
        %vm1653 = vcmp.le.f32.partialorder %v1264, %v1425
        %vm1654 = vcmp.le.f32.partialorder %v1264, %v1429
        %vm1655 = vcmp.le.f32.partialorder %v1264, %v1433
        %vm1656 = vcmp.le.f32.partialorder %v1264, %v1437
        %vm1657 = vcmp.le.f32.partialorder %v1264, %v1441
        %vm1658 = vcmp.le.f32.partialorder %v1264, %v1445
        %vm1659 = vcmp.le.f32.partialorder %v1264, %v1449
        %vm1660 = vcmp.le.f32.partialorder %v1264, %v1453
        %vm1661 = vcmp.le.f32.partialorder %v1264, %v1457
        %vm1662 = vcmp.le.f32.partialorder %v1264, %v1461
        %vm1663 = vcmp.le.f32.partialorder %v1264, %v1465
        %vm1664 = vcmp.le.f32.partialorder %v1264, %v1469
        %vm1665 = vcmp.le.f32.partialorder %v1264, %v1473
        %v1666 = vsel %vm1650, 1, 0
        %v1667 = vsel %vm1651, 1, 0
        %v1668 = vsel %vm1652, 1, 0
        %v1669 = vsel %vm1653, 1, 0
        %v1670 = vsel %vm1654, 1, 0
        %v1671 = vsel %vm1655, 1, 0
        %v1672 = vsel %vm1656, 1, 0
        %v1673 = vsel %vm1657, 1, 0
        %v1674 = vsel %vm1658, 1, 0
        %v1675 = vsel %vm1659, 1, 0
        %v1676 = vsel %vm1660, 1, 0
        %v1677 = vsel %vm1661, 1, 0
        %v1678 = vsel %vm1662, 1, 0
        %v1679 = vsel %vm1663, 1, 0
        %v1680 = vsel %vm1664, 1, 0
        %v1681 = vsel %vm1665, 1, 0
        %v1682 = vcvt.s32.f32 %v1666
        %v1683 = vcvt.s32.f32 %v1667
        %v1684 = vcvt.s32.f32 %v1668
        %v1685 = vcvt.s32.f32 %v1669
        %v1686 = vcvt.s32.f32 %v1670
        %v1687 = vcvt.s32.f32 %v1671
        %v1688 = vcvt.s32.f32 %v1672
        %v1689 = vcvt.s32.f32 %v1673
        %v1690 = vcvt.s32.f32 %v1674
        %v1691 = vcvt.s32.f32 %v1675
        %v1692 = vcvt.s32.f32 %v1676
        %v1693 = vcvt.s32.f32 %v1677
        %v1694 = vcvt.s32.f32 %v1678
        %v1695 = vcvt.s32.f32 %v1679
        %v1696 = vcvt.s32.f32 %v1680
        %v1697 = vcvt.s32.f32 %v1681
        %v1698 = vrot.slane %v1682, 4
        %v1699 = vadd.f32 %v1682, %v1698
        %v1700 = vrot.slane %v1699, 2
        %v1701 = vadd.f32 %v1699, %v1700
        %v1702 = vrot.slane %v1701, 1
        %v1703 = vadd.f32 %v1701, %v1702
        %v1704 = vrot.slane %v1683, 4
        %v1705 = vadd.f32 %v1683, %v1704
        %v1706 = vrot.slane %v1705, 2
        %v1707 = vadd.f32 %v1705, %v1706
        %v1708 = vrot.slane %v1707, 1
        %v1709 = vadd.f32 %v1707, %v1708
        %v1710 = vrot.slane %v1684, 4
        %v1711 = vadd.f32 %v1684, %v1710
        %v1712 = vrot.slane %v1711, 2
        %v1713 = vadd.f32 %v1711, %v1712
        %v1714 = vrot.slane %v1713, 1
        %v1715 = vadd.f32 %v1713, %v1714
        %v1716 = vrot.slane %v1685, 4
        %v1717 = vadd.f32 %v1685, %v1716
        %v1718 = vrot.slane %v1717, 2
        %v1719 = vadd.f32 %v1717, %v1718
        %v1720 = vrot.slane %v1719, 1
        %v1721 = vadd.f32 %v1719, %v1720
        %v1722 = vrot.slane %v1686, 4
        %v1723 = vadd.f32 %v1686, %v1722
        %v1724 = vrot.slane %v1723, 2
        %v1725 = vadd.f32 %v1723, %v1724
        %v1726 = vrot.slane %v1725, 1
        %v1727 = vadd.f32 %v1725, %v1726
        %v1728 = vrot.slane %v1687, 4
        %v1729 = vadd.f32 %v1687, %v1728
        %v1730 = vrot.slane %v1729, 2
        %v1731 = vadd.f32 %v1729, %v1730
        %v1732 = vrot.slane %v1731, 1
        %v1733 = vadd.f32 %v1731, %v1732
        %v1734 = vrot.slane %v1688, 4
        %v1735 = vadd.f32 %v1688, %v1734
        %v1736 = vrot.slane %v1735, 2
        %v1737 = vadd.f32 %v1735, %v1736
        %v1738 = vrot.slane %v1737, 1
        %v1739 = vadd.f32 %v1737, %v1738
        %v1740 = vrot.slane %v1689, 4
        %v1741 = vadd.f32 %v1689, %v1740
        %v1742 = vrot.slane %v1741, 2
        %v1743 = vadd.f32 %v1741, %v1742
        %v1744 = vrot.slane %v1743, 1
        %v1745 = vadd.f32 %v1743, %v1744
        %v1746 = vrot.slane %v1690, 4
        %v1747 = vadd.f32 %v1690, %v1746
        %v1748 = vrot.slane %v1747, 2
        %v1749 = vadd.f32 %v1747, %v1748
        %v1750 = vrot.slane %v1749, 1
        %v1751 = vadd.f32 %v1749, %v1750
        %v1752 = vrot.slane %v1691, 4
        %v1753 = vadd.f32 %v1691, %v1752
        %v1754 = vrot.slane %v1753, 2
        %v1755 = vadd.f32 %v1753, %v1754
        %v1756 = vrot.slane %v1755, 1
        %v1757 = vadd.f32 %v1755, %v1756
        %v1758 = vrot.slane %v1692, 4
        %v1759 = vadd.f32 %v1692, %v1758
        %v1760 = vrot.slane %v1759, 2
        %v1761 = vadd.f32 %v1759, %v1760
        %v1762 = vrot.slane %v1761, 1
        %v1763 = vadd.f32 %v1761, %v1762
        %v1764 = vrot.slane %v1693, 4
        %v1765 = vadd.f32 %v1693, %v1764
        %v1766 = vrot.slane %v1765, 2
        %v1767 = vadd.f32 %v1765, %v1766
        %v1768 = vrot.slane %v1767, 1
        %v1769 = vadd.f32 %v1767, %v1768
        %v1770 = vrot.slane %v1694, 4
        %v1771 = vadd.f32 %v1694, %v1770
        %v1772 = vrot.slane %v1771, 2
        %v1773 = vadd.f32 %v1771, %v1772
        %v1774 = vrot.slane %v1773, 1
        %v1775 = vadd.f32 %v1773, %v1774
        %v1776 = vrot.slane %v1695, 4
        %v1777 = vadd.f32 %v1695, %v1776
        %v1778 = vrot.slane %v1777, 2
        %v1779 = vadd.f32 %v1777, %v1778
        %v1780 = vrot.slane %v1779, 1
        %v1781 = vadd.f32 %v1779, %v1780
        %v1782 = vrot.slane %v1696, 4
        %v1783 = vadd.f32 %v1696, %v1782
        %v1784 = vrot.slane %v1783, 2
        %v1785 = vadd.f32 %v1783, %v1784
        %v1786 = vrot.slane %v1785, 1
        %v1787 = vadd.f32 %v1785, %v1786
        %v1788 = vrot.slane %v1697, 4
        %v1789 = vadd.f32 %v1697, %v1788
        %v1790 = vrot.slane %v1789, 2
        %v1791 = vadd.f32 %v1789, %v1790
        %v1792 = vrot.slane %v1791, 1
        %v1793 = vadd.f32 %v1791, %v1792
        %v1794 = vadd.f32 %v1703, 0.0
        %v1795 = vadd.f32 %v1709, 0.0
        %v1796 = vadd.f32 %v1715, 0.0
        %v1797 = vadd.f32 %v1721, 0.0
        %v1798 = vadd.f32 %v1727, 0.0
        %v1799 = vadd.f32 %v1733, 0.0
        %v1800 = vadd.f32 %v1739, 0.0
        %v1801 = vadd.f32 %v1745, 0.0
        %v1802 = vadd.f32 %v1751, 0.0
        %v1803 = vadd.f32 %v1757, 0.0
        %v1804 = vadd.f32 %v1763, 0.0
        %v1805 = vadd.f32 %v1769, 0.0
        %v1806 = vadd.f32 %v1775, 0.0
        %v1807 = vadd.f32 %v1781, 0.0
        %v1808 = vadd.f32 %v1787, 0.0
        %v1809 = vadd.f32 %v1793, 0.0
        %vm1810 = vcmp.lt.f32.partialorder %v1265, %v1413
        %vm1811 = vcmp.lt.f32.partialorder %v1265, %v1417
        %vm1812 = vcmp.lt.f32.partialorder %v1265, %v1421
        %vm1813 = vcmp.lt.f32.partialorder %v1265, %v1425
        %vm1814 = vcmp.lt.f32.partialorder %v1265, %v1429
        %vm1815 = vcmp.lt.f32.partialorder %v1265, %v1433
        %vm1816 = vcmp.lt.f32.partialorder %v1265, %v1437
        %vm1817 = vcmp.lt.f32.partialorder %v1265, %v1441
        %vm1818 = vcmp.lt.f32.partialorder %v1265, %v1445
        %vm1819 = vcmp.lt.f32.partialorder %v1265, %v1449
        %vm1820 = vcmp.lt.f32.partialorder %v1265, %v1453
        %vm1821 = vcmp.lt.f32.partialorder %v1265, %v1457
        %vm1822 = vcmp.lt.f32.partialorder %v1265, %v1461
        %vm1823 = vcmp.lt.f32.partialorder %v1265, %v1465
        %vm1824 = vcmp.lt.f32.partialorder %v1265, %v1469
        %vm1825 = vcmp.lt.f32.partialorder %v1265, %v1473
        %v1826 = vsel %vm1810, 1, 0
        %v1827 = vsel %vm1811, 1, 0
        %v1828 = vsel %vm1812, 1, 0
        %v1829 = vsel %vm1813, 1, 0
        %v1830 = vsel %vm1814, 1, 0
        %v1831 = vsel %vm1815, 1, 0
        %v1832 = vsel %vm1816, 1, 0
        %v1833 = vsel %vm1817, 1, 0
        %v1834 = vsel %vm1818, 1, 0
        %v1835 = vsel %vm1819, 1, 0
        %v1836 = vsel %vm1820, 1, 0
        %v1837 = vsel %vm1821, 1, 0
        %v1838 = vsel %vm1822, 1, 0
        %v1839 = vsel %vm1823, 1, 0
        %v1840 = vsel %vm1824, 1, 0
        %v1841 = vsel %vm1825, 1, 0
        %v1842 = vcvt.s32.f32 %v1826
        %v1843 = vcvt.s32.f32 %v1827
        %v1844 = vcvt.s32.f32 %v1828
        %v1845 = vcvt.s32.f32 %v1829
        %v1846 = vcvt.s32.f32 %v1830
        %v1847 = vcvt.s32.f32 %v1831
        %v1848 = vcvt.s32.f32 %v1832
        %v1849 = vcvt.s32.f32 %v1833
        %v1850 = vcvt.s32.f32 %v1834
        %v1851 = vcvt.s32.f32 %v1835
        %v1852 = vcvt.s32.f32 %v1836
        %v1853 = vcvt.s32.f32 %v1837
        %v1854 = vcvt.s32.f32 %v1838
        %v1855 = vcvt.s32.f32 %v1839
        %v1856 = vcvt.s32.f32 %v1840
        %v1857 = vcvt.s32.f32 %v1841
        %v1858 = vrot.slane %v1842, 4
        %v1859 = vadd.f32 %v1842, %v1858
        %v1860 = vrot.slane %v1859, 2
        %v1861 = vadd.f32 %v1859, %v1860
        %v1862 = vrot.slane %v1861, 1
        %v1863 = vadd.f32 %v1861, %v1862
        %v1864 = vrot.slane %v1843, 4
        %v1865 = vadd.f32 %v1843, %v1864
        %v1866 = vrot.slane %v1865, 2
        %v1867 = vadd.f32 %v1865, %v1866
        %v1868 = vrot.slane %v1867, 1
        %v1869 = vadd.f32 %v1867, %v1868
        %v1870 = vrot.slane %v1844, 4
        %v1871 = vadd.f32 %v1844, %v1870
        %v1872 = vrot.slane %v1871, 2
        %v1873 = vadd.f32 %v1871, %v1872
        %v1874 = vrot.slane %v1873, 1
        %v1875 = vadd.f32 %v1873, %v1874
        %v1876 = vrot.slane %v1845, 4
        %v1877 = vadd.f32 %v1845, %v1876
        %v1878 = vrot.slane %v1877, 2
        %v1879 = vadd.f32 %v1877, %v1878
        %v1880 = vrot.slane %v1879, 1
        %v1881 = vadd.f32 %v1879, %v1880
        %v1882 = vrot.slane %v1846, 4
        %v1883 = vadd.f32 %v1846, %v1882
        %v1884 = vrot.slane %v1883, 2
        %v1885 = vadd.f32 %v1883, %v1884
        %v1886 = vrot.slane %v1885, 1
        %v1887 = vadd.f32 %v1885, %v1886
        %v1888 = vrot.slane %v1847, 4
        %v1889 = vadd.f32 %v1847, %v1888
        %v1890 = vrot.slane %v1889, 2
        %v1891 = vadd.f32 %v1889, %v1890
        %v1892 = vrot.slane %v1891, 1
        %v1893 = vadd.f32 %v1891, %v1892
        %v1894 = vrot.slane %v1848, 4
        %v1895 = vadd.f32 %v1848, %v1894
        %v1896 = vrot.slane %v1895, 2
        %v1897 = vadd.f32 %v1895, %v1896
        %v1898 = vrot.slane %v1897, 1
        %v1899 = vadd.f32 %v1897, %v1898
        %v1900 = vrot.slane %v1849, 4
        %v1901 = vadd.f32 %v1849, %v1900
        %v1902 = vrot.slane %v1901, 2
        %v1903 = vadd.f32 %v1901, %v1902
        %v1904 = vrot.slane %v1903, 1
        %v1905 = vadd.f32 %v1903, %v1904
        %v1906 = vrot.slane %v1850, 4
        %v1907 = vadd.f32 %v1850, %v1906
        %v1908 = vrot.slane %v1907, 2
        %v1909 = vadd.f32 %v1907, %v1908
        %v1910 = vrot.slane %v1909, 1
        %v1911 = vadd.f32 %v1909, %v1910
        %v1912 = vrot.slane %v1851, 4
        %v1913 = vadd.f32 %v1851, %v1912
        %v1914 = vrot.slane %v1913, 2
        %v1915 = vadd.f32 %v1913, %v1914
        %v1916 = vrot.slane %v1915, 1
        %v1917 = vadd.f32 %v1915, %v1916
        %v1918 = vrot.slane %v1852, 4
        %v1919 = vadd.f32 %v1852, %v1918
        %v1920 = vrot.slane %v1919, 2
        %v1921 = vadd.f32 %v1919, %v1920
        %v1922 = vrot.slane %v1921, 1
        %v1923 = vadd.f32 %v1921, %v1922
        %v1924 = vrot.slane %v1853, 4
        %v1925 = vadd.f32 %v1853, %v1924
        %v1926 = vrot.slane %v1925, 2
        %v1927 = vadd.f32 %v1925, %v1926
        %v1928 = vrot.slane %v1927, 1
        %v1929 = vadd.f32 %v1927, %v1928
        %v1930 = vrot.slane %v1854, 4
        %v1931 = vadd.f32 %v1854, %v1930
        %v1932 = vrot.slane %v1931, 2
        %v1933 = vadd.f32 %v1931, %v1932
        %v1934 = vrot.slane %v1933, 1
        %v1935 = vadd.f32 %v1933, %v1934
        %v1936 = vrot.slane %v1855, 4
        %v1937 = vadd.f32 %v1855, %v1936
        %v1938 = vrot.slane %v1937, 2
        %v1939 = vadd.f32 %v1937, %v1938
        %v1940 = vrot.slane %v1939, 1
        %v1941 = vadd.f32 %v1939, %v1940
        %v1942 = vrot.slane %v1856, 4
        %v1943 = vadd.f32 %v1856, %v1942
        %v1944 = vrot.slane %v1943, 2
        %v1945 = vadd.f32 %v1943, %v1944
        %v1946 = vrot.slane %v1945, 1
        %v1947 = vadd.f32 %v1945, %v1946
        %v1948 = vrot.slane %v1857, 4
        %v1949 = vadd.f32 %v1857, %v1948
        %v1950 = vrot.slane %v1949, 2
        %v1951 = vadd.f32 %v1949, %v1950
        %v1952 = vrot.slane %v1951, 1
        %v1953 = vadd.f32 %v1951, %v1952
        %v1954 = vadd.f32 %v1634, %v1863
        %v1955 = vadd.f32 %v1635, %v1869
        %v1956 = vadd.f32 %v1636, %v1875
        %v1957 = vadd.f32 %v1637, %v1881
        %v1958 = vadd.f32 %v1638, %v1887
        %v1959 = vadd.f32 %v1639, %v1893
        %v1960 = vadd.f32 %v1640, %v1899
        %v1961 = vadd.f32 %v1641, %v1905
        %v1962 = vadd.f32 %v1642, %v1911
        %v1963 = vadd.f32 %v1643, %v1917
        %v1964 = vadd.f32 %v1644, %v1923
        %v1965 = vadd.f32 %v1645, %v1929
        %v1966 = vadd.f32 %v1646, %v1935
        %v1967 = vadd.f32 %v1647, %v1941
        %v1968 = vadd.f32 %v1648, %v1947
        %v1969 = vadd.f32 %v1649, %v1953
        %vm1970 = vcmp.le.f32.partialorder %v1265, %v1413
        %vm1971 = vcmp.le.f32.partialorder %v1265, %v1417
        %vm1972 = vcmp.le.f32.partialorder %v1265, %v1421
        %vm1973 = vcmp.le.f32.partialorder %v1265, %v1425
        %vm1974 = vcmp.le.f32.partialorder %v1265, %v1429
        %vm1975 = vcmp.le.f32.partialorder %v1265, %v1433
        %vm1976 = vcmp.le.f32.partialorder %v1265, %v1437
        %vm1977 = vcmp.le.f32.partialorder %v1265, %v1441
        %vm1978 = vcmp.le.f32.partialorder %v1265, %v1445
        %vm1979 = vcmp.le.f32.partialorder %v1265, %v1449
        %vm1980 = vcmp.le.f32.partialorder %v1265, %v1453
        %vm1981 = vcmp.le.f32.partialorder %v1265, %v1457
        %vm1982 = vcmp.le.f32.partialorder %v1265, %v1461
        %vm1983 = vcmp.le.f32.partialorder %v1265, %v1465
        %vm1984 = vcmp.le.f32.partialorder %v1265, %v1469
        %vm1985 = vcmp.le.f32.partialorder %v1265, %v1473
        %v1986 = vsel %vm1970, 1, 0
        %v1987 = vsel %vm1971, 1, 0
        %v1988 = vsel %vm1972, 1, 0
        %v1989 = vsel %vm1973, 1, 0
        %v1990 = vsel %vm1974, 1, 0
        %v1991 = vsel %vm1975, 1, 0
        %v1992 = vsel %vm1976, 1, 0
        %v1993 = vsel %vm1977, 1, 0
        %v1994 = vsel %vm1978, 1, 0
        %v1995 = vsel %vm1979, 1, 0
        %v1996 = vsel %vm1980, 1, 0
        %v1997 = vsel %vm1981, 1, 0
        %v1998 = vsel %vm1982, 1, 0
        %v1999 = vsel %vm1983, 1, 0
        %v2000 = vsel %vm1984, 1, 0
        %v2001 = vsel %vm1985, 1, 0
        %v2002 = vcvt.s32.f32 %v1986
        %v2003 = vcvt.s32.f32 %v1987
        %v2004 = vcvt.s32.f32 %v1988
        %v2005 = vcvt.s32.f32 %v1989
        %v2006 = vcvt.s32.f32 %v1990
        %v2007 = vcvt.s32.f32 %v1991
        %v2008 = vcvt.s32.f32 %v1992
        %v2009 = vcvt.s32.f32 %v1993
        %v2010 = vcvt.s32.f32 %v1994
        %v2011 = vcvt.s32.f32 %v1995
        %v2012 = vcvt.s32.f32 %v1996
        %v2013 = vcvt.s32.f32 %v1997
        %v2014 = vcvt.s32.f32 %v1998
        %v2015 = vcvt.s32.f32 %v1999
        %v2016 = vcvt.s32.f32 %v2000
        %v2017 = vcvt.s32.f32 %v2001
        %v2018 = vrot.slane %v2002, 4
        %v2019 = vadd.f32 %v2002, %v2018
        %v2020 = vrot.slane %v2019, 2
        %v2021 = vadd.f32 %v2019, %v2020
        %v2022 = vrot.slane %v2021, 1
        %v2023 = vadd.f32 %v2021, %v2022
        %v2024 = vrot.slane %v2003, 4
        %v2025 = vadd.f32 %v2003, %v2024
        %v2026 = vrot.slane %v2025, 2
        %v2027 = vadd.f32 %v2025, %v2026
        %v2028 = vrot.slane %v2027, 1
        %v2029 = vadd.f32 %v2027, %v2028
        %v2030 = vrot.slane %v2004, 4
        %v2031 = vadd.f32 %v2004, %v2030
        %v2032 = vrot.slane %v2031, 2
        %v2033 = vadd.f32 %v2031, %v2032
        %v2034 = vrot.slane %v2033, 1
        %v2035 = vadd.f32 %v2033, %v2034
        %v2036 = vrot.slane %v2005, 4
        %v2037 = vadd.f32 %v2005, %v2036
        %v2038 = vrot.slane %v2037, 2
        %v2039 = vadd.f32 %v2037, %v2038
        %v2040 = vrot.slane %v2039, 1
        %v2041 = vadd.f32 %v2039, %v2040
        %v2042 = vrot.slane %v2006, 4
        %v2043 = vadd.f32 %v2006, %v2042
        %v2044 = vrot.slane %v2043, 2
        %v2045 = vadd.f32 %v2043, %v2044
        %v2046 = vrot.slane %v2045, 1
        %v2047 = vadd.f32 %v2045, %v2046
        %v2048 = vrot.slane %v2007, 4
        %v2049 = vadd.f32 %v2007, %v2048
        %v2050 = vrot.slane %v2049, 2
        %v2051 = vadd.f32 %v2049, %v2050
        %v2052 = vrot.slane %v2051, 1
        %v2053 = vadd.f32 %v2051, %v2052
        %v2054 = vrot.slane %v2008, 4
        %v2055 = vadd.f32 %v2008, %v2054
        %v2056 = vrot.slane %v2055, 2
        %v2057 = vadd.f32 %v2055, %v2056
        %v2058 = vrot.slane %v2057, 1
        %v2059 = vadd.f32 %v2057, %v2058
        %v2060 = vrot.slane %v2009, 4
        %v2061 = vadd.f32 %v2009, %v2060
        %v2062 = vrot.slane %v2061, 2
        %v2063 = vadd.f32 %v2061, %v2062
        %v2064 = vrot.slane %v2063, 1
        %v2065 = vadd.f32 %v2063, %v2064
        %v2066 = vrot.slane %v2010, 4
        %v2067 = vadd.f32 %v2010, %v2066
        %v2068 = vrot.slane %v2067, 2
        %v2069 = vadd.f32 %v2067, %v2068
        %v2070 = vrot.slane %v2069, 1
        %v2071 = vadd.f32 %v2069, %v2070
        %v2072 = vrot.slane %v2011, 4
        %v2073 = vadd.f32 %v2011, %v2072
        %v2074 = vrot.slane %v2073, 2
        %v2075 = vadd.f32 %v2073, %v2074
        %v2076 = vrot.slane %v2075, 1
        %v2077 = vadd.f32 %v2075, %v2076
        %v2078 = vrot.slane %v2012, 4
        %v2079 = vadd.f32 %v2012, %v2078
        %v2080 = vrot.slane %v2079, 2
        %v2081 = vadd.f32 %v2079, %v2080
        %v2082 = vrot.slane %v2081, 1
        %v2083 = vadd.f32 %v2081, %v2082
        %v2084 = vrot.slane %v2013, 4
        %v2085 = vadd.f32 %v2013, %v2084
        %v2086 = vrot.slane %v2085, 2
        %v2087 = vadd.f32 %v2085, %v2086
        %v2088 = vrot.slane %v2087, 1
        %v2089 = vadd.f32 %v2087, %v2088
        %v2090 = vrot.slane %v2014, 4
        %v2091 = vadd.f32 %v2014, %v2090
        %v2092 = vrot.slane %v2091, 2
        %v2093 = vadd.f32 %v2091, %v2092
        %v2094 = vrot.slane %v2093, 1
        %v2095 = vadd.f32 %v2093, %v2094
        %v2096 = vrot.slane %v2015, 4
        %v2097 = vadd.f32 %v2015, %v2096
        %v2098 = vrot.slane %v2097, 2
        %v2099 = vadd.f32 %v2097, %v2098
        %v2100 = vrot.slane %v2099, 1
        %v2101 = vadd.f32 %v2099, %v2100
        %v2102 = vrot.slane %v2016, 4
        %v2103 = vadd.f32 %v2016, %v2102
        %v2104 = vrot.slane %v2103, 2
        %v2105 = vadd.f32 %v2103, %v2104
        %v2106 = vrot.slane %v2105, 1
        %v2107 = vadd.f32 %v2105, %v2106
        %v2108 = vrot.slane %v2017, 4
        %v2109 = vadd.f32 %v2017, %v2108
        %v2110 = vrot.slane %v2109, 2
        %v2111 = vadd.f32 %v2109, %v2110
        %v2112 = vrot.slane %v2111, 1
        %v2113 = vadd.f32 %v2111, %v2112
        %v2114 = vadd.f32 %v1794, %v2023
        %v2115 = vadd.f32 %v1795, %v2029
        %v2116 = vadd.f32 %v1796, %v2035
        %v2117 = vadd.f32 %v1797, %v2041
        %v2118 = vadd.f32 %v1798, %v2047
        %v2119 = vadd.f32 %v1799, %v2053
        %v2120 = vadd.f32 %v1800, %v2059
        %v2121 = vadd.f32 %v1801, %v2065
        %v2122 = vadd.f32 %v1802, %v2071
        %v2123 = vadd.f32 %v1803, %v2077
        %v2124 = vadd.f32 %v1804, %v2083
        %v2125 = vadd.f32 %v1805, %v2089
        %v2126 = vadd.f32 %v1806, %v2095
        %v2127 = vadd.f32 %v1807, %v2101
        %v2128 = vadd.f32 %v1808, %v2107
        %v2129 = vadd.f32 %v1809, %v2113
        %vm2130 = vcmp.le.f32.partialorder %v1954, 7.0
        %vm2131 = vcmp.le.f32.partialorder %v1955, 7.0
        %vm2132 = vcmp.le.f32.partialorder %v1956, 7.0
        %vm2133 = vcmp.le.f32.partialorder %v1957, 7.0
        %vm2134 = vcmp.le.f32.partialorder %v1958, 7.0
        %vm2135 = vcmp.le.f32.partialorder %v1959, 7.0
        %vm2136 = vcmp.le.f32.partialorder %v1960, 7.0
        %vm2137 = vcmp.le.f32.partialorder %v1961, 7.0
        %vm2138 = vcmp.le.f32.partialorder %v1962, 7.0
        %vm2139 = vcmp.le.f32.partialorder %v1963, 7.0
        %vm2140 = vcmp.le.f32.partialorder %v1964, 7.0
        %vm2141 = vcmp.le.f32.partialorder %v1965, 7.0
        %vm2142 = vcmp.le.f32.partialorder %v1966, 7.0
        %vm2143 = vcmp.le.f32.partialorder %v1967, 7.0
        %vm2144 = vcmp.le.f32.partialorder %v1968, 7.0
        %vm2145 = vcmp.le.f32.partialorder %v1969, 7.0
        %vm2146 = vcmp.ge.f32.partialorder %v2114, 8.0
        %vm2147 = vcmp.ge.f32.partialorder %v2115, 8.0
        %vm2148 = vcmp.ge.f32.partialorder %v2116, 8.0
        %vm2149 = vcmp.ge.f32.partialorder %v2117, 8.0
        %vm2150 = vcmp.ge.f32.partialorder %v2118, 8.0
        %vm2151 = vcmp.ge.f32.partialorder %v2119, 8.0
        %vm2152 = vcmp.ge.f32.partialorder %v2120, 8.0
        %vm2153 = vcmp.ge.f32.partialorder %v2121, 8.0
        %vm2154 = vcmp.ge.f32.partialorder %v2122, 8.0
        %vm2155 = vcmp.ge.f32.partialorder %v2123, 8.0
        %vm2156 = vcmp.ge.f32.partialorder %v2124, 8.0
        %vm2157 = vcmp.ge.f32.partialorder %v2125, 8.0
        %vm2158 = vcmp.ge.f32.partialorder %v2126, 8.0
        %vm2159 = vcmp.ge.f32.partialorder %v2127, 8.0
        %vm2160 = vcmp.ge.f32.partialorder %v2128, 8.0
        %vm2161 = vcmp.ge.f32.partialorder %v2129, 8.0
        %vm2162 = vmand %vm2130, %vm2146
        %vm2163 = vmand %vm2131, %vm2147
        %vm2164 = vmand %vm2132, %vm2148
        %vm2165 = vmand %vm2133, %vm2149
        %vm2166 = vmand %vm2134, %vm2150
        %vm2167 = vmand %vm2135, %vm2151
        %vm2168 = vmand %vm2136, %vm2152
        %vm2169 = vmand %vm2137, %vm2153
        %vm2170 = vmand %vm2138, %vm2154
        %vm2171 = vmand %vm2139, %vm2155
        %vm2172 = vmand %vm2140, %vm2156
        %vm2173 = vmand %vm2141, %vm2157
        %vm2174 = vmand %vm2142, %vm2158
        %vm2175 = vmand %vm2143, %vm2159
        %vm2176 = vmand %vm2144, %vm2160
        %vm2177 = vmand %vm2145, %vm2161
        %v2178 = vrot.slane %v1264, 1
        %v2179 = vrot.slane %v1264, 2
        %v2180 = vrot.slane %v1264, 3
        %v2181 = vrot.slane %v1264, 4
        %v2182 = vrot.slane %v1264, 5
        %v2183 = vrot.slane %v1264, 6
        %v2184 = vrot.slane %v1264, 7
        %v2185 = vrot.slane %v1265, 1
        %v2186 = vrot.slane %v1265, 2
        %v2187 = vrot.slane %v1265, 3
        %v2188 = vrot.slane %v1265, 4
        %v2189 = vrot.slane %v1265, 5
        %v2190 = vrot.slane %v1265, 6
        %v2191 = vrot.slane %v1265, 7
        %v2208 = vsel %vm2162, %v1264, -inf
        %v2209 = vsel %vm2163, %v2178, -inf
        %v2210 = vsel %vm2164, %v2179, -inf
        %v2211 = vsel %vm2165, %v2180, -inf
        %v2212 = vsel %vm2166, %v2181, -inf
        %v2213 = vsel %vm2167, %v2182, -inf
        %v2214 = vsel %vm2168, %v2183, -inf
        %v2215 = vsel %vm2169, %v2184, -inf
        %v2216 = vsel %vm2170, %v1265, -inf
        %v2217 = vsel %vm2171, %v2185, -inf
        %v2218 = vsel %vm2172, %v2186, -inf
        %v2219 = vsel %vm2173, %v2187, -inf
        %v2220 = vsel %vm2174, %v2188, -inf
        %v2221 = vsel %vm2175, %v2189, -inf
        %v2222 = vsel %vm2176, %v2190, -inf
        %v2223 = vsel %vm2177, %v2191, -inf
        %vm2224 = vcmask 1040384
        %v2225 = vsel %vm2224, %v2208, -inf
        %v2226 = vsel %vm2224, %v2209, -inf
        %v2227 = vsel %vm2224, %v2210, -inf
        %v2228 = vsel %vm2224, %v2211, -inf
        %v2229 = vsel %vm2224, %v2212, -inf
        %v2230 = vmax.f32 %v2225, %v2229
        %v2231 = vsel %vm2224, %v2213, -inf
        %v2232 = vmax.f32 %v2226, %v2231
        %v2233 = vsel %vm2224, %v2214, -inf
        %v2234 = vmax.f32 %v2227, %v2233
        %v2235 = vsel %vm2224, %v2215, -inf
        %v2236 = vmax.f32 %v2228, %v2235
        %v2237 = vsel %vm2224, %v2216, -inf
        %v2238 = vmax.f32 %v2230, %v2237
        %v2239 = vsel %vm2224, %v2217, -inf
        %v2240 = vmax.f32 %v2232, %v2239
        %v2241 = vsel %vm2224, %v2218, -inf
        %v2242 = vmax.f32 %v2234, %v2241
        %v2243 = vsel %vm2224, %v2219, -inf
        %v2244 = vmax.f32 %v2236, %v2243
        %v2245 = vsel %vm2224, %v2220, -inf
        %v2246 = vmax.f32 %v2238, %v2245
        %v2247 = vsel %vm2224, %v2221, -inf
        %v2248 = vmax.f32 %v2240, %v2247
        %v2249 = vsel %vm2224, %v2222, -inf
        %v2250 = vmax.f32 %v2242, %v2249
        %v2251 = vsel %vm2224, %v2223, -inf
        %v2252 = vmax.f32 %v2244, %v2251
        %v2253 = vmax.f32 %v2246, %v2248
        %v2254 = vmax.f32 %v2250, %v2252
        %v2255 = vmax.f32 %v2253, %v2254
        %s2256 = sld [smem:[#allocation2]]
        %v2257 = vstv %s2256
        %v2258 = vmul.f32 %v1264, %v2257
        %v2259 = vmul.f32 %v1265, %v2257
        %v2260 = vmax.f32 %v2258, %v2259
        %v2261 = vrot.slane %v2260, 4
        %v2262 = vmax.f32 %v2260, %v2261
        %v2263 = vrot.slane %v2262, 2
        %v2264 = vmax.f32 %v2262, %v2263
        %v2265 = vrot.slane %v2264, 1
        %v2266 = vmax.f32 %v2264, %v2265
        %v2267 = vsub.f32 %v2258, %v2266
        %v2268 = vsub.f32 %v2259, %v2266
        %v2269 = vmul.f32 %v2267, 1.442695
        %v2270 = vpow.pop %v2269
        %v2271 = vmul.f32 %v2268, 1.442695
        %v2272 = vpow.pop %v2271
        %v2273 = vadd.f32 %v2270, %v2272
        %v2274 = vrot.slane %v2273, 4
        %v2275 = vadd.f32 %v2273, %v2274
        %v2276 = vrot.slane %v2275, 2
        %v2277 = vadd.f32 %v2275, %v2276
        %v2278 = vrot.slane %v2277, 1
        %v2279 = vadd.f32 %v2277, %v2278
        %v2280 = vrcp.pop %v2279
        %v2281 = vmul.f32 %v2270, %v2280
        %v2282 = vmul.f32 %v2272, %v2280
        %v2283 = vmul.f32 %v2281, %v1264
        %v2284 = vmul.f32 %v2282, %v1265
        %v2285 = vadd.f32 %v2283, %v2284
        %v2286 = vrot.slane %v2285, 4
        %v2287 = vadd.f32 %v2285, %v2286
        %v2288 = vrot.slane %v2287, 2
        %v2289 = vadd.f32 %v2287, %v2288
        %v2290 = vrot.slane %v2289, 1
        %v2291 = vadd.f32 %v2289, %v2290
        %v2292 = vld [vmem:[#allocation14] sm:$0xff]
        %v2293 = vld [vmem:[#allocation14 + $0x8] sm:$0xff]
        %v2294 = vld [vmem:[#allocation14 + $0x10] sm:$0xff]
        %v2295 = vld [vmem:[#allocation14 + $0x18] sm:$0xff]
        %v2296 = vld [vmem:[#allocation14 + $0x20] sm:$0xff]
        %v2297 = vld [vmem:[#allocation14 + $0x28] sm:$0xff]
        %v2298 = vld [vmem:[#allocation14 + $0x30] sm:$0xff]
        %v2299 = vld [vmem:[#allocation14 + $0x38] sm:$0xff]
        %v2300 = vld [vmem:[#allocation14 + $0x40] sm:$0xff]
        %v2301 = vld [vmem:[#allocation14 + $0x48] sm:$0xff]
        %v2302 = vld [vmem:[#allocation14 + $0x50] sm:$0xff]
        %v2303 = vld [vmem:[#allocation14 + $0x58] sm:$0xff]
        %v2304 = vld [vmem:[#allocation14 + $0x60] sm:$0xff]
        %v2305 = vld [vmem:[#allocation14 + $0x68] sm:$0xff]
        %v2306 = vld [vmem:[#allocation14 + $0x70] sm:$0xff]
        %v2307 = vld [vmem:[#allocation14 + $0x78] sm:$0xff]
        %v2308 = vld [vmem:[#allocation14 + $0x80] sm:$0xff]
        %v2309 = vld [vmem:[#allocation14 + $0x88] sm:$0xff]
        %v2310 = vld [vmem:[#allocation14 + $0x90] sm:$0xff]
        %v2311 = vld [vmem:[#allocation14 + $0x98] sm:$0xff]
        %v2312 = vld [vmem:[#allocation14 + $0xa0] sm:$0xff]
        %v2313 = vld [vmem:[#allocation14 + $0xa8] sm:$0xff]
        %v2314 = vld [vmem:[#allocation14 + $0xb0] sm:$0xff]
        %v2315 = vld [vmem:[#allocation14 + $0xb8] sm:$0xff]
        %v2316 = vld [vmem:[#allocation14 + $0xc0] sm:$0xff]
        %v2317 = vld [vmem:[#allocation14 + $0xc8] sm:$0xff]
        %v2318 = vld [vmem:[#allocation14 + $0xd0] sm:$0xff]
        %v2319 = vld [vmem:[#allocation14 + $0xd8] sm:$0xff]
        %v2320 = vld [vmem:[#allocation14 + $0xe0] sm:$0xff]
        %v2321 = vld [vmem:[#allocation14 + $0xe8] sm:$0xff]
        %v2322 = vld [vmem:[#allocation14 + $0xf0] sm:$0xff]
        %v2323 = vld [vmem:[#allocation14 + $0xf8] sm:$0xff]
        %v2324 = vld [vmem:[#allocation14 + $0x100] sm:$0xff]
        %v2325 = vld [vmem:[#allocation14 + $0x108] sm:$0xff]
        %v2326 = vld [vmem:[#allocation14 + $0x110] sm:$0xff]
        %v2327 = vld [vmem:[#allocation14 + $0x118] sm:$0xff]
        %v2328 = vld [vmem:[#allocation14 + $0x120] sm:$0xff]
        %v2329 = vld [vmem:[#allocation14 + $0x128] sm:$0xff]
        %v2330 = vld [vmem:[#allocation14 + $0x130] sm:$0xff]
        %v2331 = vld [vmem:[#allocation14 + $0x138] sm:$0xff]
        %v2332 = vld [vmem:[#allocation14 + $0x140] sm:$0xff]
        %v2333 = vld [vmem:[#allocation14 + $0x148] sm:$0xff]
        %v2334 = vld [vmem:[#allocation14 + $0x150] sm:$0xff]
        %v2335 = vld [vmem:[#allocation14 + $0x158] sm:$0xff]
        %v2336 = vld [vmem:[#allocation14 + $0x160] sm:$0xff]
        %v2337 = vld [vmem:[#allocation14 + $0x168] sm:$0xff]
        %v2338 = vld [vmem:[#allocation14 + $0x170] sm:$0xff]
        %v2339 = vld [vmem:[#allocation14 + $0x178] sm:$0xff]
        %v2340 = vld [vmem:[#allocation14 + $0x180] sm:$0xff]
        %v2341 = vld [vmem:[#allocation14 + $0x188] sm:$0xff]
        %v2342 = vld [vmem:[#allocation14 + $0x190] sm:$0xff]
        %v2343 = vld [vmem:[#allocation14 + $0x198] sm:$0xff]
        %v2344 = vld [vmem:[#allocation14 + $0x1a0] sm:$0xff]
        %v2345 = vld [vmem:[#allocation14 + $0x1a8] sm:$0xff]
        %v2346 = vld [vmem:[#allocation14 + $0x1b0] sm:$0xff]
        %v2347 = vld [vmem:[#allocation14 + $0x1b8] sm:$0xff]
        %v2348 = vld [vmem:[#allocation14 + $0x1c0] sm:$0xff]
        %v2349 = vld [vmem:[#allocation14 + $0x1c8] sm:$0xff]
        %v2350 = vld [vmem:[#allocation14 + $0x1d0] sm:$0xff]
        %v2351 = vld [vmem:[#allocation14 + $0x1d8] sm:$0xff]
        %v2352 = vld [vmem:[#allocation14 + $0x1e0] sm:$0xff]
        %v2353 = vld [vmem:[#allocation14 + $0x1e8] sm:$0xff]
        %v2354 = vld [vmem:[#allocation14 + $0x1f0] sm:$0xff]
        %v2355 = vld [vmem:[#allocation14 + $0x1f8] sm:$0xff]
        %v2356 = vld [vmem:[#allocation14 + $0x200] sm:$0xff]
        %v2357 = vld [vmem:[#allocation14 + $0x208] sm:$0xff]
        %v2358 = vld [vmem:[#allocation14 + $0x210] sm:$0xff]
        %v2359 = vld [vmem:[#allocation14 + $0x218] sm:$0xff]
        %v2360 = vld [vmem:[#allocation14 + $0x220] sm:$0xff]
        %v2361 = vld [vmem:[#allocation14 + $0x228] sm:$0xff]
        %v2362 = vld [vmem:[#allocation14 + $0x230] sm:$0xff]
        %v2363 = vld [vmem:[#allocation14 + $0x238] sm:$0xff]
        %v2364 = vld [vmem:[#allocation14 + $0x240] sm:$0xff]
        %v2365 = vld [vmem:[#allocation14 + $0x248] sm:$0xff]
        %v2366 = vld [vmem:[#allocation14 + $0x250] sm:$0xff]
        %v2367 = vld [vmem:[#allocation14 + $0x258] sm:$0xff]
        %v2368 = vld [vmem:[#allocation14 + $0x260] sm:$0xff]
        %v2369 = vld [vmem:[#allocation14 + $0x268] sm:$0xff]
        %v2370 = vld [vmem:[#allocation14 + $0x270] sm:$0xff]
        %v2371 = vld [vmem:[#allocation14 + $0x278] sm:$0xff]
        %v2372 = vld [vmem:[#allocation14 + $0x280] sm:$0xff]
        %v2373 = vld [vmem:[#allocation14 + $0x288] sm:$0xff]
        %v2374 = vld [vmem:[#allocation14 + $0x290] sm:$0xff]
        %v2375 = vld [vmem:[#allocation14 + $0x298] sm:$0xff]
        %v2376 = vld [vmem:[#allocation14 + $0x2a0] sm:$0xff]
        %v2377 = vld [vmem:[#allocation14 + $0x2a8] sm:$0xff]
        %v2378 = vld [vmem:[#allocation14 + $0x2b0] sm:$0xff]
        %v2379 = vld [vmem:[#allocation14 + $0x2b8] sm:$0xff]
        %v2380 = vld [vmem:[#allocation14 + $0x2c0] sm:$0xff]
        %v2381 = vld [vmem:[#allocation14 + $0x2c8] sm:$0xff]
        %v2382 = vld [vmem:[#allocation14 + $0x2d0] sm:$0xff]
        %v2383 = vld [vmem:[#allocation14 + $0x2d8] sm:$0xff]
        %v2384 = vld [vmem:[#allocation14 + $0x2e0] sm:$0xff]
        %v2385 = vld [vmem:[#allocation14 + $0x2e8] sm:$0xff]
        %v2386 = vld [vmem:[#allocation14 + $0x2f0] sm:$0xff]
        %v2387 = vld [vmem:[#allocation14 + $0x2f8] sm:$0xff]
        %v2388 = vld [vmem:[#allocation14 + $0x300] sm:$0xff]
        %v2389 = vld [vmem:[#allocation14 + $0x308] sm:$0xff]
        %v2390 = vld [vmem:[#allocation14 + $0x310] sm:$0xff]
        %v2391 = vld [vmem:[#allocation14 + $0x318] sm:$0xff]
        %v2392 = vld [vmem:[#allocation14 + $0x320] sm:$0xff]
        %v2393 = vld [vmem:[#allocation14 + $0x328] sm:$0xff]
        %v2394 = vld [vmem:[#allocation14 + $0x330] sm:$0xff]
        %v2395 = vld [vmem:[#allocation14 + $0x338] sm:$0xff]
        %v2396 = vld [vmem:[#allocation14 + $0x340] sm:$0xff]
        %v2397 = vld [vmem:[#allocation14 + $0x348] sm:$0xff]
        %v2398 = vld [vmem:[#allocation14 + $0x350] sm:$0xff]
        %v2399 = vld [vmem:[#allocation14 + $0x358] sm:$0xff]
        %v2400 = vld [vmem:[#allocation14 + $0x360] sm:$0xff]
        %v2401 = vld [vmem:[#allocation14 + $0x368] sm:$0xff]
        %v2402 = vld [vmem:[#allocation14 + $0x370] sm:$0xff]
        %v2403 = vld [vmem:[#allocation14 + $0x378] sm:$0xff]
        %v2404 = vld [vmem:[#allocation14 + $0x380] sm:$0xff]
        %v2405 = vld [vmem:[#allocation14 + $0x388] sm:$0xff]
        %v2406 = vld [vmem:[#allocation14 + $0x390] sm:$0xff]
        %v2407 = vld [vmem:[#allocation14 + $0x398] sm:$0xff]
        %v2408 = vld [vmem:[#allocation14 + $0x3a0] sm:$0xff]
        %v2409 = vld [vmem:[#allocation14 + $0x3a8] sm:$0xff]
        %v2410 = vld [vmem:[#allocation14 + $0x3b0] sm:$0xff]
        %v2411 = vld [vmem:[#allocation14 + $0x3b8] sm:$0xff]
        %v2412 = vld [vmem:[#allocation14 + $0x3c0] sm:$0xff]
        %v2413 = vld [vmem:[#allocation14 + $0x3c8] sm:$0xff]
        %v2414 = vld [vmem:[#allocation14 + $0x3d0] sm:$0xff]
        %v2415 = vld [vmem:[#allocation14 + $0x3d8] sm:$0xff]
        %v2416 = vld [vmem:[#allocation14 + $0x3e0] sm:$0xff]
        %v2417 = vld [vmem:[#allocation14 + $0x3e8] sm:$0xff]
        %v2418 = vld [vmem:[#allocation14 + $0x3f0] sm:$0xff]
        %v2419 = vld [vmem:[#allocation14 + $0x3f8] sm:$0xff]
        %v2420 = vld [vmem:[#allocation14 + $0x400] sm:$0xff]
        %v2421 = vld [vmem:[#allocation14 + $0x408] sm:$0xff]
        %v2422 = vld [vmem:[#allocation14 + $0x410] sm:$0xff]
        %v2423 = vld [vmem:[#allocation14 + $0x418] sm:$0xff]
        %v2424 = vld [vmem:[#allocation14 + $0x420] sm:$0xff]
        %v2425 = vld [vmem:[#allocation14 + $0x428] sm:$0xff]
        %v2426 = vld [vmem:[#allocation14 + $0x430] sm:$0xff]
        %v2427 = vld [vmem:[#allocation14 + $0x438] sm:$0xff]
        %v2428 = vld [vmem:[#allocation14 + $0x440] sm:$0xff]
        %v2429 = vld [vmem:[#allocation14 + $0x448] sm:$0xff]
        %v2430 = vld [vmem:[#allocation14 + $0x450] sm:$0xff]
        %v2431 = vld [vmem:[#allocation14 + $0x458] sm:$0xff]
        %v2432 = vld [vmem:[#allocation14 + $0x460] sm:$0xff]
        %v2433 = vld [vmem:[#allocation14 + $0x468] sm:$0xff]
        %v2434 = vld [vmem:[#allocation14 + $0x470] sm:$0xff]
        %v2435 = vld [vmem:[#allocation14 + $0x478] sm:$0xff]
        %v2436 = vld [vmem:[#allocation14 + $0x480] sm:$0xff]
        %v2437 = vld [vmem:[#allocation14 + $0x488] sm:$0xff]
        %v2438 = vld [vmem:[#allocation14 + $0x490] sm:$0xff]
        %v2439 = vld [vmem:[#allocation14 + $0x498] sm:$0xff]
        %v2440 = vld [vmem:[#allocation14 + $0x4a0] sm:$0xff]
        %v2441 = vld [vmem:[#allocation14 + $0x4a8] sm:$0xff]
        %v2442 = vld [vmem:[#allocation14 + $0x4b0] sm:$0xff]
        %v2443 = vld [vmem:[#allocation14 + $0x4b8] sm:$0xff]
        %v2444 = vld [vmem:[#allocation14 + $0x4c0] sm:$0xff]
        %v2445 = vld [vmem:[#allocation14 + $0x4c8] sm:$0xff]
        %v2446 = vld [vmem:[#allocation14 + $0x4d0] sm:$0xff]
        %v2447 = vld [vmem:[#allocation14 + $0x4d8] sm:$0xff]
        %v2448 = vld [vmem:[#allocation14 + $0x4e0] sm:$0xff]
        %v2449 = vld [vmem:[#allocation14 + $0x4e8] sm:$0xff]
        %v2450 = vld [vmem:[#allocation14 + $0x4f0] sm:$0xff]
        %v2451 = vld [vmem:[#allocation14 + $0x4f8] sm:$0xff]
        %v2452 = vld [vmem:[#allocation14 + $0x500] sm:$0xff]
        %v2453 = vld [vmem:[#allocation14 + $0x508] sm:$0xff]
        %v2454 = vld [vmem:[#allocation14 + $0x510] sm:$0xff]
        %v2455 = vld [vmem:[#allocation14 + $0x518] sm:$0xff]
        %v2456 = vld [vmem:[#allocation14 + $0x520] sm:$0xff]
        %v2457 = vld [vmem:[#allocation14 + $0x528] sm:$0xff]
        %v2458 = vld [vmem:[#allocation14 + $0x530] sm:$0xff]
        %v2459 = vld [vmem:[#allocation14 + $0x538] sm:$0xff]
        %v2460 = vld [vmem:[#allocation14 + $0x540] sm:$0xff]
        %v2461 = vld [vmem:[#allocation14 + $0x548] sm:$0xff]
        %v2462 = vld [vmem:[#allocation14 + $0x550] sm:$0xff]
        %v2463 = vld [vmem:[#allocation14 + $0x558] sm:$0xff]
        %v2464 = vld [vmem:[#allocation14 + $0x560] sm:$0xff]
        %v2465 = vld [vmem:[#allocation14 + $0x568] sm:$0xff]
        %v2466 = vld [vmem:[#allocation14 + $0x570] sm:$0xff]
        %v2467 = vld [vmem:[#allocation14 + $0x578] sm:$0xff]
        %v2468 = vld [vmem:[#allocation14 + $0x580] sm:$0xff]
        %v2469 = vld [vmem:[#allocation14 + $0x588] sm:$0xff]
        %v2470 = vld [vmem:[#allocation14 + $0x590] sm:$0xff]
        %v2471 = vld [vmem:[#allocation14 + $0x598] sm:$0xff]
        %v2472 = vld [vmem:[#allocation14 + $0x5a0] sm:$0xff]
        %v2473 = vld [vmem:[#allocation14 + $0x5a8] sm:$0xff]
        %v2474 = vld [vmem:[#allocation14 + $0x5b0] sm:$0xff]
        %v2475 = vld [vmem:[#allocation14 + $0x5b8] sm:$0xff]
        %v2476 = vld [vmem:[#allocation14 + $0x5c0] sm:$0xff]
        %v2477 = vld [vmem:[#allocation14 + $0x5c8] sm:$0xff]
        %v2478 = vld [vmem:[#allocation14 + $0x5d0] sm:$0xff]
        %v2479 = vld [vmem:[#allocation14 + $0x5d8] sm:$0xff]
        %v2480 = vld [vmem:[#allocation14 + $0x5e0] sm:$0xff]
        %v2481 = vld [vmem:[#allocation14 + $0x5e8] sm:$0xff]
        %v2482 = vld [vmem:[#allocation14 + $0x5f0] sm:$0xff]
        %v2483 = vld [vmem:[#allocation14 + $0x5f8] sm:$0xff]
        %v2484 = vld [vmem:[%s10] sm:$0x1]
        %2485 = vmatprep.subr.mxu0 0.0
        %2486 = vmatpush1.msra.mxu0 %v2292
        %2487 = vmatprep.subr.mxu0 0.0
        %2488 = vmatpush1.msra.mxu0 %v2293
        %2489 = vmatprep.subr.mxu0 0.0
        %2490 = vmatpush1.msra.mxu0 %v2294
        %2491 = vmatprep.subr.mxu0 0.0
        %2492 = vmatpush1.msra.mxu0 %v2295
        %2493 = vmatprep.subr.mxu0 0.0
        %2494 = vmatpush1.msra.mxu0 %v2296
        %2495 = vmatprep.subr.mxu0 0.0
        %2496 = vmatpush1.msra.mxu0 %v2297
        %2497 = vmatprep.subr.mxu0 0.0
        %2498 = vmatpush1.msra.mxu0 %v2298
        %2499 = vmatprep.subr.mxu0 0.0
        %2500 = vmatpush1.msra.mxu0 %v2299
        %2501 = vmatprep.subr.mxu0 0.0
        %2502 = vmatpush1.msra.mxu0 %v2300
        %2503 = vmatprep.subr.mxu0 0.0
        %2504 = vmatpush1.msra.mxu0 %v2301
        %2505 = vmatprep.subr.mxu0 0.0
        %2506 = vmatpush1.msra.mxu0 %v2302
        %2507 = vmatprep.subr.mxu0 0.0
        %2508 = vmatpush1.msra.mxu0 %v2303
        %2509 = vmatprep.subr.mxu0 0.0
        %2510 = vmatpush1.msra.mxu0 %v2304
        %2511 = vmatprep.subr.mxu0 0.0
        %2512 = vmatpush1.msra.mxu0 %v2305
        %2513 = vmatprep.subr.mxu0 0.0
        %2514 = vmatpush1.msra.mxu0 %v2306
        %2515 = vmatprep.subr.mxu0 0.0
        %2516 = vmatpush1.msra.mxu0 %v2307
        %2517 = vmatprep.subr.mxu0 0.0
        %2518 = vmatpush1.msra.mxu0 %v2308
        %2519 = vmatprep.subr.mxu0 0.0
        %2520 = vmatpush1.msra.mxu0 %v2309
        %2521 = vmatprep.subr.mxu0 0.0
        %2522 = vmatpush1.msra.mxu0 %v2310
        %2523 = vmatprep.subr.mxu0 0.0
        %2524 = vmatpush1.msra.mxu0 %v2311
        %2525 = vmatprep.subr.mxu0 0.0
        %2526 = vmatpush1.msra.mxu0 %v2312
        %2527 = vmatprep.subr.mxu0 0.0
        %2528 = vmatpush1.msra.mxu0 %v2313
        %2529 = vmatprep.subr.mxu0 0.0
        %2530 = vmatpush1.msra.mxu0 %v2314
        %2531 = vmatprep.subr.mxu0 0.0
        %2532 = vmatpush1.msra.mxu0 %v2315
        %2533 = vmatprep.subr.mxu0 0.0
        %2534 = vmatpush1.msra.mxu0 %v2316
        %2535 = vmatprep.subr.mxu0 0.0
        %2536 = vmatpush1.msra.mxu0 %v2317
        %2537 = vmatprep.subr.mxu0 0.0
        %2538 = vmatpush1.msra.mxu0 %v2318
        %2539 = vmatprep.subr.mxu0 0.0
        %2540 = vmatpush1.msra.mxu0 %v2319
        %2541 = vmatprep.subr.mxu0 0.0
        %2542 = vmatpush1.msra.mxu0 %v2320
        %2543 = vmatprep.subr.mxu0 0.0
        %2544 = vmatpush1.msra.mxu0 %v2321
        %2545 = vmatprep.subr.mxu0 0.0
        %2546 = vmatpush1.msra.mxu0 %v2322
        %2547 = vmatprep.subr.mxu0 0.0
        %2548 = vmatpush1.msra.mxu0 %v2323
        %2549 = vmatprep.mubr.f32.mxu0 %v1273
        %2550 = vmatmul.mubr.f32.gmra.mrb[0].mxu0 %v1272
        %v2551 = vpop.f32.mrb[0].mxu0
        %v2552 = vadd.f32 %v2484, %v2551
        %v2553 = vpop.f32.mrb[0].mxu0
        %2554 = vdwg.mxu0
        %2555 = vmatprep.subr.mxu0 0.0
        %2556 = vmatpush1.msra.mxu0 %v2324
        %2557 = vmatprep.subr.mxu0 0.0
        %2558 = vmatpush1.msra.mxu0 %v2325
        %2559 = vmatprep.subr.mxu0 0.0
        %2560 = vmatpush1.msra.mxu0 %v2326
        %2561 = vmatprep.subr.mxu0 0.0
        %2562 = vmatpush1.msra.mxu0 %v2327
        %2563 = vmatprep.subr.mxu0 0.0
        %2564 = vmatpush1.msra.mxu0 %v2328
        %2565 = vmatprep.subr.mxu0 0.0
        %2566 = vmatpush1.msra.mxu0 %v2329
        %2567 = vmatprep.subr.mxu0 0.0
        %2568 = vmatpush1.msra.mxu0 %v2330
        %2569 = vmatprep.subr.mxu0 0.0
        %2570 = vmatpush1.msra.mxu0 %v2331
        %2571 = vmatprep.subr.mxu0 0.0
        %2572 = vmatpush1.msra.mxu0 %v2332
        %2573 = vmatprep.subr.mxu0 0.0
        %2574 = vmatpush1.msra.mxu0 %v2333
        %2575 = vmatprep.subr.mxu0 0.0
        %2576 = vmatpush1.msra.mxu0 %v2334
        %2577 = vmatprep.subr.mxu0 0.0
        %2578 = vmatpush1.msra.mxu0 %v2335
        %2579 = vmatprep.subr.mxu0 0.0
        %2580 = vmatpush1.msra.mxu0 %v2336
        %2581 = vmatprep.subr.mxu0 0.0
        %2582 = vmatpush1.msra.mxu0 %v2337
        %2583 = vmatprep.subr.mxu0 0.0
        %2584 = vmatpush1.msra.mxu0 %v2338
        %2585 = vmatprep.subr.mxu0 0.0
        %2586 = vmatpush1.msra.mxu0 %v2339
        %2587 = vmatprep.subr.mxu0 0.0
        %2588 = vmatpush1.msra.mxu0 %v2340
        %2589 = vmatprep.subr.mxu0 0.0
        %2590 = vmatpush1.msra.mxu0 %v2341
        %2591 = vmatprep.subr.mxu0 0.0
        %2592 = vmatpush1.msra.mxu0 %v2342
        %2593 = vmatprep.subr.mxu0 0.0
        %2594 = vmatpush1.msra.mxu0 %v2343
        %2595 = vmatprep.subr.mxu0 0.0
        %2596 = vmatpush1.msra.mxu0 %v2344
        %2597 = vmatprep.subr.mxu0 0.0
        %2598 = vmatpush1.msra.mxu0 %v2345
        %2599 = vmatprep.subr.mxu0 0.0
        %2600 = vmatpush1.msra.mxu0 %v2346
        %2601 = vmatprep.subr.mxu0 0.0
        %2602 = vmatpush1.msra.mxu0 %v2347
        %2603 = vmatprep.subr.mxu0 0.0
        %2604 = vmatpush1.msra.mxu0 %v2348
        %2605 = vmatprep.subr.mxu0 0.0
        %2606 = vmatpush1.msra.mxu0 %v2349
        %2607 = vmatprep.subr.mxu0 0.0
        %2608 = vmatpush1.msra.mxu0 %v2350
        %2609 = vmatprep.subr.mxu0 0.0
        %2610 = vmatpush1.msra.mxu0 %v2351
        %2611 = vmatprep.subr.mxu0 0.0
        %2612 = vmatpush1.msra.mxu0 %v2352
        %2613 = vmatprep.subr.mxu0 0.0
        %2614 = vmatpush1.msra.mxu0 %v2353
        %2615 = vmatprep.subr.mxu0 0.0
        %2616 = vmatpush1.msra.mxu0 %v2354
        %2617 = vmatprep.subr.mxu0 0.0
        %2618 = vmatpush1.msra.mxu0 %v2355
        %2619 = vmatprep.mubr.f32.mxu0 %v1295
        %2620 = vmatmul.mubr.f32.gmra.mrb[0].mxu0 %v2255
        %v2621 = vpop.f32.mrb[0].mxu0
        %v2622 = vadd.f32 %v2552, %v2621
        %v2623 = vpop.f32.mrb[0].mxu0
        %2624 = vdwg.mxu0
        %2625 = vmatprep.subr.mxu0 0.0
        %2626 = vmatpush1.msra.mxu0 %v2356
        %2627 = vmatprep.subr.mxu0 0.0
        %2628 = vmatpush1.msra.mxu0 %v2357
        %2629 = vmatprep.subr.mxu0 0.0
        %2630 = vmatpush1.msra.mxu0 %v2358
        %2631 = vmatprep.subr.mxu0 0.0
        %2632 = vmatpush1.msra.mxu0 %v2359
        %2633 = vmatprep.subr.mxu0 0.0
        %2634 = vmatpush1.msra.mxu0 %v2360
        %2635 = vmatprep.subr.mxu0 0.0
        %2636 = vmatpush1.msra.mxu0 %v2361
        %2637 = vmatprep.subr.mxu0 0.0
        %2638 = vmatpush1.msra.mxu0 %v2362
        %2639 = vmatprep.subr.mxu0 0.0
        %2640 = vmatpush1.msra.mxu0 %v2363
        %2641 = vmatprep.subr.mxu0 0.0
        %2642 = vmatpush1.msra.mxu0 %v2364
        %2643 = vmatprep.subr.mxu0 0.0
        %2644 = vmatpush1.msra.mxu0 %v2365
        %2645 = vmatprep.subr.mxu0 0.0
        %2646 = vmatpush1.msra.mxu0 %v2366
        %2647 = vmatprep.subr.mxu0 0.0
        %2648 = vmatpush1.msra.mxu0 %v2367
        %2649 = vmatprep.subr.mxu0 0.0
        %2650 = vmatpush1.msra.mxu0 %v2368
        %2651 = vmatprep.subr.mxu0 0.0
        %2652 = vmatpush1.msra.mxu0 %v2369
        %2653 = vmatprep.subr.mxu0 0.0
        %2654 = vmatpush1.msra.mxu0 %v2370
        %2655 = vmatprep.subr.mxu0 0.0
        %2656 = vmatpush1.msra.mxu0 %v2371
        %2657 = vmatprep.subr.mxu0 0.0
        %2658 = vmatpush1.msra.mxu0 %v2372
        %2659 = vmatprep.subr.mxu0 0.0
        %2660 = vmatpush1.msra.mxu0 %v2373
        %2661 = vmatprep.subr.mxu0 0.0
        %2662 = vmatpush1.msra.mxu0 %v2374
        %2663 = vmatprep.subr.mxu0 0.0
        %2664 = vmatpush1.msra.mxu0 %v2375
        %2665 = vmatprep.subr.mxu0 0.0
        %2666 = vmatpush1.msra.mxu0 %v2376
        %2667 = vmatprep.subr.mxu0 0.0
        %2668 = vmatpush1.msra.mxu0 %v2377
        %2669 = vmatprep.subr.mxu0 0.0
        %2670 = vmatpush1.msra.mxu0 %v2378
        %2671 = vmatprep.subr.mxu0 0.0
        %2672 = vmatpush1.msra.mxu0 %v2379
        %2673 = vmatprep.subr.mxu0 0.0
        %2674 = vmatpush1.msra.mxu0 %v2380
        %2675 = vmatprep.subr.mxu0 0.0
        %2676 = vmatpush1.msra.mxu0 %v2381
        %2677 = vmatprep.subr.mxu0 0.0
        %2678 = vmatpush1.msra.mxu0 %v2382
        %2679 = vmatprep.subr.mxu0 0.0
        %2680 = vmatpush1.msra.mxu0 %v2383
        %2681 = vmatprep.subr.mxu0 0.0
        %2682 = vmatpush1.msra.mxu0 %v2384
        %2683 = vmatprep.subr.mxu0 0.0
        %2684 = vmatpush1.msra.mxu0 %v2385
        %2685 = vmatprep.subr.mxu0 0.0
        %2686 = vmatpush1.msra.mxu0 %v2386
        %2687 = vmatprep.subr.mxu0 0.0
        %2688 = vmatpush1.msra.mxu0 %v2387
        %2689 = vmatprep.mubr.f32.mxu0 %v1309
        %2690 = vmatmul.mubr.f32.gmra.mrb[0].mxu0 %v1302
        %v2691 = vpop.f32.mrb[0].mxu0
        %v2692 = vadd.f32 %v2622, %v2691
        %v2693 = vpop.f32.mrb[0].mxu0
        %2694 = vdwg.mxu0
        %2695 = vmatprep.subr.mxu0 0.0
        %2696 = vmatpush1.msra.mxu0 %v2388
        %2697 = vmatprep.subr.mxu0 0.0
        %2698 = vmatpush1.msra.mxu0 %v2389
        %2699 = vmatprep.subr.mxu0 0.0
        %2700 = vmatpush1.msra.mxu0 %v2390
        %2701 = vmatprep.subr.mxu0 0.0
        %2702 = vmatpush1.msra.mxu0 %v2391
        %2703 = vmatprep.subr.mxu0 0.0
        %2704 = vmatpush1.msra.mxu0 %v2392
        %2705 = vmatprep.subr.mxu0 0.0
        %2706 = vmatpush1.msra.mxu0 %v2393
        %2707 = vmatprep.subr.mxu0 0.0
        %2708 = vmatpush1.msra.mxu0 %v2394
        %2709 = vmatprep.subr.mxu0 0.0
        %2710 = vmatpush1.msra.mxu0 %v2395
        %2711 = vmatprep.subr.mxu0 0.0
        %2712 = vmatpush1.msra.mxu0 %v2396
        %2713 = vmatprep.subr.mxu0 0.0
        %2714 = vmatpush1.msra.mxu0 %v2397
        %2715 = vmatprep.subr.mxu0 0.0
        %2716 = vmatpush1.msra.mxu0 %v2398
        %2717 = vmatprep.subr.mxu0 0.0
        %2718 = vmatpush1.msra.mxu0 %v2399
        %2719 = vmatprep.subr.mxu0 0.0
        %2720 = vmatpush1.msra.mxu0 %v2400
        %2721 = vmatprep.subr.mxu0 0.0
        %2722 = vmatpush1.msra.mxu0 %v2401
        %2723 = vmatprep.subr.mxu0 0.0
        %2724 = vmatpush1.msra.mxu0 %v2402
        %2725 = vmatprep.subr.mxu0 0.0
        %2726 = vmatpush1.msra.mxu0 %v2403
        %2727 = vmatprep.subr.mxu0 0.0
        %2728 = vmatpush1.msra.mxu0 %v2404
        %2729 = vmatprep.subr.mxu0 0.0
        %2730 = vmatpush1.msra.mxu0 %v2405
        %2731 = vmatprep.subr.mxu0 0.0
        %2732 = vmatpush1.msra.mxu0 %v2406
        %2733 = vmatprep.subr.mxu0 0.0
        %2734 = vmatpush1.msra.mxu0 %v2407
        %2735 = vmatprep.subr.mxu0 0.0
        %2736 = vmatpush1.msra.mxu0 %v2408
        %2737 = vmatprep.subr.mxu0 0.0
        %2738 = vmatpush1.msra.mxu0 %v2409
        %2739 = vmatprep.subr.mxu0 0.0
        %2740 = vmatpush1.msra.mxu0 %v2410
        %2741 = vmatprep.subr.mxu0 0.0
        %2742 = vmatpush1.msra.mxu0 %v2411
        %2743 = vmatprep.subr.mxu0 0.0
        %2744 = vmatpush1.msra.mxu0 %v2412
        %2745 = vmatprep.subr.mxu0 0.0
        %2746 = vmatpush1.msra.mxu0 %v2413
        %2747 = vmatprep.subr.mxu0 0.0
        %2748 = vmatpush1.msra.mxu0 %v2414
        %2749 = vmatprep.subr.mxu0 0.0
        %2750 = vmatpush1.msra.mxu0 %v2415
        %2751 = vmatprep.subr.mxu0 0.0
        %2752 = vmatpush1.msra.mxu0 %v2416
        %2753 = vmatprep.subr.mxu0 0.0
        %2754 = vmatpush1.msra.mxu0 %v2417
        %2755 = vmatprep.subr.mxu0 0.0
        %2756 = vmatpush1.msra.mxu0 %v2418
        %2757 = vmatprep.subr.mxu0 0.0
        %2758 = vmatpush1.msra.mxu0 %v2419
        %2759 = vmatprep.mubr.f32.mxu0 %v722
        %2760 = vmatmul.mubr.f32.gmra.mrb[0].mxu0 %v2291
        %v2761 = vpop.f32.mrb[0].mxu0
        %v2762 = vadd.f32 %v2692, %v2761
        %v2763 = vpop.f32.mrb[0].mxu0
        %2764 = vdwg.mxu0
        %2765 = vmatprep.subr.mxu0 0.0
        %2766 = vmatpush1.msra.mxu0 %v2420
        %2767 = vmatprep.subr.mxu0 0.0
        %2768 = vmatpush1.msra.mxu0 %v2421
        %2769 = vmatprep.subr.mxu0 0.0
        %2770 = vmatpush1.msra.mxu0 %v2422
        %2771 = vmatprep.subr.mxu0 0.0
        %2772 = vmatpush1.msra.mxu0 %v2423
        %2773 = vmatprep.subr.mxu0 0.0
        %2774 = vmatpush1.msra.mxu0 %v2424
        %2775 = vmatprep.subr.mxu0 0.0
        %2776 = vmatpush1.msra.mxu0 %v2425
        %2777 = vmatprep.subr.mxu0 0.0
        %2778 = vmatpush1.msra.mxu0 %v2426
        %2779 = vmatprep.subr.mxu0 0.0
        %2780 = vmatpush1.msra.mxu0 %v2427
        %2781 = vmatprep.subr.mxu0 0.0
        %2782 = vmatpush1.msra.mxu0 %v2428
        %2783 = vmatprep.subr.mxu0 0.0
        %2784 = vmatpush1.msra.mxu0 %v2429
        %2785 = vmatprep.subr.mxu0 0.0
        %2786 = vmatpush1.msra.mxu0 %v2430
        %2787 = vmatprep.subr.mxu0 0.0
        %2788 = vmatpush1.msra.mxu0 %v2431
        %2789 = vmatprep.subr.mxu0 0.0
        %2790 = vmatpush1.msra.mxu0 %v2432
        %2791 = vmatprep.subr.mxu0 0.0
        %2792 = vmatpush1.msra.mxu0 %v2433
        %2793 = vmatprep.subr.mxu0 0.0
        %2794 = vmatpush1.msra.mxu0 %v2434
        %2795 = vmatprep.subr.mxu0 0.0
        %2796 = vmatpush1.msra.mxu0 %v2435
        %2797 = vmatprep.subr.mxu0 0.0
        %2798 = vmatpush1.msra.mxu0 %v2436
        %2799 = vmatprep.subr.mxu0 0.0
        %2800 = vmatpush1.msra.mxu0 %v2437
        %2801 = vmatprep.subr.mxu0 0.0
        %2802 = vmatpush1.msra.mxu0 %v2438
        %2803 = vmatprep.subr.mxu0 0.0
        %2804 = vmatpush1.msra.mxu0 %v2439
        %2805 = vmatprep.subr.mxu0 0.0
        %2806 = vmatpush1.msra.mxu0 %v2440
        %2807 = vmatprep.subr.mxu0 0.0
        %2808 = vmatpush1.msra.mxu0 %v2441
        %2809 = vmatprep.subr.mxu0 0.0
        %2810 = vmatpush1.msra.mxu0 %v2442
        %2811 = vmatprep.subr.mxu0 0.0
        %2812 = vmatpush1.msra.mxu0 %v2443
        %2813 = vmatprep.subr.mxu0 0.0
        %2814 = vmatpush1.msra.mxu0 %v2444
        %2815 = vmatprep.subr.mxu0 0.0
        %2816 = vmatpush1.msra.mxu0 %v2445
        %2817 = vmatprep.subr.mxu0 0.0
        %2818 = vmatpush1.msra.mxu0 %v2446
        %2819 = vmatprep.subr.mxu0 0.0
        %2820 = vmatpush1.msra.mxu0 %v2447
        %2821 = vmatprep.subr.mxu0 0.0
        %2822 = vmatpush1.msra.mxu0 %v2448
        %2823 = vmatprep.subr.mxu0 0.0
        %2824 = vmatpush1.msra.mxu0 %v2449
        %2825 = vmatprep.subr.mxu0 0.0
        %2826 = vmatpush1.msra.mxu0 %v2450
        %2827 = vmatprep.subr.mxu0 0.0
        %2828 = vmatpush1.msra.mxu0 %v2451
        %2829 = vmatprep.mubr.f32.mxu0 %v724
        %2830 = vmatmul.mubr.f32.gmra.mrb[0].mxu0 %v723
        %v2831 = vpop.f32.mrb[0].mxu0
        %v2832 = vadd.f32 %v2762, %v2831
        %v2833 = vpop.f32.mrb[0].mxu0
        %2834 = vdwg.mxu0
        %2835 = vmatprep.subr.mxu0 0.0
        %2836 = vmatpush1.msra.mxu0 %v2452
        %2837 = vmatprep.subr.mxu0 0.0
        %2838 = vmatpush1.msra.mxu0 %v2453
        %2839 = vmatprep.subr.mxu0 0.0
        %2840 = vmatpush1.msra.mxu0 %v2454
        %2841 = vmatprep.subr.mxu0 0.0
        %2842 = vmatpush1.msra.mxu0 %v2455
        %2843 = vmatprep.subr.mxu0 0.0
        %2844 = vmatpush1.msra.mxu0 %v2456
        %2845 = vmatprep.subr.mxu0 0.0
        %2846 = vmatpush1.msra.mxu0 %v2457
        %2847 = vmatprep.subr.mxu0 0.0
        %2848 = vmatpush1.msra.mxu0 %v2458
        %2849 = vmatprep.subr.mxu0 0.0
        %2850 = vmatpush1.msra.mxu0 %v2459
        %2851 = vmatprep.subr.mxu0 0.0
        %2852 = vmatpush1.msra.mxu0 %v2460
        %2853 = vmatprep.subr.mxu0 0.0
        %2854 = vmatpush1.msra.mxu0 %v2461
        %2855 = vmatprep.subr.mxu0 0.0
        %2856 = vmatpush1.msra.mxu0 %v2462
        %2857 = vmatprep.subr.mxu0 0.0
        %2858 = vmatpush1.msra.mxu0 %v2463
        %2859 = vmatprep.subr.mxu0 0.0
        %2860 = vmatpush1.msra.mxu0 %v2464
        %2861 = vmatprep.subr.mxu0 0.0
        %2862 = vmatpush1.msra.mxu0 %v2465
        %2863 = vmatprep.subr.mxu0 0.0
        %2864 = vmatpush1.msra.mxu0 %v2466
        %2865 = vmatprep.subr.mxu0 0.0
        %2866 = vmatpush1.msra.mxu0 %v2467
        %2867 = vmatprep.subr.mxu0 0.0
        %2868 = vmatpush1.msra.mxu0 %v2468
        %2869 = vmatprep.subr.mxu0 0.0
        %2870 = vmatpush1.msra.mxu0 %v2469
        %2871 = vmatprep.subr.mxu0 0.0
        %2872 = vmatpush1.msra.mxu0 %v2470
        %2873 = vmatprep.subr.mxu0 0.0
        %2874 = vmatpush1.msra.mxu0 %v2471
        %2875 = vmatprep.subr.mxu0 0.0
        %2876 = vmatpush1.msra.mxu0 %v2472
        %2877 = vmatprep.subr.mxu0 0.0
        %2878 = vmatpush1.msra.mxu0 %v2473
        %2879 = vmatprep.subr.mxu0 0.0
        %2880 = vmatpush1.msra.mxu0 %v2474
        %2881 = vmatprep.subr.mxu0 0.0
        %2882 = vmatpush1.msra.mxu0 %v2475
        %2883 = vmatprep.subr.mxu0 0.0
        %2884 = vmatpush1.msra.mxu0 %v2476
        %2885 = vmatprep.subr.mxu0 0.0
        %2886 = vmatpush1.msra.mxu0 %v2477
        %2887 = vmatprep.subr.mxu0 0.0
        %2888 = vmatpush1.msra.mxu0 %v2478
        %2889 = vmatprep.subr.mxu0 0.0
        %2890 = vmatpush1.msra.mxu0 %v2479
        %2891 = vmatprep.subr.mxu0 0.0
        %2892 = vmatpush1.msra.mxu0 %v2480
        %2893 = vmatprep.subr.mxu0 0.0
        %2894 = vmatpush1.msra.mxu0 %v2481
        %2895 = vmatprep.subr.mxu0 0.0
        %2896 = vmatpush1.msra.mxu0 %v2482
        %2897 = vmatprep.subr.mxu0 0.0
        %2898 = vmatpush1.msra.mxu0 %v2483
        %2899 = vmatprep.mubr.f32.mxu0 %v726
        %2900 = vmatmul.mubr.f32.gmra.mrb[0].mxu0 %v725
        %v2901 = vpop.f32.mrb[0].mxu0
        %v2902 = vadd.f32 %v2832, %v2901
        %v2903 = vpop.f32.mrb[0].mxu0
        %2904 = vdwg.mxu0
        %v2905 = vmax.f32 %v2902, 0.0
        %v2906 = vld [vmem:[#allocation15] sm:$0xff]
        %v2907 = vld [vmem:[#allocation15 + $0x8] sm:$0xff]
        %v2908 = vld [vmem:[#allocation15 + $0x10] sm:$0xff]
        %v2909 = vld [vmem:[#allocation15 + $0x18] sm:$0xff]
        %v2910 = vld [vmem:[#allocation15 + $0x20] sm:$0xff]
        %v2911 = vld [vmem:[#allocation15 + $0x28] sm:$0xff]
        %v2912 = vld [vmem:[#allocation15 + $0x30] sm:$0xff]
        %v2913 = vld [vmem:[#allocation15 + $0x38] sm:$0xff]
        %v2914 = vld [vmem:[#allocation15 + $0x40] sm:$0xff]
        %v2915 = vld [vmem:[#allocation15 + $0x48] sm:$0xff]
        %v2916 = vld [vmem:[#allocation15 + $0x50] sm:$0xff]
        %v2917 = vld [vmem:[#allocation15 + $0x58] sm:$0xff]
        %v2918 = vld [vmem:[#allocation15 + $0x60] sm:$0xff]
        %v2919 = vld [vmem:[#allocation15 + $0x68] sm:$0xff]
        %v2920 = vld [vmem:[#allocation15 + $0x70] sm:$0xff]
        %v2921 = vld [vmem:[#allocation15 + $0x78] sm:$0xff]
        %v2922 = vld [vmem:[%s12] sm:$0x1]
        %2923 = vmatprep.subr.mxu0 0.0
        %2924 = vmatpush1.msra.mxu0 %v2906
        %2925 = vmatprep.subr.mxu0 0.0
        %2926 = vmatpush1.msra.mxu0 %v2907
        %2927 = vmatprep.subr.mxu0 0.0
        %2928 = vmatpush1.msra.mxu0 %v2908
        %2929 = vmatprep.subr.mxu0 0.0
        %2930 = vmatpush1.msra.mxu0 %v2909
        %2931 = vmatprep.subr.mxu0 0.0
        %2932 = vmatpush1.msra.mxu0 %v2910
        %2933 = vmatprep.subr.mxu0 0.0
        %2934 = vmatpush1.msra.mxu0 %v2911
        %2935 = vmatprep.subr.mxu0 0.0
        %2936 = vmatpush1.msra.mxu0 %v2912
        %2937 = vmatprep.subr.mxu0 0.0
        %2938 = vmatpush1.msra.mxu0 %v2913
        %2939 = vmatprep.subr.mxu0 0.0
        %2940 = vmatpush1.msra.mxu0 %v2914
        %2941 = vmatprep.subr.mxu0 0.0
        %2942 = vmatpush1.msra.mxu0 %v2915
        %2943 = vmatprep.subr.mxu0 0.0
        %2944 = vmatpush1.msra.mxu0 %v2916
        %2945 = vmatprep.subr.mxu0 0.0
        %2946 = vmatpush1.msra.mxu0 %v2917
        %2947 = vmatprep.subr.mxu0 0.0
        %2948 = vmatpush1.msra.mxu0 %v2918
        %2949 = vmatprep.subr.mxu0 0.0
        %2950 = vmatpush1.msra.mxu0 %v2919
        %2951 = vmatprep.subr.mxu0 0.0
        %2952 = vmatpush1.msra.mxu0 %v2920
        %2953 = vmatprep.subr.mxu0 0.0
        %2954 = vmatpush1.msra.mxu0 %v2921
        %2955 = vmatprep.subr.mxu0 0.0
        %2956 = vmatpush1.msra.mxu0 0.0
        %2957 = vmatprep.subr.mxu0 0.0
        %2958 = vmatpush1.msra.mxu0 0.0
        %2959 = vmatprep.subr.mxu0 0.0
        %2960 = vmatpush1.msra.mxu0 0.0
        %2961 = vmatprep.subr.mxu0 0.0
        %2962 = vmatpush1.msra.mxu0 0.0
        %2963 = vmatprep.subr.mxu0 0.0
        %2964 = vmatpush1.msra.mxu0 0.0
        %2965 = vmatprep.subr.mxu0 0.0
        %2966 = vmatpush1.msra.mxu0 0.0
        %2967 = vmatprep.subr.mxu0 0.0
        %2968 = vmatpush1.msra.mxu0 0.0
        %2969 = vmatprep.subr.mxu0 0.0
        %2970 = vmatpush1.msra.mxu0 0.0
        %2971 = vmatprep.subr.mxu0 0.0
        %2972 = vmatpush1.msra.mxu0 0.0
        %2973 = vmatprep.subr.mxu0 0.0
        %2974 = vmatpush1.msra.mxu0 0.0
        %2975 = vmatprep.subr.mxu0 0.0
        %2976 = vmatpush1.msra.mxu0 0.0
        %2977 = vmatprep.subr.mxu0 0.0
        %2978 = vmatpush1.msra.mxu0 0.0
        %2979 = vmatprep.subr.mxu0 0.0
        %2980 = vmatpush1.msra.mxu0 0.0
        %2981 = vmatprep.subr.mxu0 0.0
        %2982 = vmatpush1.msra.mxu0 0.0
        %2983 = vmatprep.subr.mxu0 0.0
        %2984 = vmatpush1.msra.mxu0 0.0
        %2985 = vmatprep.subr.mxu0 0.0
        %2986 = vmatpush1.msra.mxu0 0.0
        %2987 = vmatprep.mubr.f32.mxu0 0.0
        %2988 = vmatmul.mubr.f32.gmra.mrb[0].mxu0 %v2905
        %v2989 = vpop.f32.mrb[0].mxu0
        %v2990 = vadd.f32 %v2922, %v2989
        %v2991 = vpop.f32.mrb[0].mxu0
        %2992 = vdwg.mxu0
        %v2993 = vmax.f32 %v2990, 0.0
        %v2994 = vld [vmem:[#allocation17] sm:$0xff]
        %v2995 = vld [vmem:[#allocation17 + $0x8] sm:$0xff]
        %v2996 = vld [vmem:[#allocation17 + $0x10] sm:$0xff]
        %v2997 = vld [vmem:[#allocation17 + $0x18] sm:$0xff]
        %v2998 = vld [vmem:[#allocation17 + $0x20] sm:$0xff]
        %v2999 = vld [vmem:[#allocation17 + $0x28] sm:$0xff]
        %v3000 = vld [vmem:[#allocation17 + $0x30] sm:$0xff]
        %v3001 = vld [vmem:[#allocation17 + $0x38] sm:$0xff]
        %v3002 = vld [vmem:[#allocation17 + $0x40] sm:$0xff]
        %v3003 = vld [vmem:[#allocation17 + $0x48] sm:$0xff]
        %v3004 = vld [vmem:[#allocation17 + $0x50] sm:$0xff]
        %v3005 = vld [vmem:[#allocation17 + $0x58] sm:$0xff]
        %v3006 = vld [vmem:[#allocation17 + $0x60] sm:$0xff]
        %v3007 = vld [vmem:[#allocation17 + $0x68] sm:$0xff]
        %v3008 = vld [vmem:[#allocation17 + $0x70] sm:$0xff]
        %v3009 = vld [vmem:[#allocation17 + $0x78] sm:$0xff]
        %v3010 = vld [vmem:[%s14] sm:$0x1]
        %3011 = vmatprep.subr.mxu0 0.0
        %3012 = vmatpush1.msra.mxu0 %v2994
        %3013 = vmatprep.subr.mxu0 0.0
        %3014 = vmatpush1.msra.mxu0 %v2995
        %3015 = vmatprep.subr.mxu0 0.0
        %3016 = vmatpush1.msra.mxu0 %v2996
        %3017 = vmatprep.subr.mxu0 0.0
        %3018 = vmatpush1.msra.mxu0 %v2997
        %3019 = vmatprep.subr.mxu0 0.0
        %3020 = vmatpush1.msra.mxu0 %v2998
        %3021 = vmatprep.subr.mxu0 0.0
        %3022 = vmatpush1.msra.mxu0 %v2999
        %3023 = vmatprep.subr.mxu0 0.0
        %3024 = vmatpush1.msra.mxu0 %v3000
        %3025 = vmatprep.subr.mxu0 0.0
        %3026 = vmatpush1.msra.mxu0 %v3001
        %3027 = vmatprep.subr.mxu0 0.0
        %3028 = vmatpush1.msra.mxu0 %v3002
        %3029 = vmatprep.subr.mxu0 0.0
        %3030 = vmatpush1.msra.mxu0 %v3003
        %3031 = vmatprep.subr.mxu0 0.0
        %3032 = vmatpush1.msra.mxu0 %v3004
        %3033 = vmatprep.subr.mxu0 0.0
        %3034 = vmatpush1.msra.mxu0 %v3005
        %3035 = vmatprep.subr.mxu0 0.0
        %3036 = vmatpush1.msra.mxu0 %v3006
        %3037 = vmatprep.subr.mxu0 0.0
        %3038 = vmatpush1.msra.mxu0 %v3007
        %3039 = vmatprep.subr.mxu0 0.0
        %3040 = vmatpush1.msra.mxu0 %v3008
        %3041 = vmatprep.subr.mxu0 0.0
        %3042 = vmatpush1.msra.mxu0 %v3009
        %3043 = vmatprep.subr.mxu0 0.0
        %3044 = vmatpush1.msra.mxu0 0.0
        %3045 = vmatprep.subr.mxu0 0.0
        %3046 = vmatpush1.msra.mxu0 0.0
        %3047 = vmatprep.subr.mxu0 0.0
        %3048 = vmatpush1.msra.mxu0 0.0
        %3049 = vmatprep.subr.mxu0 0.0
        %3050 = vmatpush1.msra.mxu0 0.0
        %3051 = vmatprep.subr.mxu0 0.0
        %3052 = vmatpush1.msra.mxu0 0.0
        %3053 = vmatprep.subr.mxu0 0.0
        %3054 = vmatpush1.msra.mxu0 0.0
        %3055 = vmatprep.subr.mxu0 0.0
        %3056 = vmatpush1.msra.mxu0 0.0
        %3057 = vmatprep.subr.mxu0 0.0
        %3058 = vmatpush1.msra.mxu0 0.0
        %3059 = vmatprep.subr.mxu0 0.0
        %3060 = vmatpush1.msra.mxu0 0.0
        %3061 = vmatprep.subr.mxu0 0.0
        %3062 = vmatpush1.msra.mxu0 0.0
        %3063 = vmatprep.subr.mxu0 0.0
        %3064 = vmatpush1.msra.mxu0 0.0
        %3065 = vmatprep.subr.mxu0 0.0
        %3066 = vmatpush1.msra.mxu0 0.0
        %3067 = vmatprep.subr.mxu0 0.0
        %3068 = vmatpush1.msra.mxu0 0.0
        %3069 = vmatprep.subr.mxu0 0.0
        %3070 = vmatpush1.msra.mxu0 0.0
        %3071 = vmatprep.subr.mxu0 0.0
        %3072 = vmatpush1.msra.mxu0 0.0
        %3073 = vmatprep.subr.mxu0 0.0
        %3074 = vmatpush1.msra.mxu0 0.0
        %3075 = vmatprep.mubr.f32.mxu0 0.0
        %3076 = vmatmul.mubr.f32.gmra.mrb[0].mxu0 %v2993
        %v3077 = vpop.f32.mrb[0].mxu0
        %v3078 = vadd.f32 %v3010, %v3077
        %v3079 = vpop.f32.mrb[0].mxu0
        %3080 = vdwg.mxu0
        %v3081 = vlaneseq
        %v3082 = vshrl.u32 %v3081, 7
        %v3083 = vsub.s32 0, %v3082
        %v3084 = vrot.slane %v3078, %v3083
        %3085 = vst [vmem:[%s654] sm:$0xff] %v3084
        %s3086 = sand.u32 %s372, 1
        %s3087 = scalar_lea.sflag [#allocation5], %s3086
        %s3088 = sand.u32 %s372, 1
        %s3089 = smul.addr %s3088, 8
        %s3090 = scalar_lea.vmem [#allocation18], %s3089
        // Predicated region
        $region117: #{tpu_custom_call.1} parent=79 // pred_check
          %p3091 = pneg %p382
        $region118: #{tpu_custom_call.1} parent=79 // pred_check_branch
          %3093 = sbr.rel (%p3091) target = $region120
        $region119: #{tpu_custom_call.1} parent=79 // pred_region
          %s3095 = ssub.s32 128, 128
          %3096 = vsyncadd %s3087, %s3095
          %s3097 = smul.addr %s39, 128
          %s3098 = scalar_lea.hbm %s15, %s3097
          %s3100 = sshll.u32 %s3090, 4
          %s3101 = int_to_ptr.vmem [resolvable:$true] %s3100
          %3103 = dma.vmem_to_hbm [thread:$0]  %s3101, 128, %s3098, %s3087
        $region120: #{tpu_custom_call.1} parent=79 // pred_fallthru
          _
      $region80: #{tpu_custom_call.1} parent=5 // pred_fallthru
        _
      %p3104 = scmp.le.s32.totalorder 2, %s34
      // Predicated region
      $region121: #{tpu_custom_call.1} parent=5 // pred_check
        %p3105 = pneg %p3104
      $region122: #{tpu_custom_call.1} parent=5 // pred_check_branch
        %3107 = sbr.rel (%p3105) target = $region124
      $region123: #{tpu_custom_call.1} parent=5 // pred_region
        %s3108 = ssub.s32 %s34, 2
        // Predicated region
        $region125: #{tpu_custom_call.1} parent=123 // pred_check
          %p3109 = pneg %p388
        $region126: #{tpu_custom_call.1} parent=123 // pred_check_branch
          %3111 = sbr.rel (%p3109) target = $region128
        $region127: #{tpu_custom_call.1} parent=123 // pred_region
          %s3112 = sand.u32 %s373, 1
          %s3113 = scalar_lea.sflag [#allocation5], %s3112
          %s3114 = sand.u32 %s373, 1
          %s3115 = smul.addr %s3114, 8
          %s3116 = scalar_lea.vmem [#allocation18], %s3115
          %3117 = dma.done %s3113, 128
        $region128: #{tpu_custom_call.1} parent=123 // pred_fallthru
          _
      $region124: #{tpu_custom_call.1} parent=5 // pred_fallthru
        _
    $region6: #{tpu_custom_call.1} parent=1 // loop_footer
      %s38 = sadd.s32 1, %s34
    $region7: #{tpu_custom_call.1} parent=1 // loop_footer_branch
      %33 = sbr.rel target = $region3
    $region8: #{tpu_custom_call.1} parent=1 // loop_exit
      _
    %3118 = vsyncpa [#allocation4], 1
    %s3119 = scalar_lea.sflag [#allocation4], 1
    %3120 = vsyncpa %s3119, 1
    %3121 = vsyncpa [#allocation7], 1
    %s3122 = scalar_lea.sflag [#allocation7], 1
    %3123 = vsyncpa %s3122, 1
    %3124 = vsyncpa [#allocation10], 1
    %3125 = vsyncpa [#allocation13], 1
    %3126 = vsyncpa [#allocation16], 1
    %3127 = vsyncpa [#allocation5], 1
    %s3128 = scalar_lea.sflag [#allocation5], 1
    %3129 = vsyncpa %s3128, 1

</llo_original>
